<compile_context>
chip_gen: v5e
topology: v5e:2x2
jax: 0.10.0
libtpu: 0.0.40
codegen_flags: <defaults>
</compile_context>

<pallas_src>
import math

import jax
import jax.numpy as jnp
from jax import lax
from jax.experimental import pallas as pl
from jax.experimental.pallas import tpu as pltpu

WINDOW_SIZE = 11
SIGMA = 1.5
PAD = WINDOW_SIZE // 2
C1 = 0.01 ** 2
C2 = 0.03 ** 2
_HI = jax.lax.Precision.HIGHEST


def _gauss1d(n, sigma):
    g = [math.exp(-((i - n // 2) ** 2) / (2.0 * sigma * sigma)) for i in range(n)]
    s = sum(g)
    return tuple(v / s for v in g)


GAUSS_1D = _gauss1d(WINDOW_SIZE, SIGMA)   # outer(g, g) == torch 2D SSIM window


def _round_up(v, m):
    return ((v + m - 1) // m) * m


def _band_matrix(n, taps):
    """(n, n) band matrix B with B[i, j] = taps[r + i - j] inside the band.

    img @ B applies the zero-padded correlation with `taps` along the last
    axis; B @ img applies it along the first axis (taps are symmetric, so
    correlation == convolution and B is symmetric).  Zero rows/cols in the
    aligned working image behave exactly like F.conv2d zero padding.
    """
    r = len(taps) // 2
    i = jnp.arange(n)[:, None]
    j = jnp.arange(n)[None, :]
    d = i - j + r
    t = jnp.asarray(taps, dtype=jnp.float32)
    valid = (d >= 0) & (d < len(taps))
    return jnp.where(valid, t[jnp.clip(d, 0, len(taps) - 1)], 0.0).astype(jnp.float32)


def _make_kernel(H, W, Hp, Wp, NB, inv_total, needs_pad):
    NBW = NB * Wp

    def _compute(x, y, sw_ref, sh_ref, o_ref, step):
        sw = sw_ref[...]          # (Wp, Wp)  conv along W  (right matmul)
        sh = sh_ref[...]          # (Hp, Hp)  conv along H  (left matmul)

        # Per-image 2-D maps (loads from the aligned working refs).
        xs = [x[b] for b in range(NB)]
        ys = [y[b] for b in range(NB)]
        pieces = (xs + ys
                  + [a * a for a in xs]
                  + [a * a for a in ys]
                  + [a * b for a, b in zip(xs, ys)])

        # ---- W pass: one tall matmul over all 5*NB maps (M = 5*NB*Hp). ----
        S = jnp.concatenate(pieces, axis=0)                     # (5*NB*Hp, Wp)
        T = jnp.dot(S, sw, preferred_element_type=jnp.float32, precision=_HI)

        # ---- H pass: one wide matmul (N = 5*NB*Wp) after a lane-concat. ----
        Wd = jnp.concatenate(
            [T[m * Hp:(m + 1) * Hp, :] for m in range(5 * NB)], axis=1)
        G = jnp.dot(sh, Wd, preferred_element_type=jnp.float32, precision=_HI)

        mu1 = G[:, 0 * NBW:1 * NBW]
        mu2 = G[:, 1 * NBW:2 * NBW]
        e11 = G[:, 2 * NBW:3 * NBW]
        e22 = G[:, 3 * NBW:4 * NBW]
        e12 = G[:, 4 * NBW:5 * NBW]

        mu1_sq = mu1 * mu1
        mu2_sq = mu2 * mu2
        mu12 = mu1 * mu2
        s1 = e11 - mu1_sq
        s2 = e22 - mu2_sq
        s12 = e12 - mu12

        num = (2.0 * mu12 + C1) * (2.0 * s12 + C2)
        den = (mu1_sq + mu2_sq + C1) * (s1 + s2 + C2)
        ssim = num * pl.reciprocal(den, approx=True)

        if needs_pad:
            row = lax.broadcasted_iota(jnp.int32, (Hp, Wp), 0)
            col = lax.broadcasted_iota(jnp.int32, (Hp, Wp), 1)
            m1 = jnp.where((row < H) & (col < W), 1.0, 0.0).astype(jnp.float32)
            ssim = ssim * jnp.tile(m1, (1, NB))

        # Two-stage keepdims reduction (lane then sublane) -> (1, 1) partial.
        psum = jnp.sum(ssim, axis=1, keepdims=True)
        psum = jnp.sum(psum, axis=0, keepdims=True)
        o_ref[...] = o_ref[...] + psum

        @pl.when(step == pl.num_programs(0) - 1)
        def _finalize():
            o_ref[...] = 1.0 - o_ref[...] * jnp.float32(inv_total)

    if needs_pad:
        def kernel(x_ref, y_ref, sw_ref, sh_ref, o_ref, xs_ref, ys_ref):
            step = pl.program_id(0)

            @pl.when(step == 0)
            def _init():
                o_ref[...] = jnp.zeros_like(o_ref)
                # Zero the aligned working buffers once; the padding region is
                # never overwritten afterwards (scratch persists across steps).
                xs_ref[...] = jnp.zeros_like(xs_ref)
                ys_ref[...] = jnp.zeros_like(ys_ref)

            # In-kernel copy of the unpadded HBM block into the lane/sublane
            # aligned VMEM working buffers (no wrapper-side jnp.pad needed).
            xs_ref[:, :H, :W] = x_ref[...]
            ys_ref[:, :H, :W] = y_ref[...]
            _compute(xs_ref, ys_ref, sw_ref, sh_ref, o_ref, step)
    else:
        def kernel(x_ref, y_ref, sw_ref, sh_ref, o_ref):
            step = pl.program_id(0)

            @pl.when(step == 0)
            def _init():
                o_ref[...] = jnp.zeros_like(o_ref)

            _compute(x_ref, y_ref, sw_ref, sh_ref, o_ref, step)

    return kernel


def _pick_nb(N, H, W, Hp, Wp, budget=32 * 1024 * 1024):
    best = 1
    for d in range(1, min(N, 4) + 1):
        if N % d:
            continue
        need = 4 * (4 * d * H * W              # double-buffered x/y input blocks
                    + 2 * d * Hp * Wp          # aligned VMEM working copies
                    + 2 * (Wp * Wp + Hp * Hp)  # band matrices (double-buffered)
                    + 32 * d * Hp * Wp)        # live intermediates (S,T,Wd,G,ssim)
        if need <= budget:
            best = d
    return best


@jax.jit
def ssim_loss(x, y):
    assert x.ndim == 4 and x.shape == y.shape
    B, CH, H, W = x.shape
    N = B * CH

    xf = x.reshape(N, H, W).astype(jnp.float32)
    yf = y.reshape(N, H, W).astype(jnp.float32)

    Hp = _round_up(H, 8)        # sublane aligned
    Wp = _round_up(W, 128)      # lane-dense working width
    needs_pad = (Hp != H) or (Wp != W)

    # Images per grid step (divides N, bounded by a VMEM budget).
    # TODO(synk): very large single images (NB=1 still over budget) would need
    # an additional H-stripe grid with a 2*PAD row halo; not implemented here.
    NB = _pick_nb(N, H, W, Hp, Wp)
    n_steps = N // NB

    sw = _band_matrix(Wp, GAUSS_1D)     # conv along W
    sh = _band_matrix(Hp, GAUSS_1D)     # conv along H

    inv_total = 1.0 / float(N * H * W)
    kernel = _make_kernel(H, W, Hp, Wp, NB, inv_total, needs_pad)

    scratch = []
    if needs_pad:
        scratch = [pltpu.VMEM((NB, Hp, Wp), jnp.float32),
                   pltpu.VMEM((NB, Hp, Wp), jnp.float32)]

    flops_per_img = 2 * 5 * Hp * Wp * Wp + 2 * 5 * Hp * Hp * Wp + 40 * Hp * Wp
    cost = pl.CostEstimate(
        flops=int(N * flops_per_img),
        transcendentals=int(N * Hp * Wp),
        bytes_accessed=int(4 * (2 * N * H * W + Wp * Wp + Hp * Hp + 1)),
    )

    step_bytes = 4 * (4 * NB * H * W
                      + 2 * NB * Hp * Wp
                      + 2 * (Wp * Wp + Hp * Hp)
                      + 32 * NB * Hp * Wp)
    vmem_limit = int(min(max(2 * step_bytes, 16 * 1024 * 1024), 48 * 1024 * 1024))

    out = pl.pallas_call(
        kernel,
        out_shape=jax.ShapeDtypeStruct((1, 1), jnp.float32),
        grid_spec=pltpu.PrefetchScalarGridSpec(
            num_scalar_prefetch=0,
            grid=(n_steps,),
            in_specs=[
                pl.BlockSpec((NB, H, W), lambda n: (n, 0, 0)),
                pl.BlockSpec((NB, H, W), lambda n: (n, 0, 0)),
                pl.BlockSpec((Wp, Wp), lambda n: (0, 0)),
                pl.BlockSpec((Hp, Hp), lambda n: (0, 0)),
            ],
            out_specs=pl.BlockSpec((1, 1), lambda n: (0, 0)),
            scratch_shapes=scratch,
        ),
        compiler_params=pltpu.CompilerParams(
            # Single reduction axis with a resident (1,1) output accumulator.
            dimension_semantics=("arbitrary",),
            vmem_limit_bytes=vmem_limit,
        ),
        cost_estimate=cost,
    )(xf, yf, sw, sh)
    return out[0, 0]


@jax.jit
def ssim_loss_reference(x, y):
    """Independent pure-JAX reference mirroring the PyTorch module."""
    B, CH, H, W = x.shape
    g = jnp.asarray(GAUSS_1D, jnp.float32)
    w2d = jnp.outer(g, g)[None, None, :, :]
    w2d = jnp.tile(w2d, (CH, 1, 1, 1))          # depthwise window (CH,1,11,11)

    xf = x.astype(jnp.float32)
    yf = y.astype(jnp.float32)

    def conv(a):
        return jax.lax.conv_general_dilated(
            a, w2d, window_strides=(1, 1),
            padding=((PAD, PAD), (PAD, PAD)),
            dimension_numbers=("NCHW", "OIHW", "NCHW"),
            feature_group_count=CH,
            precision=_HI)

    mu1, mu2 = conv(xf), conv(yf)
    mu1_sq, mu2_sq, mu12 = mu1 * mu1, mu2 * mu2, mu1 * mu2
    s1 = conv(xf * xf) - mu1_sq
    s2 = conv(yf * yf) - mu2_sq
    s12 = conv(xf * yf) - mu12
    ssim_map = ((2.0 * mu12 + C1) * (2.0 * s12 + C2)) / (
        (mu1_sq + mu2_sq + C1) * (s1 + s2 + C2))
    return 1.0 - jnp.mean(ssim_map)


if __name__ == "__main__":
    key = jax.random.PRNGKey(0)
    k1, k2 = jax.random.split(key)
    B, CH, H, W = 2, 4, 16, 16
    x = jax.random.uniform(k1, (B, CH, H, W), dtype=jnp.float32)
    y = jax.random.uniform(k2, (B, CH, H, W), dtype=jnp.float32)

    loss = jax.block_until_ready(ssim_loss(x, y))
    ref = jax.block_until_ready(ssim_loss_reference(x, y))

    assert bool(jnp.isfinite(loss)), "kernel produced non-finite loss"
    assert abs(float(loss) - float(ref)) <= 1e-2 + 1e-2 * abs(float(ref)), (
        f"mismatch: pallas={float(loss)} ref={float(ref)}")
    print("KERNEL_OK")
</pallas_src>

<mosaic_0001>
module attributes {stable_mosaic.version = 11 : i64} {
  func.func @kernel(%arg0: i32, %arg1: memref<4x16x16xf32, #tpu.memory_space<vmem>>, %arg2: memref<4x16x16xf32, #tpu.memory_space<vmem>>, %arg3: memref<128x128xf32, #tpu.memory_space<vmem>>, %arg4: memref<16x16xf32, #tpu.memory_space<vmem>>, %arg5: memref<1x1xf32, #tpu.memory_space<vmem>>, %arg6: memref<4x16x128xf32, #tpu.memory_space<vmem>>, %arg7: memref<4x16x128xf32, #tpu.memory_space<vmem>>) attributes {dimension_semantics = [#tpu.dimension_semantics<arbitrary>], iteration_bounds = array<i64: 2>, scalar_prefetch = 0 : i64, scratch_operands = 2 : i64, tpu.core_type = #tpu.core_type<tc>, window_params = [{transform_indices = @transform_0, window_bounds = array<i64: 4, 16, 16>}, {transform_indices = @transform_1, window_bounds = array<i64: 4, 16, 16>}, {pipeline_mode = #tpu.pipeline_mode<synchronous>, transform_indices = @transform_2, window_bounds = array<i64: 128, 128>}, {pipeline_mode = #tpu.pipeline_mode<synchronous>, transform_indices = @transform_3, window_bounds = array<i64: 16, 16>}, {pipeline_mode = #tpu.pipeline_mode<synchronous>, transform_indices = @transform_4, window_bounds = array<i64: 1, 1>}]} {
    %c0_i32 = arith.constant 0 : i32
    %0 = arith.cmpi eq, %arg0, %c0_i32 : i32
    %1 = arith.extui %0 : i1 to i32
    %c0_i32_0 = arith.constant 0 : i32
    %2 = arith.cmpi ne, %1, %c0_i32_0 : i32
    scf.if %2 {
      %cst_54 = arith.constant 0.000000e+00 : f32
      %116 = vector.broadcast %cst_54 : f32 to vector<1x1xf32>
      %c0_55 = arith.constant 0 : index
      %c0_56 = arith.constant 0 : index
      %117 = vector.load %arg5[%c0_55, %c0_56] : memref<1x1xf32, #tpu.memory_space<vmem>>, vector<1x1xf32>
      tpu.vector_store %arg5[%c0_55, %c0_56], %116 {strides = array<i32>} : memref<1x1xf32, #tpu.memory_space<vmem>>, vector<1x1xf32>,
      %cst_57 = arith.constant 0.000000e+00 : f32
      %118 = vector.broadcast %cst_57 : f32 to vector<4x16x128xf32>
      %c0_58 = arith.constant 0 : index
      %c0_59 = arith.constant 0 : index
      %c0_60 = arith.constant 0 : index
      %119 = vector.load %arg6[%c0_58, %c0_59, %c0_60] : memref<4x16x128xf32, #tpu.memory_space<vmem>>, vector<4x16x128xf32>
      tpu.vector_store %arg6[%c0_58, %c0_59, %c0_60], %118 {strides = array<i32>} : memref<4x16x128xf32, #tpu.memory_space<vmem>>, vector<4x16x128xf32>,
      %cst_61 = arith.constant 0.000000e+00 : f32
      %120 = vector.broadcast %cst_61 : f32 to vector<4x16x128xf32>
      %c0_62 = arith.constant 0 : index
      %c0_63 = arith.constant 0 : index
      %c0_64 = arith.constant 0 : index
      %121 = vector.load %arg7[%c0_62, %c0_63, %c0_64] : memref<4x16x128xf32, #tpu.memory_space<vmem>>, vector<4x16x128xf32>
      tpu.vector_store %arg7[%c0_62, %c0_63, %c0_64], %120 {strides = array<i32>} : memref<4x16x128xf32, #tpu.memory_space<vmem>>, vector<4x16x128xf32>,
    } else {
    }
    %c0 = arith.constant 0 : index
    %c0_1 = arith.constant 0 : index
    %c0_2 = arith.constant 0 : index
    %3 = vector.load %arg1[%c0, %c0_1, %c0_2] : memref<4x16x16xf32, #tpu.memory_space<vmem>>, vector<4x16x16xf32>
    %c0_3 = arith.constant 0 : index
    %c0_4 = arith.constant 0 : index
    %c0_5 = arith.constant 0 : index
    %4 = vector.load %arg6[%c0_3, %c0_4, %c0_5] : memref<4x16x128xf32, #tpu.memory_space<vmem>>, vector<4x16x16xf32>
    tpu.vector_store %arg6[%c0_3, %c0_4, %c0_5], %3 {strides = array<i32>} : memref<4x16x128xf32, #tpu.memory_space<vmem>>, vector<4x16x16xf32>,
    %c0_6 = arith.constant 0 : index
    %c0_7 = arith.constant 0 : index
    %c0_8 = arith.constant 0 : index
    %5 = vector.load %arg2[%c0_6, %c0_7, %c0_8] : memref<4x16x16xf32, #tpu.memory_space<vmem>>, vector<4x16x16xf32>
    %c0_9 = arith.constant 0 : index
    %c0_10 = arith.constant 0 : index
    %c0_11 = arith.constant 0 : index
    %6 = vector.load %arg7[%c0_9, %c0_10, %c0_11] : memref<4x16x128xf32, #tpu.memory_space<vmem>>, vector<4x16x16xf32>
    tpu.vector_store %arg7[%c0_9, %c0_10, %c0_11], %5 {strides = array<i32>} : memref<4x16x128xf32, #tpu.memory_space<vmem>>, vector<4x16x16xf32>,
    %c0_12 = arith.constant 0 : index
    %c0_13 = arith.constant 0 : index
    %7 = vector.load %arg3[%c0_12, %c0_13] : memref<128x128xf32, #tpu.memory_space<vmem>>, vector<128x128xf32>
    %c0_14 = arith.constant 0 : index
    %c0_15 = arith.constant 0 : index
    %8 = vector.load %arg4[%c0_14, %c0_15] : memref<16x16xf32, #tpu.memory_space<vmem>>, vector<16x16xf32>
    %c0_16 = arith.constant 0 : index
    %c0_17 = arith.constant 0 : index
    %c0_18 = arith.constant 0 : index
    %9 = vector.load %arg6[%c0_16, %c0_17, %c0_18] : memref<4x16x128xf32, #tpu.memory_space<vmem>>, vector<1x16x128xf32>
    %10 = vector.shape_cast %9 : vector<1x16x128xf32> to vector<16x128xf32>
    %c1 = arith.constant 1 : index
    %c0_19 = arith.constant 0 : index
    %c0_20 = arith.constant 0 : index
    %11 = vector.load %arg6[%c1, %c0_19, %c0_20] : memref<4x16x128xf32, #tpu.memory_space<vmem>>, vector<1x16x128xf32>
    %12 = vector.shape_cast %11 : vector<1x16x128xf32> to vector<16x128xf32>
    %c2 = arith.constant 2 : index
    %c0_21 = arith.constant 0 : index
    %c0_22 = arith.constant 0 : index
    %13 = vector.load %arg6[%c2, %c0_21, %c0_22] : memref<4x16x128xf32, #tpu.memory_space<vmem>>, vector<1x16x128xf32>
    %14 = vector.shape_cast %13 : vector<1x16x128xf32> to vector<16x128xf32>
    %c3 = arith.constant 3 : index
    %c0_23 = arith.constant 0 : index
    %c0_24 = arith.constant 0 : index
    %15 = vector.load %arg6[%c3, %c0_23, %c0_24] : memref<4x16x128xf32, #tpu.memory_space<vmem>>, vector<1x16x128xf32>
    %16 = vector.shape_cast %15 : vector<1x16x128xf32> to vector<16x128xf32>
    %c0_25 = arith.constant 0 : index
    %c0_26 = arith.constant 0 : index
    %c0_27 = arith.constant 0 : index
    %17 = vector.load %arg7[%c0_25, %c0_26, %c0_27] : memref<4x16x128xf32, #tpu.memory_space<vmem>>, vector<1x16x128xf32>
    %18 = vector.shape_cast %17 : vector<1x16x128xf32> to vector<16x128xf32>
    %c1_28 = arith.constant 1 : index
    %c0_29 = arith.constant 0 : index
    %c0_30 = arith.constant 0 : index
    %19 = vector.load %arg7[%c1_28, %c0_29, %c0_30] : memref<4x16x128xf32, #tpu.memory_space<vmem>>, vector<1x16x128xf32>
    %20 = vector.shape_cast %19 : vector<1x16x128xf32> to vector<16x128xf32>
    %c2_31 = arith.constant 2 : index
    %c0_32 = arith.constant 0 : index
    %c0_33 = arith.constant 0 : index
    %21 = vector.load %arg7[%c2_31, %c0_32, %c0_33] : memref<4x16x128xf32, #tpu.memory_space<vmem>>, vector<1x16x128xf32>
    %22 = vector.shape_cast %21 : vector<1x16x128xf32> to vector<16x128xf32>
    %c3_34 = arith.constant 3 : index
    %c0_35 = arith.constant 0 : index
    %c0_36 = arith.constant 0 : index
    %23 = vector.load %arg7[%c3_34, %c0_35, %c0_36] : memref<4x16x128xf32, #tpu.memory_space<vmem>>, vector<1x16x128xf32>
    %24 = vector.shape_cast %23 : vector<1x16x128xf32> to vector<16x128xf32>
    %25 = arith.mulf %10, %10 : vector<16x128xf32>
    %26 = arith.mulf %12, %12 : vector<16x128xf32>
    %27 = arith.mulf %14, %14 : vector<16x128xf32>
    %28 = arith.mulf %16, %16 : vector<16x128xf32>
    %29 = arith.mulf %18, %18 : vector<16x128xf32>
    %30 = arith.mulf %20, %20 : vector<16x128xf32>
    %31 = arith.mulf %22, %22 : vector<16x128xf32>
    %32 = arith.mulf %24, %24 : vector<16x128xf32>
    %33 = arith.mulf %10, %18 : vector<16x128xf32>
    %34 = arith.mulf %12, %20 : vector<16x128xf32>
    %35 = arith.mulf %14, %22 : vector<16x128xf32>
    %36 = arith.mulf %16, %24 : vector<16x128xf32>
    %37 = tpu.concatenate %10, %12, %14, %16, %18, %20, %22, %24, %25, %26, %27, %28, %29, %30, %31, %32 in 0 : vector<16x128xf32>, vector<16x128xf32>, vector<16x128xf32>, vector<16x128xf32>, vector<16x128xf32>, vector<16x128xf32>, vector<16x128xf32>, vector<16x128xf32>, vector<16x128xf32>, vector<16x128xf32>, vector<16x128xf32>, vector<16x128xf32>, vector<16x128xf32>, vector<16x128xf32>, vector<16x128xf32>, vector<16x128xf32> -> vector<256x128xf32>
    %38 = tpu.concatenate %33, %34, %35, %36 in 0 : vector<16x128xf32>, vector<16x128xf32>, vector<16x128xf32>, vector<16x128xf32> -> vector<64x128xf32>
    %39 = tpu.concatenate %37, %38 in 0 : vector<256x128xf32>, vector<64x128xf32> -> vector<320x128xf32>
    %cst = arith.constant dense<0.000000e+00> : vector<320x128xf32>
    %40 = tpu.matmul %39, %7, %cst {dimension_numbers = #tpu.dot_dimension_numbers<[1], [0], [0], [1], [0, 0, 1, 1], [], []>, precision = #tpu.contract_precision<fp32>} : vector<320x128xf32>, vector<128x128xf32>, vector<320x128xf32> -> vector<320x128xf32>
    %41 = vector.extract_strided_slice %40 {offsets = [0, 0], sizes = [16, 128], strides = [1, 1]} : vector<320x128xf32> to vector<16x128xf32>
    %42 = vector.extract_strided_slice %40 {offsets = [16, 0], sizes = [16, 128], strides = [1, 1]} : vector<320x128xf32> to vector<16x128xf32>
    %43 = vector.extract_strided_slice %40 {offsets = [32, 0], sizes = [16, 128], strides = [1, 1]} : vector<320x128xf32> to vector<16x128xf32>
    %44 = vector.extract_strided_slice %40 {offsets = [48, 0], sizes = [16, 128], strides = [1, 1]} : vector<320x128xf32> to vector<16x128xf32>
    %45 = vector.extract_strided_slice %40 {offsets = [64, 0], sizes = [16, 128], strides = [1, 1]} : vector<320x128xf32> to vector<16x128xf32>
    %46 = vector.extract_strided_slice %40 {offsets = [80, 0], sizes = [16, 128], strides = [1, 1]} : vector<320x128xf32> to vector<16x128xf32>
    %47 = vector.extract_strided_slice %40 {offsets = [96, 0], sizes = [16, 128], strides = [1, 1]} : vector<320x128xf32> to vector<16x128xf32>
    %48 = vector.extract_strided_slice %40 {offsets = [112, 0], sizes = [16, 128], strides = [1, 1]} : vector<320x128xf32> to vector<16x128xf32>
    %49 = vector.extract_strided_slice %40 {offsets = [128, 0], sizes = [16, 128], strides = [1, 1]} : vector<320x128xf32> to vector<16x128xf32>
    %50 = vector.extract_strided_slice %40 {offsets = [144, 0], sizes = [16, 128], strides = [1, 1]} : vector<320x128xf32> to vector<16x128xf32>
    %51 = vector.extract_strided_slice %40 {offsets = [160, 0], sizes = [16, 128], strides = [1, 1]} : vector<320x128xf32> to vector<16x128xf32>
    %52 = vector.extract_strided_slice %40 {offsets = [176, 0], sizes = [16, 128], strides = [1, 1]} : vector<320x128xf32> to vector<16x128xf32>
    %53 = vector.extract_strided_slice %40 {offsets = [192, 0], sizes = [16, 128], strides = [1, 1]} : vector<320x128xf32> to vector<16x128xf32>
    %54 = vector.extract_strided_slice %40 {offsets = [208, 0], sizes = [16, 128], strides = [1, 1]} : vector<320x128xf32> to vector<16x128xf32>
    %55 = vector.extract_strided_slice %40 {offsets = [224, 0], sizes = [16, 128], strides = [1, 1]} : vector<320x128xf32> to vector<16x128xf32>
    %56 = vector.extract_strided_slice %40 {offsets = [240, 0], sizes = [16, 128], strides = [1, 1]} : vector<320x128xf32> to vector<16x128xf32>
    %57 = vector.extract_strided_slice %40 {offsets = [256, 0], sizes = [16, 128], strides = [1, 1]} : vector<320x128xf32> to vector<16x128xf32>
    %58 = vector.extract_strided_slice %40 {offsets = [272, 0], sizes = [16, 128], strides = [1, 1]} : vector<320x128xf32> to vector<16x128xf32>
    %59 = vector.extract_strided_slice %40 {offsets = [288, 0], sizes = [16, 128], strides = [1, 1]} : vector<320x128xf32> to vector<16x128xf32>
    %60 = vector.extract_strided_slice %40 {offsets = [304, 0], sizes = [16, 128], strides = [1, 1]} : vector<320x128xf32> to vector<16x128xf32>
    %61 = tpu.concatenate %41, %42, %43, %44, %45, %46, %47, %48, %49, %50, %51, %52, %53, %54, %55, %56 in 1 : vector<16x128xf32>, vector<16x128xf32>, vector<16x128xf32>, vector<16x128xf32>, vector<16x128xf32>, vector<16x128xf32>, vector<16x128xf32>, vector<16x128xf32>, vector<16x128xf32>, vector<16x128xf32>, vector<16x128xf32>, vector<16x128xf32>, vector<16x128xf32>, vector<16x128xf32>, vector<16x128xf32>, vector<16x128xf32> -> vector<16x2048xf32>
    %62 = tpu.concatenate %57, %58, %59, %60 in 1 : vector<16x128xf32>, vector<16x128xf32>, vector<16x128xf32>, vector<16x128xf32> -> vector<16x512xf32>
    %63 = tpu.concatenate %61, %62 in 1 : vector<16x2048xf32>, vector<16x512xf32> -> vector<16x2560xf32>
    %cst_37 = arith.constant dense<0.000000e+00> : vector<16x2560xf32>
    %64 = tpu.matmul %8, %63, %cst_37 {dimension_numbers = #tpu.dot_dimension_numbers<[1], [0], [0], [1], [0, 0, 1, 1], [], []>, precision = #tpu.contract_precision<fp32>} : vector<16x16xf32>, vector<16x2560xf32>, vector<16x2560xf32> -> vector<16x2560xf32>
    %65 = vector.extract_strided_slice %64 {offsets = [0, 0], sizes = [16, 512], strides = [1, 1]} : vector<16x2560xf32> to vector<16x512xf32>
    %66 = vector.extract_strided_slice %64 {offsets = [0, 512], sizes = [16, 512], strides = [1, 1]} : vector<16x2560xf32> to vector<16x512xf32>
    %67 = vector.extract_strided_slice %64 {offsets = [0, 1024], sizes = [16, 512], strides = [1, 1]} : vector<16x2560xf32> to vector<16x512xf32>
    %68 = vector.extract_strided_slice %64 {offsets = [0, 1536], sizes = [16, 512], strides = [1, 1]} : vector<16x2560xf32> to vector<16x512xf32>
    %69 = vector.extract_strided_slice %64 {offsets = [0, 2048], sizes = [16, 512], strides = [1, 1]} : vector<16x2560xf32> to vector<16x512xf32>
    %70 = arith.mulf %65, %65 : vector<16x512xf32>
    %71 = arith.mulf %66, %66 : vector<16x512xf32>
    %72 = arith.mulf %65, %66 : vector<16x512xf32>
    %73 = arith.subf %67, %70 : vector<16x512xf32>
    %74 = arith.subf %68, %71 : vector<16x512xf32>
    %75 = arith.subf %69, %72 : vector<16x512xf32>
    %cst_38 = arith.constant 2.000000e+00 : f32
    %76 = vector.broadcast %cst_38 : f32 to vector<16x512xf32>
    %77 = arith.mulf %76, %72 : vector<16x512xf32>
    %cst_39 = arith.constant 9.99999974E-5 : f32
    %78 = vector.broadcast %cst_39 : f32 to vector<16x512xf32>
    %79 = arith.addf %77, %78 : vector<16x512xf32>
    %cst_40 = arith.constant 2.000000e+00 : f32
    %80 = vector.broadcast %cst_40 : f32 to vector<16x512xf32>
    %81 = arith.mulf %80, %75 : vector<16x512xf32>
    %cst_41 = arith.constant 8.99999984E-4 : f32
    %82 = vector.broadcast %cst_41 : f32 to vector<16x512xf32>
    %83 = arith.addf %81, %82 : vector<16x512xf32>
    %84 = arith.mulf %79, %83 : vector<16x512xf32>
    %85 = arith.addf %70, %71 : vector<16x512xf32>
    %cst_42 = arith.constant 9.99999974E-5 : f32
    %86 = vector.broadcast %cst_42 : f32 to vector<16x512xf32>
    %87 = arith.addf %85, %86 : vector<16x512xf32>
    %88 = arith.addf %73, %74 : vector<16x512xf32>
    %cst_43 = arith.constant 8.99999984E-4 : f32
    %89 = vector.broadcast %cst_43 : f32 to vector<16x512xf32>
    %90 = arith.addf %88, %89 : vector<16x512xf32>
    %91 = arith.mulf %87, %90 : vector<16x512xf32>
    %92 = tpu.reciprocal %91 {approx = true} : vector<16x512xf32> -> vector<16x512xf32>
    %93 = arith.mulf %84, %92 : vector<16x512xf32>
    %94 = tpu.iota {dimensions = array<i32: 0>} : vector<16x128xi32>
    %95 = tpu.iota {dimensions = array<i32: 1>} : vector<16x128xi32>
    %c16_i32 = arith.constant 16 : i32
    %96 = vector.broadcast %c16_i32 : i32 to vector<16x128xi32>
    %97 = arith.cmpi slt, %94, %96 : vector<16x128xi32>
    %c16_i32_44 = arith.constant 16 : i32
    %98 = vector.broadcast %c16_i32_44 : i32 to vector<16x128xi32>
    %99 = arith.cmpi slt, %95, %98 : vector<16x128xi32>
    %100 = arith.andi %97, %99 : vector<16x128xi1>
    %cst_45 = arith.constant 1.000000e+00 : f32
    %cst_46 = arith.constant 0.000000e+00 : f32
    %101 = vector.broadcast %cst_45 : f32 to vector<16x128xf32>
    %102 = vector.broadcast %cst_46 : f32 to vector<16x128xf32>
    %103 = arith.select %100, %101, %102 : vector<16x128xi1>, vector<16x128xf32>
    %104 = tpu.concatenate %103, %103, %103, %103 in 1 : vector<16x128xf32>, vector<16x128xf32>, vector<16x128xf32>, vector<16x128xf32> -> vector<16x512xf32>
    %105 = arith.mulf %93, %104 : vector<16x512xf32>
    %cst_47 = arith.constant dense<0.000000e+00> : vector<16xf32>
    %106 = vector.multi_reduction <add>, %105, %cst_47 [1] : vector<16x512xf32> to vector<16xf32>
    %107 = vector.shape_cast %106 : vector<16xf32> to vector<16x1xf32>
    %cst_48 = arith.constant dense<0.000000e+00> : vector<1xf32>
    %108 = vector.multi_reduction <add>, %107, %cst_48 [0] : vector<16x1xf32> to vector<1xf32>
    %109 = vector.shape_cast %108 : vector<1xf32> to vector<1x1xf32>
    %c0_49 = arith.constant 0 : index
    %c0_50 = arith.constant 0 : index
    %110 = vector.load %arg5[%c0_49, %c0_50] : memref<1x1xf32, #tpu.memory_space<vmem>>, vector<1x1xf32>
    %111 = arith.addf %110, %109 : vector<1x1xf32>
    %c0_51 = arith.constant 0 : index
    %c0_52 = arith.constant 0 : index
    %112 = vector.load %arg5[%c0_51, %c0_52] : memref<1x1xf32, #tpu.memory_space<vmem>>, vector<1x1xf32>
    tpu.vector_store %arg5[%c0_51, %c0_52], %111 {strides = array<i32>} : memref<1x1xf32, #tpu.memory_space<vmem>>, vector<1x1xf32>,
    %c1_i32 = arith.constant 1 : i32
    %113 = arith.cmpi eq, %arg0, %c1_i32 : i32
    %114 = arith.extui %113 : i1 to i32
    %c0_i32_53 = arith.constant 0 : i32
    %115 = arith.cmpi ne, %114, %c0_i32_53 : i32
    scf.if %115 {
      %c0_54 = arith.constant 0 : index
      %c0_55 = arith.constant 0 : index
      %116 = vector.load %arg5[%c0_54, %c0_55] : memref<1x1xf32, #tpu.memory_space<vmem>>, vector<1x1xf32>
      %cst_56 = arith.constant 4.8828125E-4 : f32
      %117 = vector.broadcast %cst_56 : f32 to vector<1x1xf32>
      %118 = arith.mulf %116, %117 : vector<1x1xf32>
      %cst_57 = arith.constant 1.000000e+00 : f32
      %119 = vector.broadcast %cst_57 : f32 to vector<1x1xf32>
      %120 = arith.subf %119, %118 : vector<1x1xf32>
      %c0_58 = arith.constant 0 : index
      %c0_59 = arith.constant 0 : index
      %121 = vector.load %arg5[%c0_58, %c0_59] : memref<1x1xf32, #tpu.memory_space<vmem>>, vector<1x1xf32>
      tpu.vector_store %arg5[%c0_58, %c0_59], %120 {strides = array<i32>} : memref<1x1xf32, #tpu.memory_space<vmem>>, vector<1x1xf32>,
    } else {
    }
    return
  }
  func.func @transform_0(%arg0: i32) -> (i32, i32, i32) {
    %c0_i32 = arith.constant 0 : i32
    %c0_i32_0 = arith.constant 0 : i32
    %c0_i32_1 = arith.constant 0 : i32
    return %arg0, %c0_i32, %c0_i32_0 : i32, i32, i32
  }
  func.func @transform_1(%arg0: i32) -> (i32, i32, i32) {
    %c0_i32 = arith.constant 0 : i32
    %c0_i32_0 = arith.constant 0 : i32
    %c0_i32_1 = arith.constant 0 : i32
    return %arg0, %c0_i32, %c0_i32_0 : i32, i32, i32
  }
  func.func @transform_2(%arg0: i32) -> (i32, i32) {
    %c0_i32 = arith.constant 0 : i32
    %c0_i32_0 = arith.constant 0 : i32
    %c0_i32_1 = arith.constant 0 : i32
    return %c0_i32, %c0_i32_0 : i32, i32
  }
  func.func @transform_3(%arg0: i32) -> (i32, i32) {
    %c0_i32 = arith.constant 0 : i32
    %c0_i32_0 = arith.constant 0 : i32
    %c0_i32_1 = arith.constant 0 : i32
    return %c0_i32, %c0_i32_0 : i32, i32
  }
  func.func @transform_4(%arg0: i32) -> (i32, i32) {
    %c0_i32 = arith.constant 0 : i32
    %c0_i32_0 = arith.constant 0 : i32
    %c0_i32_1 = arith.constant 0 : i32
    return %c0_i32, %c0_i32_0 : i32, i32
  }
}

</mosaic_0001>

<llo_original>
// kernel: ssim_loss.1
$region0: #{ssim_loss.1}
  #allocation0 [shape = 'u32[]', space=smem, size = 0x4, offset = 0x4, fixed_abs, tag = 'smem constant byte address 0x4 - core index']
  #allocation1 [shape = 'u32[72,128]{1,0:T(1,128)}', space=vmem, size = 0x9000, scoped, tag = 'internal scratch']
  #allocation2 [shape = 'f32[4,16,128]{2,1,0:T(8,128)}', space=vmem, size = 0x8000, scoped, tag = 'scratch operand']
  #allocation3 [shape = 'f32[4,16,128]{2,1,0:T(8,128)}', space=vmem, size = 0x8000, scoped, tag = 'scratch operand']
  %s0 = inlined_call_operand.vmem [shape: f32[8,16,16], index: 0, kind: input, shape index: {}]
  %s1 = inlined_call_operand.vmem [shape: f32[8,16,16], index: 1, kind: input, shape index: {}]
  %s2 = inlined_call_operand.vmem [shape: f32[128,128], index: 2, kind: input, shape index: {}]
  %s3 = inlined_call_operand.vmem [shape: f32[16,16], index: 3, kind: input, shape index: {}]
  %s4 = inlined_call_operand.hbm [shape: f32[1,1], index: 4, kind: output, shape index: {}]
  %s5 = sld [smem:[#allocation0]]
  $region57: #{ssim_loss.1} parent=0
    _
  %s7 = ssub.s32 1, %s5
  %s8 = scalar_select 0, %s7, %s5
  $region1: #{ssim_loss.1} parent=0
    #allocation4 [shape = 'u8[512]{0}', space=vmem, size = 0x400, scoped, tag = 'output window, operand 0, single buffered']
    #allocation5 [shape = 's32[2]{0}', space=sflag, size = 0x8, scoped, tag = 'scoped memory for ssim_loss.1']
    %9 = vsyncpa [#allocation5], 0
    loop: start=0, step=1, limit=4
    $region2: #{ssim_loss.1} parent=1 // loop_pre_header
      _
    $region3: #{ssim_loss.1} parent=1 // loop_header
      %s11 = sphi 0, %s15
      %p12 = scmp.ge.s32.totalorder %s11, 4
      %s21 = sphi 0, %s23
      %s24 = sphi 0, %s21
      %s25 = sphi 0, %s24
      %s41 = sphi 0, %s25
      %s47 = sphi 0, %s49
      %s50 = sphi 0, %s47
      %s51 = sphi 0, %s50
      %s67 = sphi 0, %s51
      %s71 = sphi 0, %s71
      %s73 = sphi 0, %s71
      %s74 = sphi 0, %s73
      %s88 = sphi 0, %s74
      %s92 = sphi 0, %s92
      %s94 = sphi 0, %s92
      %s95 = sphi 0, %s94
      %s109 = sphi 0, %s95
      %s113 = sphi 0, %s113
      %s115 = sphi 0, %s113
      %s116 = sphi 0, %s115
      %s130 = sphi 0, %s116
    $region4: #{ssim_loss.1} parent=1 // loop_header_branch
      %14 = sbr.rel (%p12) target = $region8
    $region5: #{ssim_loss.1} parent=1 // loop_body
      %s16 = ssub.s32 %s11, 1
      %s17 = ssub.s32 %s11, 2
      %s18 = sadd.s32 %s11, 1
      %s19 = ssub.s32 %s11, %s18
      %p20 = scmp.eq.s32.totalorder %s19, 0
      %s22 = sadd.s32 %s21, 1
      %s23 = scalar_select %p20, %s21, %s22
      %p26 = pneg %p20
      %p27 = scmp.eq.s32.totalorder %s11, 1
      %p28 = por %p26, %p27
      %p29 = scmp.ne.s32.totalorder %s21, %s24
      %p30 = scmp.eq.s32.totalorder %s11, 0
      %p31 = por %p29, %p30
      %p32 = scmp.ne.s32.totalorder %s21, %s24
      %p33 = scmp.eq.s32.totalorder %s16, 1
      %p34 = por %p32, %p33
      %p35 = scmp.ne.s32.totalorder %s24, %s25
      %p36 = scmp.eq.s32.totalorder %s16, 0
      %p37 = por %p35, %p36
      %p38 = scmp.ne.s32.totalorder %s24, %s25
      %p39 = scmp.eq.s32.totalorder %s17, 1
      %p40 = por %p38, %p39
      %p42 = scmp.ne.s32.totalorder %s25, %s41
      %p43 = scmp.eq.s32.totalorder %s17, 0
      %p44 = por %p42, %p43
      %s45 = ssub.s32 %s11, %s18
      %p46 = scmp.eq.s32.totalorder %s45, 0
      %s48 = sadd.s32 %s47, 1
      %s49 = scalar_select %p46, %s47, %s48
      %p52 = pneg %p46
      %p53 = scmp.eq.s32.totalorder %s11, 1
      %p54 = por %p52, %p53
      %p55 = scmp.ne.s32.totalorder %s47, %s50
      %p56 = scmp.eq.s32.totalorder %s11, 0
      %p57 = por %p55, %p56
      %p58 = scmp.ne.s32.totalorder %s47, %s50
      %p59 = scmp.eq.s32.totalorder %s16, 1
      %p60 = por %p58, %p59
      %p61 = scmp.ne.s32.totalorder %s50, %s51
      %p62 = scmp.eq.s32.totalorder %s16, 0
      %p63 = por %p61, %p62
      %p64 = scmp.ne.s32.totalorder %s50, %s51
      %p65 = scmp.eq.s32.totalorder %s17, 1
      %p66 = por %p64, %p65
      %p68 = scmp.ne.s32.totalorder %s51, %s67
      %p69 = scmp.eq.s32.totalorder %s17, 0
      %p70 = por %p68, %p69
      %s72 = sadd.s32 %s71, 1
      %p75 = scmp.eq.s32.totalorder %s11, 1
      %p76 = scmp.ne.s32.totalorder %s71, %s73
      %p77 = scmp.eq.s32.totalorder %s11, 0
      %p78 = por %p76, %p77
      %p79 = scmp.ne.s32.totalorder %s71, %s73
      %p80 = scmp.eq.s32.totalorder %s16, 1
      %p81 = por %p79, %p80
      %p82 = scmp.ne.s32.totalorder %s73, %s74
      %p83 = scmp.eq.s32.totalorder %s16, 0
      %p84 = por %p82, %p83
      %p85 = scmp.ne.s32.totalorder %s73, %s74
      %p86 = scmp.eq.s32.totalorder %s17, 1
      %p87 = por %p85, %p86
      %p89 = scmp.ne.s32.totalorder %s74, %s88
      %p90 = scmp.eq.s32.totalorder %s17, 0
      %p91 = por %p89, %p90
      %s93 = sadd.s32 %s92, 1
      %p96 = scmp.eq.s32.totalorder %s11, 1
      %p97 = scmp.ne.s32.totalorder %s92, %s94
      %p98 = scmp.eq.s32.totalorder %s11, 0
      %p99 = por %p97, %p98
      %p100 = scmp.ne.s32.totalorder %s92, %s94
      %p101 = scmp.eq.s32.totalorder %s16, 1
      %p102 = por %p100, %p101
      %p103 = scmp.ne.s32.totalorder %s94, %s95
      %p104 = scmp.eq.s32.totalorder %s16, 0
      %p105 = por %p103, %p104
      %p106 = scmp.ne.s32.totalorder %s94, %s95
      %p107 = scmp.eq.s32.totalorder %s17, 1
      %p108 = por %p106, %p107
      %p110 = scmp.ne.s32.totalorder %s95, %s109
      %p111 = scmp.eq.s32.totalorder %s17, 0
      %p112 = por %p110, %p111
      %s114 = sadd.s32 %s113, 1
      %p117 = scmp.eq.s32.totalorder %s11, 1
      %p118 = scmp.ne.s32.totalorder %s113, %s115
      %p119 = scmp.eq.s32.totalorder %s11, 0
      %p120 = por %p118, %p119
      %p121 = scmp.ne.s32.totalorder %s113, %s115
      %p122 = scmp.eq.s32.totalorder %s16, 1
      %p123 = por %p121, %p122
      %p124 = scmp.ne.s32.totalorder %s115, %s116
      %p125 = scmp.eq.s32.totalorder %s16, 0
      %p126 = por %p124, %p125
      %p127 = scmp.ne.s32.totalorder %s115, %s116
      %p128 = scmp.eq.s32.totalorder %s17, 1
      %p129 = por %p127, %p128
      %p131 = scmp.ne.s32.totalorder %s116, %s130
      %p132 = scmp.eq.s32.totalorder %s17, 0
      %p133 = por %p131, %p132
      %p134 = scmp.le.s32.totalorder 1, %s11
      %p135 = scmp.lt.s32.totalorder %s11, 3
      %p136 = pnand %p134, %p135
      %p137 = pneg %p136
      // Predicated region
      $region9: #{ssim_loss.1} parent=5 // pred_check
        _
      $region10: #{ssim_loss.1} parent=5 // pred_check_branch
        %139 = sbr.rel (%p136) target = $region12
      $region11: #{ssim_loss.1} parent=5 // pred_region
        %s140 = ssub.s32 %s11, 1
        // Predicated region
        $region13: #{ssim_loss.1} parent=11 // pred_check
          %p141 = pneg %p84
        $region14: #{ssim_loss.1} parent=11 // pred_check_branch
          %143 = sbr.rel (%p141) target = $region16
        $region15: #{ssim_loss.1} parent=11 // pred_region
          _
        $region16: #{ssim_loss.1} parent=11 // pred_fallthru
          _
        // Predicated region
        $region17: #{ssim_loss.1} parent=11 // pred_check
          %p144 = pneg %p105
        $region18: #{ssim_loss.1} parent=11 // pred_check_branch
          %146 = sbr.rel (%p144) target = $region20
        $region19: #{ssim_loss.1} parent=11 // pred_region
          _
        $region20: #{ssim_loss.1} parent=11 // pred_fallthru
          _
      $region12: #{ssim_loss.1} parent=5 // pred_fallthru
        _
      %p147 = scmp.lt.s32.totalorder %s11, 2
      // Predicated region
      $region21: #{ssim_loss.1} parent=5 // pred_check
        %p148 = pneg %p147
      $region22: #{ssim_loss.1} parent=5 // pred_check_branch
        %150 = sbr.rel (%p148) target = $region24
      $region23: #{ssim_loss.1} parent=5 // pred_region
        // Predicated region
        $region25: #{ssim_loss.1} parent=23 // pred_check
          %p151 = pneg %p31
        $region26: #{ssim_loss.1} parent=23 // pred_check_branch
          %153 = sbr.rel (%p151) target = $region28
        $region27: #{ssim_loss.1} parent=23 // pred_region
          %s154 = smul.u32 4, %s11
          %p155 = scmp.lt.s32.totalorder %s154, 7
          %s156 = scalar_select %p155, %s154, 7
          %s157 = smul.addr %s156, 2
          %s158 = smul.addr %s157, 8
          %s159 = scalar_lea.vmem %s0, %s158
          %s160 = smul.u32 4, %s11
        $region28: #{ssim_loss.1} parent=23 // pred_fallthru
          _
        // Predicated region
        $region29: #{ssim_loss.1} parent=23 // pred_check
          %p161 = pneg %p57
        $region30: #{ssim_loss.1} parent=23 // pred_check_branch
          %163 = sbr.rel (%p161) target = $region32
        $region31: #{ssim_loss.1} parent=23 // pred_region
          %s164 = smul.u32 4, %s11
          %p165 = scmp.lt.s32.totalorder %s164, 7
          %s166 = scalar_select %p165, %s164, 7
          %s167 = smul.addr %s166, 2
          %s168 = smul.addr %s167, 8
          %s169 = scalar_lea.vmem %s1, %s168
          %s170 = smul.u32 4, %s11
        $region32: #{ssim_loss.1} parent=23 // pred_fallthru
          _
      $region24: #{ssim_loss.1} parent=5 // pred_fallthru
        _
      %p171 = scmp.le.s32.totalorder 1, %s11
      %p172 = scmp.lt.s32.totalorder %s11, 3
      %p173 = pnand %p171, %p172
      %p174 = pneg %p173
      // Predicated region
      $region33: #{ssim_loss.1} parent=5 // pred_check
        _
      $region34: #{ssim_loss.1} parent=5 // pred_check_branch
        %176 = sbr.rel (%p173) target = $region36
      $region35: #{ssim_loss.1} parent=5 // pred_region
        %s177 = ssub.s32 %s11, 1
        %s178 = smul.u32 4, %s16
        %p179 = scmp.lt.s32.totalorder %s178, 7
        %s180 = scalar_select %p179, %s178, 7
        %s181 = smul.addr %s180, 2
        %s182 = smul.addr %s181, 8
        %s183 = scalar_lea.vmem %s0, %s182
        %p184 = pneg %p37
        %p185 = pneg %p34
        %s186 = smul.u32 4, %s16
        %p187 = scmp.lt.s32.totalorder %s186, 7
        %s188 = scalar_select %p187, %s186, 7
        %s189 = smul.addr %s188, 2
        %s190 = smul.addr %s189, 8
        %s191 = scalar_lea.vmem %s1, %s190
        %p192 = pneg %p63
        %p193 = pneg %p60
        %p194 = pneg %p84
        %p195 = pneg %p81
        %p196 = pneg %p105
        %p197 = pneg %p102
        %p198 = pneg %p126
        %p199 = pneg %p123
        %s200 = smul.u32 4, %s16
        %p201 = scmp.lt.s32.totalorder %s200, 7
        %s202 = scalar_select %p201, %s200, 7
        %s203 = smul.addr %s202, 2
        %s204 = smul.addr %s203, 8
        %s205 = scalar_lea.vmem %s0, %s204
        %s206 = smul.u32 4, %s16
        %s207 = smul.u32 4, %s16
        %p208 = scmp.lt.s32.totalorder %s207, 7
        %s209 = scalar_select %p208, %s207, 7
        %s210 = smul.addr %s209, 2
        %s211 = smul.addr %s210, 8
        %s212 = scalar_lea.vmem %s1, %s211
        %s213 = smul.u32 4, %s16
        %p214 = scmp.eq.s32.totalorder %s16, 0
        // Predicated region
        $region37: #{ssim_loss.1} parent=35 // pred_check
          %p215 = pneg %p214
        $region38: #{ssim_loss.1} parent=35 // pred_check_branch
          %217 = sbr.rel (%p215) target = $region40
        $region39: #{ssim_loss.1} parent=35 // pred_region
          %vm218 = vcmask 0
          %219 = vst.msk [vmem:[#allocation4] sm:$0x1] %vm218, 0.0
          %220 = vst [vmem:[#allocation2] sm:$0xff] 0.0
          %221 = vst [vmem:[#allocation2 + $0x8] sm:$0xff] 0.0
          %222 = vst [vmem:[#allocation2 + $0x10] sm:$0xff] 0.0
          %223 = vst [vmem:[#allocation2 + $0x18] sm:$0xff] 0.0
          %224 = vst [vmem:[#allocation2 + $0x20] sm:$0xff] 0.0
          %225 = vst [vmem:[#allocation2 + $0x28] sm:$0xff] 0.0
          %226 = vst [vmem:[#allocation2 + $0x30] sm:$0xff] 0.0
          %227 = vst [vmem:[#allocation2 + $0x38] sm:$0xff] 0.0
          %228 = vst [vmem:[#allocation3] sm:$0xff] 0.0
          %229 = vst [vmem:[#allocation3 + $0x8] sm:$0xff] 0.0
          %230 = vst [vmem:[#allocation3 + $0x10] sm:$0xff] 0.0
          %231 = vst [vmem:[#allocation3 + $0x18] sm:$0xff] 0.0
          %232 = vst [vmem:[#allocation3 + $0x20] sm:$0xff] 0.0
          %233 = vst [vmem:[#allocation3 + $0x28] sm:$0xff] 0.0
          %234 = vst [vmem:[#allocation3 + $0x30] sm:$0xff] 0.0
          %235 = vst [vmem:[#allocation3 + $0x38] sm:$0xff] 0.0
        $region40: #{ssim_loss.1} parent=35 // pred_fallthru
          _
        %v236 = vld [vmem:[%s205] sm:$0xff]
        %v237 = vld [vmem:[%s205 + $0x8] sm:$0xff]
        %v238 = vld [vmem:[%s205 + $0x10] sm:$0xff]
        %v239 = vld [vmem:[%s205 + $0x18] sm:$0xff]
        %v240 = vld [vmem:[%s205 + $0x20] sm:$0xff]
        %v241 = vld [vmem:[%s205 + $0x28] sm:$0xff]
        %v242 = vld [vmem:[%s205 + $0x30] sm:$0xff]
        %v243 = vld [vmem:[%s205 + $0x38] sm:$0xff]
        %vm244 = vcmask 130048
        %245 = vst.msk [vmem:[#allocation2] sm:$0xff] %vm244, %v236
        %246 = vst.msk [vmem:[#allocation2 + $0x8] sm:$0xff] %vm244, %v237
        %247 = vst.msk [vmem:[#allocation2 + $0x10] sm:$0xff] %vm244, %v238
        %248 = vst.msk [vmem:[#allocation2 + $0x18] sm:$0xff] %vm244, %v239
        %249 = vst.msk [vmem:[#allocation2 + $0x20] sm:$0xff] %vm244, %v240
        %250 = vst.msk [vmem:[#allocation2 + $0x28] sm:$0xff] %vm244, %v241
        %251 = vst.msk [vmem:[#allocation2 + $0x30] sm:$0xff] %vm244, %v242
        %252 = vst.msk [vmem:[#allocation2 + $0x38] sm:$0xff] %vm244, %v243
        %v253 = vld [vmem:[%s212] sm:$0xff]
        %v254 = vld [vmem:[%s212 + $0x8] sm:$0xff]
        %v255 = vld [vmem:[%s212 + $0x10] sm:$0xff]
        %v256 = vld [vmem:[%s212 + $0x18] sm:$0xff]
        %v257 = vld [vmem:[%s212 + $0x20] sm:$0xff]
        %v258 = vld [vmem:[%s212 + $0x28] sm:$0xff]
        %v259 = vld [vmem:[%s212 + $0x30] sm:$0xff]
        %v260 = vld [vmem:[%s212 + $0x38] sm:$0xff]
        %261 = vst.msk [vmem:[#allocation3] sm:$0xff] %vm244, %v253
        %262 = vst.msk [vmem:[#allocation3 + $0x8] sm:$0xff] %vm244, %v254
        %263 = vst.msk [vmem:[#allocation3 + $0x10] sm:$0xff] %vm244, %v255
        %264 = vst.msk [vmem:[#allocation3 + $0x18] sm:$0xff] %vm244, %v256
        %265 = vst.msk [vmem:[#allocation3 + $0x20] sm:$0xff] %vm244, %v257
        %266 = vst.msk [vmem:[#allocation3 + $0x28] sm:$0xff] %vm244, %v258
        %267 = vst.msk [vmem:[#allocation3 + $0x30] sm:$0xff] %vm244, %v259
        %268 = vst.msk [vmem:[#allocation3 + $0x38] sm:$0xff] %vm244, %v260
        %v269 = vld [vmem:[%s2] sm:$0xff]
        %v270 = vld [vmem:[%s2 + $0x8] sm:$0xff]
        %v271 = vld [vmem:[%s2 + $0x10] sm:$0xff]
        %v272 = vld [vmem:[%s2 + $0x18] sm:$0xff]
        %v273 = vld [vmem:[%s2 + $0x20] sm:$0xff]
        %v274 = vld [vmem:[%s2 + $0x28] sm:$0xff]
        %v275 = vld [vmem:[%s2 + $0x30] sm:$0xff]
        %v276 = vld [vmem:[%s2 + $0x38] sm:$0xff]
        %v277 = vld [vmem:[%s2 + $0x40] sm:$0xff]
        %v278 = vld [vmem:[%s2 + $0x48] sm:$0xff]
        %v279 = vld [vmem:[%s2 + $0x50] sm:$0xff]
        %v280 = vld [vmem:[%s2 + $0x58] sm:$0xff]
        %v281 = vld [vmem:[%s2 + $0x60] sm:$0xff]
        %v282 = vld [vmem:[%s2 + $0x68] sm:$0xff]
        %v283 = vld [vmem:[%s2 + $0x70] sm:$0xff]
        %v284 = vld [vmem:[%s2 + $0x78] sm:$0xff]
        %v285 = vld [vmem:[%s3] sm:$0xff]
        %v286 = vld [vmem:[%s3 + $0x8] sm:$0xff]
        %v287 = vld [vmem:[#allocation2] sm:$0xff]
        %v288 = vld [vmem:[#allocation2 + $0x8] sm:$0xff]
        %s289 = scalar_lea.vmem [#allocation2], 16
        %v290 = vld [vmem:[%s289] sm:$0xff]
        %v291 = vld [vmem:[%s289 + $0x8] sm:$0xff]
        %s292 = scalar_lea.vmem [#allocation2], 32
        %v293 = vld [vmem:[%s292] sm:$0xff]
        %v294 = vld [vmem:[%s292 + $0x8] sm:$0xff]
        %s295 = scalar_lea.vmem [#allocation2], 48
        %v296 = vld [vmem:[%s295] sm:$0xff]
        %v297 = vld [vmem:[%s295 + $0x8] sm:$0xff]
        %v298 = vld [vmem:[#allocation3] sm:$0xff]
        %v299 = vld [vmem:[#allocation3 + $0x8] sm:$0xff]
        %s300 = scalar_lea.vmem [#allocation3], 16
        %v301 = vld [vmem:[%s300] sm:$0xff]
        %v302 = vld [vmem:[%s300 + $0x8] sm:$0xff]
        %s303 = scalar_lea.vmem [#allocation3], 32
        %v304 = vld [vmem:[%s303] sm:$0xff]
        %v305 = vld [vmem:[%s303 + $0x8] sm:$0xff]
        %s306 = scalar_lea.vmem [#allocation3], 48
        %v307 = vld [vmem:[%s306] sm:$0xff]
        %v308 = vld [vmem:[%s306 + $0x8] sm:$0xff]
        %v309 = vmul.f32 %v287, %v287
        %v310 = vmul.f32 %v288, %v288
        %v311 = vmul.f32 %v290, %v290
        %v312 = vmul.f32 %v291, %v291
        %v313 = vmul.f32 %v293, %v293
        %v314 = vmul.f32 %v294, %v294
        %v315 = vmul.f32 %v296, %v296
        %v316 = vmul.f32 %v297, %v297
        %v317 = vmul.f32 %v298, %v298
        %v318 = vmul.f32 %v299, %v299
        %v319 = vmul.f32 %v301, %v301
        %v320 = vmul.f32 %v302, %v302
        %v321 = vmul.f32 %v304, %v304
        %v322 = vmul.f32 %v305, %v305
        %v323 = vmul.f32 %v307, %v307
        %v324 = vmul.f32 %v308, %v308
        %v325 = vmul.f32 %v287, %v298
        %v326 = vmul.f32 %v288, %v299
        %v327 = vmul.f32 %v290, %v301
        %v328 = vmul.f32 %v291, %v302
        %v329 = vmul.f32 %v293, %v304
        %v330 = vmul.f32 %v294, %v305
        %v331 = vmul.f32 %v296, %v307
        %v332 = vmul.f32 %v297, %v308
        %v333 = vand.u32 %v284, 4294901760
        %334 = vmatpush.msra.mxu0 %v333
        %v335 = vand.u32 %v283, 4294901760
        %336 = vmatpush.msra.mxu0 %v335
        %v337 = vand.u32 %v282, 4294901760
        %338 = vmatpush.msra.mxu0 %v337
        %v339 = vand.u32 %v281, 4294901760
        %340 = vmatpush.msra.mxu0 %v339
        %v341 = vand.u32 %v280, 4294901760
        %342 = vmatpush.msra.mxu0 %v341
        %v343 = vand.u32 %v279, 4294901760
        %344 = vmatpush.msra.mxu0 %v343
        %v345 = vand.u32 %v278, 4294901760
        %346 = vmatpush.msra.mxu0 %v345
        %v347 = vand.u32 %v277, 4294901760
        %348 = vmatpush.msra.mxu0 %v347
        %v349 = vand.u32 %v276, 4294901760
        %350 = vmatpush.msra.mxu0 %v349
        %v351 = vand.u32 %v275, 4294901760
        %352 = vmatpush.msra.mxu0 %v351
        %v353 = vand.u32 %v274, 4294901760
        %354 = vmatpush.msra.mxu0 %v353
        %v355 = vand.u32 %v273, 4294901760
        %356 = vmatpush.msra.mxu0 %v355
        %v357 = vand.u32 %v272, 4294901760
        %358 = vmatpush.msra.mxu0 %v357
        %v359 = vand.u32 %v271, 4294901760
        %360 = vmatpush.msra.mxu0 %v359
        %v361 = vand.u32 %v270, 4294901760
        %362 = vmatpush.msra.mxu0 %v361
        %v363 = vand.u32 %v269, 4294901760
        %364 = vmatpush.msra.mxu0 %v363
        %v365 = vand.u32 %v287, 4294901760
        %v366 = vsub.f32 %v287, %v365
        %v367 = vand.u32 %v366, 4294901760
        %v368 = vsub.f32 %v366, %v367
        %v369 = vand.u32 %v368, 4294901760
        %370 = vmatmul.f32.gmra.mxu0 %v369
        %v371 = vpop.f32.mrf.mxu0
        %v372 = vadd.f32 0.0, %v371
        %v373 = vand.u32 %v288, 4294901760
        %v374 = vsub.f32 %v288, %v373
        %v375 = vand.u32 %v374, 4294901760
        %v376 = vsub.f32 %v374, %v375
        %v377 = vand.u32 %v376, 4294901760
        %378 = vmatmul.f32.gmra.mxu0 %v377
        %v379 = vpop.f32.mrf.mxu0
        %v380 = vadd.f32 0.0, %v379
        %v381 = vand.u32 %v290, 4294901760
        %v382 = vsub.f32 %v290, %v381
        %v383 = vand.u32 %v382, 4294901760
        %v384 = vsub.f32 %v382, %v383
        %v385 = vand.u32 %v384, 4294901760
        %386 = vmatmul.f32.gmra.mxu0 %v385
        %v387 = vpop.f32.mrf.mxu0
        %v388 = vadd.f32 0.0, %v387
        %v389 = vand.u32 %v291, 4294901760
        %v390 = vsub.f32 %v291, %v389
        %v391 = vand.u32 %v390, 4294901760
        %v392 = vsub.f32 %v390, %v391
        %v393 = vand.u32 %v392, 4294901760
        %394 = vmatmul.f32.gmra.mxu0 %v393
        %v395 = vpop.f32.mrf.mxu0
        %v396 = vadd.f32 0.0, %v395
        %v397 = vand.u32 %v293, 4294901760
        %v398 = vsub.f32 %v293, %v397
        %v399 = vand.u32 %v398, 4294901760
        %v400 = vsub.f32 %v398, %v399
        %v401 = vand.u32 %v400, 4294901760
        %402 = vmatmul.f32.gmra.mxu0 %v401
        %v403 = vpop.f32.mrf.mxu0
        %v404 = vadd.f32 0.0, %v403
        %v405 = vand.u32 %v294, 4294901760
        %v406 = vsub.f32 %v294, %v405
        %v407 = vand.u32 %v406, 4294901760
        %v408 = vsub.f32 %v406, %v407
        %v409 = vand.u32 %v408, 4294901760
        %410 = vmatmul.f32.gmra.mxu0 %v409
        %v411 = vpop.f32.mrf.mxu0
        %v412 = vadd.f32 0.0, %v411
        %v413 = vand.u32 %v296, 4294901760
        %v414 = vsub.f32 %v296, %v413
        %v415 = vand.u32 %v414, 4294901760
        %v416 = vsub.f32 %v414, %v415
        %v417 = vand.u32 %v416, 4294901760
        %418 = vmatmul.f32.gmra.mxu0 %v417
        %v419 = vpop.f32.mrf.mxu0
        %v420 = vadd.f32 0.0, %v419
        %v421 = vand.u32 %v297, 4294901760
        %v422 = vsub.f32 %v297, %v421
        %v423 = vand.u32 %v422, 4294901760
        %v424 = vsub.f32 %v422, %v423
        %v425 = vand.u32 %v424, 4294901760
        %426 = vmatmul.f32.gmra.mxu0 %v425
        %v427 = vpop.f32.mrf.mxu0
        %v428 = vadd.f32 0.0, %v427
        %v429 = vand.u32 %v298, 4294901760
        %v430 = vsub.f32 %v298, %v429
        %v431 = vand.u32 %v430, 4294901760
        %v432 = vsub.f32 %v430, %v431
        %v433 = vand.u32 %v432, 4294901760
        %434 = vmatmul.f32.gmra.mxu0 %v433
        %v435 = vpop.f32.mrf.mxu0
        %v436 = vadd.f32 0.0, %v435
        %v437 = vand.u32 %v299, 4294901760
        %v438 = vsub.f32 %v299, %v437
        %v439 = vand.u32 %v438, 4294901760
        %v440 = vsub.f32 %v438, %v439
        %v441 = vand.u32 %v440, 4294901760
        %442 = vmatmul.f32.gmra.mxu0 %v441
        %v443 = vpop.f32.mrf.mxu0
        %v444 = vadd.f32 0.0, %v443
        %v445 = vand.u32 %v301, 4294901760
        %v446 = vsub.f32 %v301, %v445
        %v447 = vand.u32 %v446, 4294901760
        %v448 = vsub.f32 %v446, %v447
        %v449 = vand.u32 %v448, 4294901760
        %450 = vmatmul.f32.gmra.mxu0 %v449
        %v451 = vpop.f32.mrf.mxu0
        %v452 = vadd.f32 0.0, %v451
        %v453 = vand.u32 %v302, 4294901760
        %v454 = vsub.f32 %v302, %v453
        %v455 = vand.u32 %v454, 4294901760
        %v456 = vsub.f32 %v454, %v455
        %v457 = vand.u32 %v456, 4294901760
        %458 = vmatmul.f32.gmra.mxu0 %v457
        %v459 = vpop.f32.mrf.mxu0
        %v460 = vadd.f32 0.0, %v459
        %v461 = vand.u32 %v304, 4294901760
        %v462 = vsub.f32 %v304, %v461
        %v463 = vand.u32 %v462, 4294901760
        %v464 = vsub.f32 %v462, %v463
        %v465 = vand.u32 %v464, 4294901760
        %466 = vmatmul.f32.gmra.mxu0 %v465
        %v467 = vpop.f32.mrf.mxu0
        %v468 = vadd.f32 0.0, %v467
        %v469 = vand.u32 %v305, 4294901760
        %v470 = vsub.f32 %v305, %v469
        %v471 = vand.u32 %v470, 4294901760
        %v472 = vsub.f32 %v470, %v471
        %v473 = vand.u32 %v472, 4294901760
        %474 = vmatmul.f32.gmra.mxu0 %v473
        %v475 = vpop.f32.mrf.mxu0
        %v476 = vadd.f32 0.0, %v475
        %v477 = vand.u32 %v307, 4294901760
        %v478 = vsub.f32 %v307, %v477
        %v479 = vand.u32 %v478, 4294901760
        %v480 = vsub.f32 %v478, %v479
        %v481 = vand.u32 %v480, 4294901760
        %482 = vmatmul.f32.gmra.mxu0 %v481
        %v483 = vpop.f32.mrf.mxu0
        %v484 = vadd.f32 0.0, %v483
        %v485 = vand.u32 %v308, 4294901760
        %v486 = vsub.f32 %v308, %v485
        %v487 = vand.u32 %v486, 4294901760
        %v488 = vsub.f32 %v486, %v487
        %v489 = vand.u32 %v488, 4294901760
        %490 = vmatmul.f32.gmra.mxu0 %v489
        %v491 = vpop.f32.mrf.mxu0
        %v492 = vadd.f32 0.0, %v491
        %v493 = vand.u32 %v309, 4294901760
        %v494 = vsub.f32 %v309, %v493
        %v495 = vand.u32 %v494, 4294901760
        %v496 = vsub.f32 %v494, %v495
        %v497 = vand.u32 %v496, 4294901760
        %498 = vmatmul.f32.gmra.mxu0 %v497
        %v499 = vpop.f32.mrf.mxu0
        %v500 = vadd.f32 0.0, %v499
        %v501 = vand.u32 %v310, 4294901760
        %v502 = vsub.f32 %v310, %v501
        %v503 = vand.u32 %v502, 4294901760
        %v504 = vsub.f32 %v502, %v503
        %v505 = vand.u32 %v504, 4294901760
        %506 = vmatmul.f32.gmra.mxu0 %v505
        %v507 = vpop.f32.mrf.mxu0
        %v508 = vadd.f32 0.0, %v507
        %v509 = vand.u32 %v311, 4294901760
        %v510 = vsub.f32 %v311, %v509
        %v511 = vand.u32 %v510, 4294901760
        %v512 = vsub.f32 %v510, %v511
        %v513 = vand.u32 %v512, 4294901760
        %514 = vmatmul.f32.gmra.mxu0 %v513
        %v515 = vpop.f32.mrf.mxu0
        %v516 = vadd.f32 0.0, %v515
        %v517 = vand.u32 %v312, 4294901760
        %v518 = vsub.f32 %v312, %v517
        %v519 = vand.u32 %v518, 4294901760
        %v520 = vsub.f32 %v518, %v519
        %v521 = vand.u32 %v520, 4294901760
        %522 = vmatmul.f32.gmra.mxu0 %v521
        %v523 = vpop.f32.mrf.mxu0
        %v524 = vadd.f32 0.0, %v523
        %v525 = vand.u32 %v313, 4294901760
        %v526 = vsub.f32 %v313, %v525
        %v527 = vand.u32 %v526, 4294901760
        %v528 = vsub.f32 %v526, %v527
        %v529 = vand.u32 %v528, 4294901760
        %530 = vmatmul.f32.gmra.mxu0 %v529
        %v531 = vpop.f32.mrf.mxu0
        %v532 = vadd.f32 0.0, %v531
        %v533 = vand.u32 %v314, 4294901760
        %v534 = vsub.f32 %v314, %v533
        %v535 = vand.u32 %v534, 4294901760
        %v536 = vsub.f32 %v534, %v535
        %v537 = vand.u32 %v536, 4294901760
        %538 = vmatmul.f32.gmra.mxu0 %v537
        %v539 = vpop.f32.mrf.mxu0
        %v540 = vadd.f32 0.0, %v539
        %v541 = vand.u32 %v315, 4294901760
        %v542 = vsub.f32 %v315, %v541
        %v543 = vand.u32 %v542, 4294901760
        %v544 = vsub.f32 %v542, %v543
        %v545 = vand.u32 %v544, 4294901760
        %546 = vmatmul.f32.gmra.mxu0 %v545
        %v547 = vpop.f32.mrf.mxu0
        %v548 = vadd.f32 0.0, %v547
        %v549 = vand.u32 %v316, 4294901760
        %v550 = vsub.f32 %v316, %v549
        %v551 = vand.u32 %v550, 4294901760
        %v552 = vsub.f32 %v550, %v551
        %v553 = vand.u32 %v552, 4294901760
        %554 = vmatmul.f32.gmra.mxu0 %v553
        %v555 = vpop.f32.mrf.mxu0
        %v556 = vadd.f32 0.0, %v555
        %v557 = vand.u32 %v317, 4294901760
        %v558 = vsub.f32 %v317, %v557
        %v559 = vand.u32 %v558, 4294901760
        %v560 = vsub.f32 %v558, %v559
        %v561 = vand.u32 %v560, 4294901760
        %562 = vmatmul.f32.gmra.mxu0 %v561
        %v563 = vpop.f32.mrf.mxu0
        %v564 = vadd.f32 0.0, %v563
        %v565 = vand.u32 %v318, 4294901760
        %v566 = vsub.f32 %v318, %v565
        %v567 = vand.u32 %v566, 4294901760
        %v568 = vsub.f32 %v566, %v567
        %v569 = vand.u32 %v568, 4294901760
        %570 = vmatmul.f32.gmra.mxu0 %v569
        %v571 = vpop.f32.mrf.mxu0
        %v572 = vadd.f32 0.0, %v571
        %v573 = vand.u32 %v319, 4294901760
        %v574 = vsub.f32 %v319, %v573
        %v575 = vand.u32 %v574, 4294901760
        %v576 = vsub.f32 %v574, %v575
        %v577 = vand.u32 %v576, 4294901760
        %578 = vmatmul.f32.gmra.mxu0 %v577
        %v579 = vpop.f32.mrf.mxu0
        %v580 = vadd.f32 0.0, %v579
        %v581 = vand.u32 %v320, 4294901760
        %v582 = vsub.f32 %v320, %v581
        %v583 = vand.u32 %v582, 4294901760
        %v584 = vsub.f32 %v582, %v583
        %v585 = vand.u32 %v584, 4294901760
        %586 = vmatmul.f32.gmra.mxu0 %v585
        %v587 = vpop.f32.mrf.mxu0
        %v588 = vadd.f32 0.0, %v587
        %v589 = vand.u32 %v321, 4294901760
        %v590 = vsub.f32 %v321, %v589
        %v591 = vand.u32 %v590, 4294901760
        %v592 = vsub.f32 %v590, %v591
        %v593 = vand.u32 %v592, 4294901760
        %594 = vmatmul.f32.gmra.mxu0 %v593
        %v595 = vpop.f32.mrf.mxu0
        %v596 = vadd.f32 0.0, %v595
        %v597 = vand.u32 %v322, 4294901760
        %v598 = vsub.f32 %v322, %v597
        %v599 = vand.u32 %v598, 4294901760
        %v600 = vsub.f32 %v598, %v599
        %v601 = vand.u32 %v600, 4294901760
        %602 = vmatmul.f32.gmra.mxu0 %v601
        %v603 = vpop.f32.mrf.mxu0
        %v604 = vadd.f32 0.0, %v603
        %v605 = vand.u32 %v323, 4294901760
        %v606 = vsub.f32 %v323, %v605
        %v607 = vand.u32 %v606, 4294901760
        %v608 = vsub.f32 %v606, %v607
        %v609 = vand.u32 %v608, 4294901760
        %610 = vmatmul.f32.gmra.mxu0 %v609
        %v611 = vpop.f32.mrf.mxu0
        %v612 = vadd.f32 0.0, %v611
        %v613 = vand.u32 %v324, 4294901760
        %v614 = vsub.f32 %v324, %v613
        %v615 = vand.u32 %v614, 4294901760
        %v616 = vsub.f32 %v614, %v615
        %v617 = vand.u32 %v616, 4294901760
        %618 = vmatmul.f32.gmra.mxu0 %v617
        %v619 = vpop.f32.mrf.mxu0
        %v620 = vadd.f32 0.0, %v619
        %v621 = vand.u32 %v325, 4294901760
        %v622 = vsub.f32 %v325, %v621
        %v623 = vand.u32 %v622, 4294901760
        %v624 = vsub.f32 %v622, %v623
        %v625 = vand.u32 %v624, 4294901760
        %626 = vmatmul.f32.gmra.mxu0 %v625
        %v627 = vpop.f32.mrf.mxu0
        %v628 = vadd.f32 0.0, %v627
        %v629 = vand.u32 %v326, 4294901760
        %v630 = vsub.f32 %v326, %v629
        %v631 = vand.u32 %v630, 4294901760
        %v632 = vsub.f32 %v630, %v631
        %v633 = vand.u32 %v632, 4294901760
        %634 = vmatmul.f32.gmra.mxu0 %v633
        %v635 = vpop.f32.mrf.mxu0
        %v636 = vadd.f32 0.0, %v635
        %v637 = vand.u32 %v327, 4294901760
        %v638 = vsub.f32 %v327, %v637
        %v639 = vand.u32 %v638, 4294901760
        %v640 = vsub.f32 %v638, %v639
        %v641 = vand.u32 %v640, 4294901760
        %642 = vmatmul.f32.gmra.mxu0 %v641
        %v643 = vpop.f32.mrf.mxu0
        %v644 = vadd.f32 0.0, %v643
        %v645 = vand.u32 %v328, 4294901760
        %v646 = vsub.f32 %v328, %v645
        %v647 = vand.u32 %v646, 4294901760
        %v648 = vsub.f32 %v646, %v647
        %v649 = vand.u32 %v648, 4294901760
        %650 = vmatmul.f32.gmra.mxu0 %v649
        %v651 = vpop.f32.mrf.mxu0
        %v652 = vadd.f32 0.0, %v651
        %v653 = vand.u32 %v329, 4294901760
        %v654 = vsub.f32 %v329, %v653
        %v655 = vand.u32 %v654, 4294901760
        %v656 = vsub.f32 %v654, %v655
        %v657 = vand.u32 %v656, 4294901760
        %658 = vmatmul.f32.gmra.mxu0 %v657
        %v659 = vpop.f32.mrf.mxu0
        %v660 = vadd.f32 0.0, %v659
        %v661 = vand.u32 %v330, 4294901760
        %v662 = vsub.f32 %v330, %v661
        %v663 = vand.u32 %v662, 4294901760
        %v664 = vsub.f32 %v662, %v663
        %v665 = vand.u32 %v664, 4294901760
        %666 = vmatmul.f32.gmra.mxu0 %v665
        %v667 = vpop.f32.mrf.mxu0
        %v668 = vadd.f32 0.0, %v667
        %v669 = vand.u32 %v331, 4294901760
        %v670 = vsub.f32 %v331, %v669
        %v671 = vand.u32 %v670, 4294901760
        %v672 = vsub.f32 %v670, %v671
        %v673 = vand.u32 %v672, 4294901760
        %674 = vmatmul.f32.gmra.mxu0 %v673
        %v675 = vpop.f32.mrf.mxu0
        %v676 = vadd.f32 0.0, %v675
        %v677 = vand.u32 %v332, 4294901760
        %v678 = vsub.f32 %v332, %v677
        %v679 = vand.u32 %v678, 4294901760
        %v680 = vsub.f32 %v678, %v679
        %v681 = vand.u32 %v680, 4294901760
        %682 = vmatmul.f32.gmra.mxu0 %v681
        %v683 = vpop.f32.mrf.mxu0
        %v684 = vadd.f32 0.0, %v683
        %685 = vdwg.mxu0
        %v686 = vand.u32 %v284, 4294901760
        %v687 = vsub.f32 %v284, %v686
        %v688 = vand.u32 %v687, 4294901760
        %v689 = vsub.f32 %v687, %v688
        %v690 = vand.u32 %v689, 4294901760
        %691 = vmatpush.msra.mxu0 %v690
        %v692 = vand.u32 %v283, 4294901760
        %v693 = vsub.f32 %v283, %v692
        %v694 = vand.u32 %v693, 4294901760
        %v695 = vsub.f32 %v693, %v694
        %v696 = vand.u32 %v695, 4294901760
        %697 = vmatpush.msra.mxu0 %v696
        %v698 = vand.u32 %v282, 4294901760
        %v699 = vsub.f32 %v282, %v698
        %v700 = vand.u32 %v699, 4294901760
        %v701 = vsub.f32 %v699, %v700
        %v702 = vand.u32 %v701, 4294901760
        %703 = vmatpush.msra.mxu0 %v702
        %v704 = vand.u32 %v281, 4294901760
        %v705 = vsub.f32 %v281, %v704
        %v706 = vand.u32 %v705, 4294901760
        %v707 = vsub.f32 %v705, %v706
        %v708 = vand.u32 %v707, 4294901760
        %709 = vmatpush.msra.mxu0 %v708
        %v710 = vand.u32 %v280, 4294901760
        %v711 = vsub.f32 %v280, %v710
        %v712 = vand.u32 %v711, 4294901760
        %v713 = vsub.f32 %v711, %v712
        %v714 = vand.u32 %v713, 4294901760
        %715 = vmatpush.msra.mxu0 %v714
        %v716 = vand.u32 %v279, 4294901760
        %v717 = vsub.f32 %v279, %v716
        %v718 = vand.u32 %v717, 4294901760
        %v719 = vsub.f32 %v717, %v718
        %v720 = vand.u32 %v719, 4294901760
        %721 = vmatpush.msra.mxu0 %v720
        %v722 = vand.u32 %v278, 4294901760
        %v723 = vsub.f32 %v278, %v722
        %v724 = vand.u32 %v723, 4294901760
        %v725 = vsub.f32 %v723, %v724
        %v726 = vand.u32 %v725, 4294901760
        %727 = vmatpush.msra.mxu0 %v726
        %v728 = vand.u32 %v277, 4294901760
        %v729 = vsub.f32 %v277, %v728
        %v730 = vand.u32 %v729, 4294901760
        %v731 = vsub.f32 %v729, %v730
        %v732 = vand.u32 %v731, 4294901760
        %733 = vmatpush.msra.mxu0 %v732
        %v734 = vand.u32 %v276, 4294901760
        %v735 = vsub.f32 %v276, %v734
        %v736 = vand.u32 %v735, 4294901760
        %v737 = vsub.f32 %v735, %v736
        %v738 = vand.u32 %v737, 4294901760
        %739 = vmatpush.msra.mxu0 %v738
        %v740 = vand.u32 %v275, 4294901760
        %v741 = vsub.f32 %v275, %v740
        %v742 = vand.u32 %v741, 4294901760
        %v743 = vsub.f32 %v741, %v742
        %v744 = vand.u32 %v743, 4294901760
        %745 = vmatpush.msra.mxu0 %v744
        %v746 = vand.u32 %v274, 4294901760
        %v747 = vsub.f32 %v274, %v746
        %v748 = vand.u32 %v747, 4294901760
        %v749 = vsub.f32 %v747, %v748
        %v750 = vand.u32 %v749, 4294901760
        %751 = vmatpush.msra.mxu0 %v750
        %v752 = vand.u32 %v273, 4294901760
        %v753 = vsub.f32 %v273, %v752
        %v754 = vand.u32 %v753, 4294901760
        %v755 = vsub.f32 %v753, %v754
        %v756 = vand.u32 %v755, 4294901760
        %757 = vmatpush.msra.mxu0 %v756
        %v758 = vand.u32 %v272, 4294901760
        %v759 = vsub.f32 %v272, %v758
        %v760 = vand.u32 %v759, 4294901760
        %v761 = vsub.f32 %v759, %v760
        %v762 = vand.u32 %v761, 4294901760
        %763 = vmatpush.msra.mxu0 %v762
        %v764 = vand.u32 %v271, 4294901760
        %v765 = vsub.f32 %v271, %v764
        %v766 = vand.u32 %v765, 4294901760
        %v767 = vsub.f32 %v765, %v766
        %v768 = vand.u32 %v767, 4294901760
        %769 = vmatpush.msra.mxu0 %v768
        %v770 = vand.u32 %v270, 4294901760
        %v771 = vsub.f32 %v270, %v770
        %v772 = vand.u32 %v771, 4294901760
        %v773 = vsub.f32 %v771, %v772
        %v774 = vand.u32 %v773, 4294901760
        %775 = vmatpush.msra.mxu0 %v774
        %v776 = vand.u32 %v269, 4294901760
        %v777 = vsub.f32 %v269, %v776
        %v778 = vand.u32 %v777, 4294901760
        %v779 = vsub.f32 %v777, %v778
        %v780 = vand.u32 %v779, 4294901760
        %781 = vmatpush.msra.mxu0 %v780
        %v782 = vand.u32 %v287, 4294901760
        %783 = vmatmul.f32.gmra.mxu0 %v782
        %v784 = vpop.f32.mrf.mxu0
        %v785 = vadd.f32 %v372, %v784
        %v786 = vand.u32 %v288, 4294901760
        %787 = vmatmul.f32.gmra.mxu0 %v786
        %v788 = vpop.f32.mrf.mxu0
        %v789 = vadd.f32 %v380, %v788
        %v790 = vand.u32 %v290, 4294901760
        %791 = vmatmul.f32.gmra.mxu0 %v790
        %v792 = vpop.f32.mrf.mxu0
        %v793 = vadd.f32 %v388, %v792
        %v794 = vand.u32 %v291, 4294901760
        %795 = vmatmul.f32.gmra.mxu0 %v794
        %v796 = vpop.f32.mrf.mxu0
        %v797 = vadd.f32 %v396, %v796
        %v798 = vand.u32 %v293, 4294901760
        %799 = vmatmul.f32.gmra.mxu0 %v798
        %v800 = vpop.f32.mrf.mxu0
        %v801 = vadd.f32 %v404, %v800
        %v802 = vand.u32 %v294, 4294901760
        %803 = vmatmul.f32.gmra.mxu0 %v802
        %v804 = vpop.f32.mrf.mxu0
        %v805 = vadd.f32 %v412, %v804
        %v806 = vand.u32 %v296, 4294901760
        %807 = vmatmul.f32.gmra.mxu0 %v806
        %v808 = vpop.f32.mrf.mxu0
        %v809 = vadd.f32 %v420, %v808
        %v810 = vand.u32 %v297, 4294901760
        %811 = vmatmul.f32.gmra.mxu0 %v810
        %v812 = vpop.f32.mrf.mxu0
        %v813 = vadd.f32 %v428, %v812
        %v814 = vand.u32 %v298, 4294901760
        %815 = vmatmul.f32.gmra.mxu0 %v814
        %v816 = vpop.f32.mrf.mxu0
        %v817 = vadd.f32 %v436, %v816
        %v818 = vand.u32 %v299, 4294901760
        %819 = vmatmul.f32.gmra.mxu0 %v818
        %v820 = vpop.f32.mrf.mxu0
        %v821 = vadd.f32 %v444, %v820
        %v822 = vand.u32 %v301, 4294901760
        %823 = vmatmul.f32.gmra.mxu0 %v822
        %v824 = vpop.f32.mrf.mxu0
        %v825 = vadd.f32 %v452, %v824
        %v826 = vand.u32 %v302, 4294901760
        %827 = vmatmul.f32.gmra.mxu0 %v826
        %v828 = vpop.f32.mrf.mxu0
        %v829 = vadd.f32 %v460, %v828
        %v830 = vand.u32 %v304, 4294901760
        %831 = vmatmul.f32.gmra.mxu0 %v830
        %v832 = vpop.f32.mrf.mxu0
        %v833 = vadd.f32 %v468, %v832
        %v834 = vand.u32 %v305, 4294901760
        %835 = vmatmul.f32.gmra.mxu0 %v834
        %v836 = vpop.f32.mrf.mxu0
        %v837 = vadd.f32 %v476, %v836
        %v838 = vand.u32 %v307, 4294901760
        %839 = vmatmul.f32.gmra.mxu0 %v838
        %v840 = vpop.f32.mrf.mxu0
        %v841 = vadd.f32 %v484, %v840
        %v842 = vand.u32 %v308, 4294901760
        %843 = vmatmul.f32.gmra.mxu0 %v842
        %v844 = vpop.f32.mrf.mxu0
        %v845 = vadd.f32 %v492, %v844
        %v846 = vand.u32 %v309, 4294901760
        %847 = vmatmul.f32.gmra.mxu0 %v846
        %v848 = vpop.f32.mrf.mxu0
        %v849 = vadd.f32 %v500, %v848
        %v850 = vand.u32 %v310, 4294901760
        %851 = vmatmul.f32.gmra.mxu0 %v850
        %v852 = vpop.f32.mrf.mxu0
        %v853 = vadd.f32 %v508, %v852
        %v854 = vand.u32 %v311, 4294901760
        %855 = vmatmul.f32.gmra.mxu0 %v854
        %v856 = vpop.f32.mrf.mxu0
        %v857 = vadd.f32 %v516, %v856
        %v858 = vand.u32 %v312, 4294901760
        %859 = vmatmul.f32.gmra.mxu0 %v858
        %v860 = vpop.f32.mrf.mxu0
        %v861 = vadd.f32 %v524, %v860
        %v862 = vand.u32 %v313, 4294901760
        %863 = vmatmul.f32.gmra.mxu0 %v862
        %v864 = vpop.f32.mrf.mxu0
        %v865 = vadd.f32 %v532, %v864
        %v866 = vand.u32 %v314, 4294901760
        %867 = vmatmul.f32.gmra.mxu0 %v866
        %v868 = vpop.f32.mrf.mxu0
        %v869 = vadd.f32 %v540, %v868
        %v870 = vand.u32 %v315, 4294901760
        %871 = vmatmul.f32.gmra.mxu0 %v870
        %v872 = vpop.f32.mrf.mxu0
        %v873 = vadd.f32 %v548, %v872
        %v874 = vand.u32 %v316, 4294901760
        %875 = vmatmul.f32.gmra.mxu0 %v874
        %v876 = vpop.f32.mrf.mxu0
        %v877 = vadd.f32 %v556, %v876
        %v878 = vand.u32 %v317, 4294901760
        %879 = vmatmul.f32.gmra.mxu0 %v878
        %v880 = vpop.f32.mrf.mxu0
        %v881 = vadd.f32 %v564, %v880
        %v882 = vand.u32 %v318, 4294901760
        %883 = vmatmul.f32.gmra.mxu0 %v882
        %v884 = vpop.f32.mrf.mxu0
        %v885 = vadd.f32 %v572, %v884
        %v886 = vand.u32 %v319, 4294901760
        %887 = vmatmul.f32.gmra.mxu0 %v886
        %v888 = vpop.f32.mrf.mxu0
        %v889 = vadd.f32 %v580, %v888
        %v890 = vand.u32 %v320, 4294901760
        %891 = vmatmul.f32.gmra.mxu0 %v890
        %v892 = vpop.f32.mrf.mxu0
        %v893 = vadd.f32 %v588, %v892
        %v894 = vand.u32 %v321, 4294901760
        %895 = vmatmul.f32.gmra.mxu0 %v894
        %v896 = vpop.f32.mrf.mxu0
        %v897 = vadd.f32 %v596, %v896
        %v898 = vand.u32 %v322, 4294901760
        %899 = vmatmul.f32.gmra.mxu0 %v898
        %v900 = vpop.f32.mrf.mxu0
        %v901 = vadd.f32 %v604, %v900
        %v902 = vand.u32 %v323, 4294901760
        %903 = vmatmul.f32.gmra.mxu0 %v902
        %v904 = vpop.f32.mrf.mxu0
        %v905 = vadd.f32 %v612, %v904
        %v906 = vand.u32 %v324, 4294901760
        %907 = vmatmul.f32.gmra.mxu0 %v906
        %v908 = vpop.f32.mrf.mxu0
        %v909 = vadd.f32 %v620, %v908
        %v910 = vand.u32 %v325, 4294901760
        %911 = vmatmul.f32.gmra.mxu0 %v910
        %v912 = vpop.f32.mrf.mxu0
        %v913 = vadd.f32 %v628, %v912
        %v914 = vand.u32 %v326, 4294901760
        %915 = vmatmul.f32.gmra.mxu0 %v914
        %v916 = vpop.f32.mrf.mxu0
        %v917 = vadd.f32 %v636, %v916
        %v918 = vand.u32 %v327, 4294901760
        %919 = vmatmul.f32.gmra.mxu0 %v918
        %v920 = vpop.f32.mrf.mxu0
        %v921 = vadd.f32 %v644, %v920
        %v922 = vand.u32 %v328, 4294901760
        %923 = vmatmul.f32.gmra.mxu0 %v922
        %v924 = vpop.f32.mrf.mxu0
        %v925 = vadd.f32 %v652, %v924
        %v926 = vand.u32 %v329, 4294901760
        %927 = vmatmul.f32.gmra.mxu0 %v926
        %v928 = vpop.f32.mrf.mxu0
        %v929 = vadd.f32 %v660, %v928
        %v930 = vand.u32 %v330, 4294901760
        %931 = vmatmul.f32.gmra.mxu0 %v930
        %v932 = vpop.f32.mrf.mxu0
        %v933 = vadd.f32 %v668, %v932
        %v934 = vand.u32 %v331, 4294901760
        %935 = vmatmul.f32.gmra.mxu0 %v934
        %v936 = vpop.f32.mrf.mxu0
        %v937 = vadd.f32 %v676, %v936
        %v938 = vand.u32 %v332, 4294901760
        %939 = vmatmul.f32.gmra.mxu0 %v938
        %v940 = vpop.f32.mrf.mxu0
        %v941 = vadd.f32 %v684, %v940
        %942 = vdwg.mxu0
        %v943 = vand.u32 %v284, 4294901760
        %v944 = vsub.f32 %v284, %v943
        %945 = vmatpush.msra.mxu0 %v944
        %v946 = vand.u32 %v283, 4294901760
        %v947 = vsub.f32 %v283, %v946
        %948 = vmatpush.msra.mxu0 %v947
        %v949 = vand.u32 %v282, 4294901760
        %v950 = vsub.f32 %v282, %v949
        %951 = vmatpush.msra.mxu0 %v950
        %v952 = vand.u32 %v281, 4294901760
        %v953 = vsub.f32 %v281, %v952
        %954 = vmatpush.msra.mxu0 %v953
        %v955 = vand.u32 %v280, 4294901760
        %v956 = vsub.f32 %v280, %v955
        %957 = vmatpush.msra.mxu0 %v956
        %v958 = vand.u32 %v279, 4294901760
        %v959 = vsub.f32 %v279, %v958
        %960 = vmatpush.msra.mxu0 %v959
        %v961 = vand.u32 %v278, 4294901760
        %v962 = vsub.f32 %v278, %v961
        %963 = vmatpush.msra.mxu0 %v962
        %v964 = vand.u32 %v277, 4294901760
        %v965 = vsub.f32 %v277, %v964
        %966 = vmatpush.msra.mxu0 %v965
        %v967 = vand.u32 %v276, 4294901760
        %v968 = vsub.f32 %v276, %v967
        %969 = vmatpush.msra.mxu0 %v968
        %v970 = vand.u32 %v275, 4294901760
        %v971 = vsub.f32 %v275, %v970
        %972 = vmatpush.msra.mxu0 %v971
        %v973 = vand.u32 %v274, 4294901760
        %v974 = vsub.f32 %v274, %v973
        %975 = vmatpush.msra.mxu0 %v974
        %v976 = vand.u32 %v273, 4294901760
        %v977 = vsub.f32 %v273, %v976
        %978 = vmatpush.msra.mxu0 %v977
        %v979 = vand.u32 %v272, 4294901760
        %v980 = vsub.f32 %v272, %v979
        %981 = vmatpush.msra.mxu0 %v980
        %v982 = vand.u32 %v271, 4294901760
        %v983 = vsub.f32 %v271, %v982
        %984 = vmatpush.msra.mxu0 %v983
        %v985 = vand.u32 %v270, 4294901760
        %v986 = vsub.f32 %v270, %v985
        %987 = vmatpush.msra.mxu0 %v986
        %v988 = vand.u32 %v269, 4294901760
        %v989 = vsub.f32 %v269, %v988
        %990 = vmatpush.msra.mxu0 %v989
        %v991 = vand.u32 %v287, 4294901760
        %v992 = vsub.f32 %v287, %v991
        %993 = vmatmul.f32.gmra.mxu0 %v992
        %v994 = vpop.f32.mrf.mxu0
        %v995 = vadd.f32 %v785, %v994
        %v996 = vand.u32 %v288, 4294901760
        %v997 = vsub.f32 %v288, %v996
        %998 = vmatmul.f32.gmra.mxu0 %v997
        %v999 = vpop.f32.mrf.mxu0
        %v1000 = vadd.f32 %v789, %v999
        %v1001 = vand.u32 %v290, 4294901760
        %v1002 = vsub.f32 %v290, %v1001
        %1003 = vmatmul.f32.gmra.mxu0 %v1002
        %v1004 = vpop.f32.mrf.mxu0
        %v1005 = vadd.f32 %v793, %v1004
        %v1006 = vand.u32 %v291, 4294901760
        %v1007 = vsub.f32 %v291, %v1006
        %1008 = vmatmul.f32.gmra.mxu0 %v1007
        %v1009 = vpop.f32.mrf.mxu0
        %v1010 = vadd.f32 %v797, %v1009
        %v1011 = vand.u32 %v293, 4294901760
        %v1012 = vsub.f32 %v293, %v1011
        %1013 = vmatmul.f32.gmra.mxu0 %v1012
        %v1014 = vpop.f32.mrf.mxu0
        %v1015 = vadd.f32 %v801, %v1014
        %v1016 = vand.u32 %v294, 4294901760
        %v1017 = vsub.f32 %v294, %v1016
        %1018 = vmatmul.f32.gmra.mxu0 %v1017
        %v1019 = vpop.f32.mrf.mxu0
        %v1020 = vadd.f32 %v805, %v1019
        %v1021 = vand.u32 %v296, 4294901760
        %v1022 = vsub.f32 %v296, %v1021
        %1023 = vmatmul.f32.gmra.mxu0 %v1022
        %v1024 = vpop.f32.mrf.mxu0
        %v1025 = vadd.f32 %v809, %v1024
        %v1026 = vand.u32 %v297, 4294901760
        %v1027 = vsub.f32 %v297, %v1026
        %1028 = vmatmul.f32.gmra.mxu0 %v1027
        %v1029 = vpop.f32.mrf.mxu0
        %v1030 = vadd.f32 %v813, %v1029
        %v1031 = vand.u32 %v298, 4294901760
        %v1032 = vsub.f32 %v298, %v1031
        %1033 = vmatmul.f32.gmra.mxu0 %v1032
        %v1034 = vpop.f32.mrf.mxu0
        %v1035 = vadd.f32 %v817, %v1034
        %v1036 = vand.u32 %v299, 4294901760
        %v1037 = vsub.f32 %v299, %v1036
        %1038 = vmatmul.f32.gmra.mxu0 %v1037
        %v1039 = vpop.f32.mrf.mxu0
        %v1040 = vadd.f32 %v821, %v1039
        %v1041 = vand.u32 %v301, 4294901760
        %v1042 = vsub.f32 %v301, %v1041
        %1043 = vmatmul.f32.gmra.mxu0 %v1042
        %v1044 = vpop.f32.mrf.mxu0
        %v1045 = vadd.f32 %v825, %v1044
        %v1046 = vand.u32 %v302, 4294901760
        %v1047 = vsub.f32 %v302, %v1046
        %1048 = vmatmul.f32.gmra.mxu0 %v1047
        %v1049 = vpop.f32.mrf.mxu0
        %v1050 = vadd.f32 %v829, %v1049
        %v1051 = vand.u32 %v304, 4294901760
        %v1052 = vsub.f32 %v304, %v1051
        %1053 = vmatmul.f32.gmra.mxu0 %v1052
        %v1054 = vpop.f32.mrf.mxu0
        %v1055 = vadd.f32 %v833, %v1054
        %v1056 = vand.u32 %v305, 4294901760
        %v1057 = vsub.f32 %v305, %v1056
        %1058 = vmatmul.f32.gmra.mxu0 %v1057
        %v1059 = vpop.f32.mrf.mxu0
        %v1060 = vadd.f32 %v837, %v1059
        %v1061 = vand.u32 %v307, 4294901760
        %v1062 = vsub.f32 %v307, %v1061
        %1063 = vmatmul.f32.gmra.mxu0 %v1062
        %v1064 = vpop.f32.mrf.mxu0
        %v1065 = vadd.f32 %v841, %v1064
        %v1066 = vand.u32 %v308, 4294901760
        %v1067 = vsub.f32 %v308, %v1066
        %1068 = vmatmul.f32.gmra.mxu0 %v1067
        %v1069 = vpop.f32.mrf.mxu0
        %v1070 = vadd.f32 %v845, %v1069
        %v1071 = vand.u32 %v309, 4294901760
        %v1072 = vsub.f32 %v309, %v1071
        %1073 = vmatmul.f32.gmra.mxu0 %v1072
        %v1074 = vpop.f32.mrf.mxu0
        %v1075 = vadd.f32 %v849, %v1074
        %v1076 = vand.u32 %v310, 4294901760
        %v1077 = vsub.f32 %v310, %v1076
        %1078 = vmatmul.f32.gmra.mxu0 %v1077
        %v1079 = vpop.f32.mrf.mxu0
        %v1080 = vadd.f32 %v853, %v1079
        %v1081 = vand.u32 %v311, 4294901760
        %v1082 = vsub.f32 %v311, %v1081
        %1083 = vmatmul.f32.gmra.mxu0 %v1082
        %v1084 = vpop.f32.mrf.mxu0
        %v1085 = vadd.f32 %v857, %v1084
        %v1086 = vand.u32 %v312, 4294901760
        %v1087 = vsub.f32 %v312, %v1086
        %1088 = vmatmul.f32.gmra.mxu0 %v1087
        %v1089 = vpop.f32.mrf.mxu0
        %v1090 = vadd.f32 %v861, %v1089
        %v1091 = vand.u32 %v313, 4294901760
        %v1092 = vsub.f32 %v313, %v1091
        %1093 = vmatmul.f32.gmra.mxu0 %v1092
        %v1094 = vpop.f32.mrf.mxu0
        %v1095 = vadd.f32 %v865, %v1094
        %v1096 = vand.u32 %v314, 4294901760
        %v1097 = vsub.f32 %v314, %v1096
        %1098 = vmatmul.f32.gmra.mxu0 %v1097
        %v1099 = vpop.f32.mrf.mxu0
        %v1100 = vadd.f32 %v869, %v1099
        %v1101 = vand.u32 %v315, 4294901760
        %v1102 = vsub.f32 %v315, %v1101
        %1103 = vmatmul.f32.gmra.mxu0 %v1102
        %v1104 = vpop.f32.mrf.mxu0
        %v1105 = vadd.f32 %v873, %v1104
        %v1106 = vand.u32 %v316, 4294901760
        %v1107 = vsub.f32 %v316, %v1106
        %1108 = vmatmul.f32.gmra.mxu0 %v1107
        %v1109 = vpop.f32.mrf.mxu0
        %v1110 = vadd.f32 %v877, %v1109
        %v1111 = vand.u32 %v317, 4294901760
        %v1112 = vsub.f32 %v317, %v1111
        %1113 = vmatmul.f32.gmra.mxu0 %v1112
        %v1114 = vpop.f32.mrf.mxu0
        %v1115 = vadd.f32 %v881, %v1114
        %v1116 = vand.u32 %v318, 4294901760
        %v1117 = vsub.f32 %v318, %v1116
        %1118 = vmatmul.f32.gmra.mxu0 %v1117
        %v1119 = vpop.f32.mrf.mxu0
        %v1120 = vadd.f32 %v885, %v1119
        %v1121 = vand.u32 %v319, 4294901760
        %v1122 = vsub.f32 %v319, %v1121
        %1123 = vmatmul.f32.gmra.mxu0 %v1122
        %v1124 = vpop.f32.mrf.mxu0
        %v1125 = vadd.f32 %v889, %v1124
        %v1126 = vand.u32 %v320, 4294901760
        %v1127 = vsub.f32 %v320, %v1126
        %1128 = vmatmul.f32.gmra.mxu0 %v1127
        %v1129 = vpop.f32.mrf.mxu0
        %v1130 = vadd.f32 %v893, %v1129
        %v1131 = vand.u32 %v321, 4294901760
        %v1132 = vsub.f32 %v321, %v1131
        %1133 = vmatmul.f32.gmra.mxu0 %v1132
        %v1134 = vpop.f32.mrf.mxu0
        %v1135 = vadd.f32 %v897, %v1134
        %v1136 = vand.u32 %v322, 4294901760
        %v1137 = vsub.f32 %v322, %v1136
        %1138 = vmatmul.f32.gmra.mxu0 %v1137
        %v1139 = vpop.f32.mrf.mxu0
        %v1140 = vadd.f32 %v901, %v1139
        %v1141 = vand.u32 %v323, 4294901760
        %v1142 = vsub.f32 %v323, %v1141
        %1143 = vmatmul.f32.gmra.mxu0 %v1142
        %v1144 = vpop.f32.mrf.mxu0
        %v1145 = vadd.f32 %v905, %v1144
        %v1146 = vand.u32 %v324, 4294901760
        %v1147 = vsub.f32 %v324, %v1146
        %1148 = vmatmul.f32.gmra.mxu0 %v1147
        %v1149 = vpop.f32.mrf.mxu0
        %v1150 = vadd.f32 %v909, %v1149
        %v1151 = vand.u32 %v325, 4294901760
        %v1152 = vsub.f32 %v325, %v1151
        %1153 = vmatmul.f32.gmra.mxu0 %v1152
        %v1154 = vpop.f32.mrf.mxu0
        %v1155 = vadd.f32 %v913, %v1154
        %v1156 = vand.u32 %v326, 4294901760
        %v1157 = vsub.f32 %v326, %v1156
        %1158 = vmatmul.f32.gmra.mxu0 %v1157
        %v1159 = vpop.f32.mrf.mxu0
        %v1160 = vadd.f32 %v917, %v1159
        %v1161 = vand.u32 %v327, 4294901760
        %v1162 = vsub.f32 %v327, %v1161
        %1163 = vmatmul.f32.gmra.mxu0 %v1162
        %v1164 = vpop.f32.mrf.mxu0
        %v1165 = vadd.f32 %v921, %v1164
        %v1166 = vand.u32 %v328, 4294901760
        %v1167 = vsub.f32 %v328, %v1166
        %1168 = vmatmul.f32.gmra.mxu0 %v1167
        %v1169 = vpop.f32.mrf.mxu0
        %v1170 = vadd.f32 %v925, %v1169
        %v1171 = vand.u32 %v329, 4294901760
        %v1172 = vsub.f32 %v329, %v1171
        %1173 = vmatmul.f32.gmra.mxu0 %v1172
        %v1174 = vpop.f32.mrf.mxu0
        %v1175 = vadd.f32 %v929, %v1174
        %v1176 = vand.u32 %v330, 4294901760
        %v1177 = vsub.f32 %v330, %v1176
        %1178 = vmatmul.f32.gmra.mxu0 %v1177
        %v1179 = vpop.f32.mrf.mxu0
        %v1180 = vadd.f32 %v933, %v1179
        %v1181 = vand.u32 %v331, 4294901760
        %v1182 = vsub.f32 %v331, %v1181
        %1183 = vmatmul.f32.gmra.mxu0 %v1182
        %v1184 = vpop.f32.mrf.mxu0
        %v1185 = vadd.f32 %v937, %v1184
        %v1186 = vand.u32 %v332, 4294901760
        %v1187 = vsub.f32 %v332, %v1186
        %1188 = vmatmul.f32.gmra.mxu0 %v1187
        %v1189 = vpop.f32.mrf.mxu0
        %v1190 = vadd.f32 %v941, %v1189
        %1191 = vdwg.mxu0
        %v1192 = vand.u32 %v284, 4294901760
        %1193 = vmatpush.msra.mxu0 %v1192
        %v1194 = vand.u32 %v283, 4294901760
        %1195 = vmatpush.msra.mxu0 %v1194
        %v1196 = vand.u32 %v282, 4294901760
        %1197 = vmatpush.msra.mxu0 %v1196
        %v1198 = vand.u32 %v281, 4294901760
        %1199 = vmatpush.msra.mxu0 %v1198
        %v1200 = vand.u32 %v280, 4294901760
        %1201 = vmatpush.msra.mxu0 %v1200
        %v1202 = vand.u32 %v279, 4294901760
        %1203 = vmatpush.msra.mxu0 %v1202
        %v1204 = vand.u32 %v278, 4294901760
        %1205 = vmatpush.msra.mxu0 %v1204
        %v1206 = vand.u32 %v277, 4294901760
        %1207 = vmatpush.msra.mxu0 %v1206
        %v1208 = vand.u32 %v276, 4294901760
        %1209 = vmatpush.msra.mxu0 %v1208
        %v1210 = vand.u32 %v275, 4294901760
        %1211 = vmatpush.msra.mxu0 %v1210
        %v1212 = vand.u32 %v274, 4294901760
        %1213 = vmatpush.msra.mxu0 %v1212
        %v1214 = vand.u32 %v273, 4294901760
        %1215 = vmatpush.msra.mxu0 %v1214
        %v1216 = vand.u32 %v272, 4294901760
        %1217 = vmatpush.msra.mxu0 %v1216
        %v1218 = vand.u32 %v271, 4294901760
        %1219 = vmatpush.msra.mxu0 %v1218
        %v1220 = vand.u32 %v270, 4294901760
        %1221 = vmatpush.msra.mxu0 %v1220
        %v1222 = vand.u32 %v269, 4294901760
        %1223 = vmatpush.msra.mxu0 %v1222
        %v1224 = vand.u32 %v287, 4294901760
        %v1225 = vsub.f32 %v287, %v1224
        %v1226 = vand.u32 %v1225, 4294901760
        %1227 = vmatmul.f32.gmra.mxu0 %v1226
        %v1228 = vpop.f32.mrf.mxu0
        %v1229 = vadd.f32 %v995, %v1228
        %v1230 = vand.u32 %v288, 4294901760
        %v1231 = vsub.f32 %v288, %v1230
        %v1232 = vand.u32 %v1231, 4294901760
        %1233 = vmatmul.f32.gmra.mxu0 %v1232
        %v1234 = vpop.f32.mrf.mxu0
        %v1235 = vadd.f32 %v1000, %v1234
        %v1236 = vand.u32 %v290, 4294901760
        %v1237 = vsub.f32 %v290, %v1236
        %v1238 = vand.u32 %v1237, 4294901760
        %1239 = vmatmul.f32.gmra.mxu0 %v1238
        %v1240 = vpop.f32.mrf.mxu0
        %v1241 = vadd.f32 %v1005, %v1240
        %v1242 = vand.u32 %v291, 4294901760
        %v1243 = vsub.f32 %v291, %v1242
        %v1244 = vand.u32 %v1243, 4294901760
        %1245 = vmatmul.f32.gmra.mxu0 %v1244
        %v1246 = vpop.f32.mrf.mxu0
        %v1247 = vadd.f32 %v1010, %v1246
        %v1248 = vand.u32 %v293, 4294901760
        %v1249 = vsub.f32 %v293, %v1248
        %v1250 = vand.u32 %v1249, 4294901760
        %1251 = vmatmul.f32.gmra.mxu0 %v1250
        %v1252 = vpop.f32.mrf.mxu0
        %v1253 = vadd.f32 %v1015, %v1252
        %v1254 = vand.u32 %v294, 4294901760
        %v1255 = vsub.f32 %v294, %v1254
        %v1256 = vand.u32 %v1255, 4294901760
        %1257 = vmatmul.f32.gmra.mxu0 %v1256
        %v1258 = vpop.f32.mrf.mxu0
        %v1259 = vadd.f32 %v1020, %v1258
        %v1260 = vand.u32 %v296, 4294901760
        %v1261 = vsub.f32 %v296, %v1260
        %v1262 = vand.u32 %v1261, 4294901760
        %1263 = vmatmul.f32.gmra.mxu0 %v1262
        %v1264 = vpop.f32.mrf.mxu0
        %v1265 = vadd.f32 %v1025, %v1264
        %v1266 = vand.u32 %v297, 4294901760
        %v1267 = vsub.f32 %v297, %v1266
        %v1268 = vand.u32 %v1267, 4294901760
        %1269 = vmatmul.f32.gmra.mxu0 %v1268
        %v1270 = vpop.f32.mrf.mxu0
        %v1271 = vadd.f32 %v1030, %v1270
        %v1272 = vand.u32 %v298, 4294901760
        %v1273 = vsub.f32 %v298, %v1272
        %v1274 = vand.u32 %v1273, 4294901760
        %1275 = vmatmul.f32.gmra.mxu0 %v1274
        %v1276 = vpop.f32.mrf.mxu0
        %v1277 = vadd.f32 %v1035, %v1276
        %v1278 = vand.u32 %v299, 4294901760
        %v1279 = vsub.f32 %v299, %v1278
        %v1280 = vand.u32 %v1279, 4294901760
        %1281 = vmatmul.f32.gmra.mxu0 %v1280
        %v1282 = vpop.f32.mrf.mxu0
        %v1283 = vadd.f32 %v1040, %v1282
        %v1284 = vand.u32 %v301, 4294901760
        %v1285 = vsub.f32 %v301, %v1284
        %v1286 = vand.u32 %v1285, 4294901760
        %1287 = vmatmul.f32.gmra.mxu0 %v1286
        %v1288 = vpop.f32.mrf.mxu0
        %v1289 = vadd.f32 %v1045, %v1288
        %v1290 = vand.u32 %v302, 4294901760
        %v1291 = vsub.f32 %v302, %v1290
        %v1292 = vand.u32 %v1291, 4294901760
        %1293 = vmatmul.f32.gmra.mxu0 %v1292
        %v1294 = vpop.f32.mrf.mxu0
        %v1295 = vadd.f32 %v1050, %v1294
        %v1296 = vand.u32 %v304, 4294901760
        %v1297 = vsub.f32 %v304, %v1296
        %v1298 = vand.u32 %v1297, 4294901760
        %1299 = vmatmul.f32.gmra.mxu0 %v1298
        %v1300 = vpop.f32.mrf.mxu0
        %v1301 = vadd.f32 %v1055, %v1300
        %v1302 = vand.u32 %v305, 4294901760
        %v1303 = vsub.f32 %v305, %v1302
        %v1304 = vand.u32 %v1303, 4294901760
        %1305 = vmatmul.f32.gmra.mxu0 %v1304
        %v1306 = vpop.f32.mrf.mxu0
        %v1307 = vadd.f32 %v1060, %v1306
        %v1308 = vand.u32 %v307, 4294901760
        %v1309 = vsub.f32 %v307, %v1308
        %v1310 = vand.u32 %v1309, 4294901760
        %1311 = vmatmul.f32.gmra.mxu0 %v1310
        %v1312 = vpop.f32.mrf.mxu0
        %v1313 = vadd.f32 %v1065, %v1312
        %v1314 = vand.u32 %v308, 4294901760
        %v1315 = vsub.f32 %v308, %v1314
        %v1316 = vand.u32 %v1315, 4294901760
        %1317 = vmatmul.f32.gmra.mxu0 %v1316
        %v1318 = vpop.f32.mrf.mxu0
        %v1319 = vadd.f32 %v1070, %v1318
        %v1320 = vand.u32 %v309, 4294901760
        %v1321 = vsub.f32 %v309, %v1320
        %v1322 = vand.u32 %v1321, 4294901760
        %1323 = vmatmul.f32.gmra.mxu0 %v1322
        %v1324 = vpop.f32.mrf.mxu0
        %v1325 = vadd.f32 %v1075, %v1324
        %v1326 = vand.u32 %v310, 4294901760
        %v1327 = vsub.f32 %v310, %v1326
        %v1328 = vand.u32 %v1327, 4294901760
        %1329 = vmatmul.f32.gmra.mxu0 %v1328
        %v1330 = vpop.f32.mrf.mxu0
        %v1331 = vadd.f32 %v1080, %v1330
        %v1332 = vand.u32 %v311, 4294901760
        %v1333 = vsub.f32 %v311, %v1332
        %v1334 = vand.u32 %v1333, 4294901760
        %1335 = vmatmul.f32.gmra.mxu0 %v1334
        %v1336 = vpop.f32.mrf.mxu0
        %v1337 = vadd.f32 %v1085, %v1336
        %v1338 = vand.u32 %v312, 4294901760
        %v1339 = vsub.f32 %v312, %v1338
        %v1340 = vand.u32 %v1339, 4294901760
        %1341 = vmatmul.f32.gmra.mxu0 %v1340
        %v1342 = vpop.f32.mrf.mxu0
        %v1343 = vadd.f32 %v1090, %v1342
        %v1344 = vand.u32 %v313, 4294901760
        %v1345 = vsub.f32 %v313, %v1344
        %v1346 = vand.u32 %v1345, 4294901760
        %1347 = vmatmul.f32.gmra.mxu0 %v1346
        %v1348 = vpop.f32.mrf.mxu0
        %v1349 = vadd.f32 %v1095, %v1348
        %v1350 = vand.u32 %v314, 4294901760
        %v1351 = vsub.f32 %v314, %v1350
        %v1352 = vand.u32 %v1351, 4294901760
        %1353 = vmatmul.f32.gmra.mxu0 %v1352
        %v1354 = vpop.f32.mrf.mxu0
        %v1355 = vadd.f32 %v1100, %v1354
        %v1356 = vand.u32 %v315, 4294901760
        %v1357 = vsub.f32 %v315, %v1356
        %v1358 = vand.u32 %v1357, 4294901760
        %1359 = vmatmul.f32.gmra.mxu0 %v1358
        %v1360 = vpop.f32.mrf.mxu0
        %v1361 = vadd.f32 %v1105, %v1360
        %v1362 = vand.u32 %v316, 4294901760
        %v1363 = vsub.f32 %v316, %v1362
        %v1364 = vand.u32 %v1363, 4294901760
        %1365 = vmatmul.f32.gmra.mxu0 %v1364
        %v1366 = vpop.f32.mrf.mxu0
        %v1367 = vadd.f32 %v1110, %v1366
        %v1368 = vand.u32 %v317, 4294901760
        %v1369 = vsub.f32 %v317, %v1368
        %v1370 = vand.u32 %v1369, 4294901760
        %1371 = vmatmul.f32.gmra.mxu0 %v1370
        %v1372 = vpop.f32.mrf.mxu0
        %v1373 = vadd.f32 %v1115, %v1372
        %v1374 = vand.u32 %v318, 4294901760
        %v1375 = vsub.f32 %v318, %v1374
        %v1376 = vand.u32 %v1375, 4294901760
        %1377 = vmatmul.f32.gmra.mxu0 %v1376
        %v1378 = vpop.f32.mrf.mxu0
        %v1379 = vadd.f32 %v1120, %v1378
        %v1380 = vand.u32 %v319, 4294901760
        %v1381 = vsub.f32 %v319, %v1380
        %v1382 = vand.u32 %v1381, 4294901760
        %1383 = vmatmul.f32.gmra.mxu0 %v1382
        %v1384 = vpop.f32.mrf.mxu0
        %v1385 = vadd.f32 %v1125, %v1384
        %v1386 = vand.u32 %v320, 4294901760
        %v1387 = vsub.f32 %v320, %v1386
        %v1388 = vand.u32 %v1387, 4294901760
        %1389 = vmatmul.f32.gmra.mxu0 %v1388
        %v1390 = vpop.f32.mrf.mxu0
        %v1391 = vadd.f32 %v1130, %v1390
        %v1392 = vand.u32 %v321, 4294901760
        %v1393 = vsub.f32 %v321, %v1392
        %v1394 = vand.u32 %v1393, 4294901760
        %1395 = vmatmul.f32.gmra.mxu0 %v1394
        %v1396 = vpop.f32.mrf.mxu0
        %v1397 = vadd.f32 %v1135, %v1396
        %v1398 = vand.u32 %v322, 4294901760
        %v1399 = vsub.f32 %v322, %v1398
        %v1400 = vand.u32 %v1399, 4294901760
        %1401 = vmatmul.f32.gmra.mxu0 %v1400
        %v1402 = vpop.f32.mrf.mxu0
        %v1403 = vadd.f32 %v1140, %v1402
        %v1404 = vand.u32 %v323, 4294901760
        %v1405 = vsub.f32 %v323, %v1404
        %v1406 = vand.u32 %v1405, 4294901760
        %1407 = vmatmul.f32.gmra.mxu0 %v1406
        %v1408 = vpop.f32.mrf.mxu0
        %v1409 = vadd.f32 %v1145, %v1408
        %v1410 = vand.u32 %v324, 4294901760
        %v1411 = vsub.f32 %v324, %v1410
        %v1412 = vand.u32 %v1411, 4294901760
        %1413 = vmatmul.f32.gmra.mxu0 %v1412
        %v1414 = vpop.f32.mrf.mxu0
        %v1415 = vadd.f32 %v1150, %v1414
        %v1416 = vand.u32 %v325, 4294901760
        %v1417 = vsub.f32 %v325, %v1416
        %v1418 = vand.u32 %v1417, 4294901760
        %1419 = vmatmul.f32.gmra.mxu0 %v1418
        %v1420 = vpop.f32.mrf.mxu0
        %v1421 = vadd.f32 %v1155, %v1420
        %v1422 = vand.u32 %v326, 4294901760
        %v1423 = vsub.f32 %v326, %v1422
        %v1424 = vand.u32 %v1423, 4294901760
        %1425 = vmatmul.f32.gmra.mxu0 %v1424
        %v1426 = vpop.f32.mrf.mxu0
        %v1427 = vadd.f32 %v1160, %v1426
        %v1428 = vand.u32 %v327, 4294901760
        %v1429 = vsub.f32 %v327, %v1428
        %v1430 = vand.u32 %v1429, 4294901760
        %1431 = vmatmul.f32.gmra.mxu0 %v1430
        %v1432 = vpop.f32.mrf.mxu0
        %v1433 = vadd.f32 %v1165, %v1432
        %v1434 = vand.u32 %v328, 4294901760
        %v1435 = vsub.f32 %v328, %v1434
        %v1436 = vand.u32 %v1435, 4294901760
        %1437 = vmatmul.f32.gmra.mxu0 %v1436
        %v1438 = vpop.f32.mrf.mxu0
        %v1439 = vadd.f32 %v1170, %v1438
        %v1440 = vand.u32 %v329, 4294901760
        %v1441 = vsub.f32 %v329, %v1440
        %v1442 = vand.u32 %v1441, 4294901760
        %1443 = vmatmul.f32.gmra.mxu0 %v1442
        %v1444 = vpop.f32.mrf.mxu0
        %v1445 = vadd.f32 %v1175, %v1444
        %v1446 = vand.u32 %v330, 4294901760
        %v1447 = vsub.f32 %v330, %v1446
        %v1448 = vand.u32 %v1447, 4294901760
        %1449 = vmatmul.f32.gmra.mxu0 %v1448
        %v1450 = vpop.f32.mrf.mxu0
        %v1451 = vadd.f32 %v1180, %v1450
        %v1452 = vand.u32 %v331, 4294901760
        %v1453 = vsub.f32 %v331, %v1452
        %v1454 = vand.u32 %v1453, 4294901760
        %1455 = vmatmul.f32.gmra.mxu0 %v1454
        %v1456 = vpop.f32.mrf.mxu0
        %v1457 = vadd.f32 %v1185, %v1456
        %v1458 = vand.u32 %v332, 4294901760
        %v1459 = vsub.f32 %v332, %v1458
        %v1460 = vand.u32 %v1459, 4294901760
        %1461 = vmatmul.f32.gmra.mxu0 %v1460
        %v1462 = vpop.f32.mrf.mxu0
        %v1463 = vadd.f32 %v1190, %v1462
        %1464 = vdwg.mxu0
        %v1465 = vand.u32 %v284, 4294901760
        %v1466 = vsub.f32 %v284, %v1465
        %v1467 = vand.u32 %v1466, 4294901760
        %1468 = vmatpush.msra.mxu0 %v1467
        %v1469 = vand.u32 %v283, 4294901760
        %v1470 = vsub.f32 %v283, %v1469
        %v1471 = vand.u32 %v1470, 4294901760
        %1472 = vmatpush.msra.mxu0 %v1471
        %v1473 = vand.u32 %v282, 4294901760
        %v1474 = vsub.f32 %v282, %v1473
        %v1475 = vand.u32 %v1474, 4294901760
        %1476 = vmatpush.msra.mxu0 %v1475
        %v1477 = vand.u32 %v281, 4294901760
        %v1478 = vsub.f32 %v281, %v1477
        %v1479 = vand.u32 %v1478, 4294901760
        %1480 = vmatpush.msra.mxu0 %v1479
        %v1481 = vand.u32 %v280, 4294901760
        %v1482 = vsub.f32 %v280, %v1481
        %v1483 = vand.u32 %v1482, 4294901760
        %1484 = vmatpush.msra.mxu0 %v1483
        %v1485 = vand.u32 %v279, 4294901760
        %v1486 = vsub.f32 %v279, %v1485
        %v1487 = vand.u32 %v1486, 4294901760
        %1488 = vmatpush.msra.mxu0 %v1487
        %v1489 = vand.u32 %v278, 4294901760
        %v1490 = vsub.f32 %v278, %v1489
        %v1491 = vand.u32 %v1490, 4294901760
        %1492 = vmatpush.msra.mxu0 %v1491
        %v1493 = vand.u32 %v277, 4294901760
        %v1494 = vsub.f32 %v277, %v1493
        %v1495 = vand.u32 %v1494, 4294901760
        %1496 = vmatpush.msra.mxu0 %v1495
        %v1497 = vand.u32 %v276, 4294901760
        %v1498 = vsub.f32 %v276, %v1497
        %v1499 = vand.u32 %v1498, 4294901760
        %1500 = vmatpush.msra.mxu0 %v1499
        %v1501 = vand.u32 %v275, 4294901760
        %v1502 = vsub.f32 %v275, %v1501
        %v1503 = vand.u32 %v1502, 4294901760
        %1504 = vmatpush.msra.mxu0 %v1503
        %v1505 = vand.u32 %v274, 4294901760
        %v1506 = vsub.f32 %v274, %v1505
        %v1507 = vand.u32 %v1506, 4294901760
        %1508 = vmatpush.msra.mxu0 %v1507
        %v1509 = vand.u32 %v273, 4294901760
        %v1510 = vsub.f32 %v273, %v1509
        %v1511 = vand.u32 %v1510, 4294901760
        %1512 = vmatpush.msra.mxu0 %v1511
        %v1513 = vand.u32 %v272, 4294901760
        %v1514 = vsub.f32 %v272, %v1513
        %v1515 = vand.u32 %v1514, 4294901760
        %1516 = vmatpush.msra.mxu0 %v1515
        %v1517 = vand.u32 %v271, 4294901760
        %v1518 = vsub.f32 %v271, %v1517
        %v1519 = vand.u32 %v1518, 4294901760
        %1520 = vmatpush.msra.mxu0 %v1519
        %v1521 = vand.u32 %v270, 4294901760
        %v1522 = vsub.f32 %v270, %v1521
        %v1523 = vand.u32 %v1522, 4294901760
        %1524 = vmatpush.msra.mxu0 %v1523
        %v1525 = vand.u32 %v269, 4294901760
        %v1526 = vsub.f32 %v269, %v1525
        %v1527 = vand.u32 %v1526, 4294901760
        %1528 = vmatpush.msra.mxu0 %v1527
        %v1529 = vand.u32 %v287, 4294901760
        %1530 = vmatmul.f32.gmra.mxu0 %v1529
        %v1531 = vpop.f32.mrf.mxu0
        %v1532 = vadd.f32 %v1229, %v1531
        %v1533 = vand.u32 %v288, 4294901760
        %1534 = vmatmul.f32.gmra.mxu0 %v1533
        %v1535 = vpop.f32.mrf.mxu0
        %v1536 = vadd.f32 %v1235, %v1535
        %v1537 = vand.u32 %v290, 4294901760
        %1538 = vmatmul.f32.gmra.mxu0 %v1537
        %v1539 = vpop.f32.mrf.mxu0
        %v1540 = vadd.f32 %v1241, %v1539
        %v1541 = vand.u32 %v291, 4294901760
        %1542 = vmatmul.f32.gmra.mxu0 %v1541
        %v1543 = vpop.f32.mrf.mxu0
        %v1544 = vadd.f32 %v1247, %v1543
        %v1545 = vand.u32 %v293, 4294901760
        %1546 = vmatmul.f32.gmra.mxu0 %v1545
        %v1547 = vpop.f32.mrf.mxu0
        %v1548 = vadd.f32 %v1253, %v1547
        %v1549 = vand.u32 %v294, 4294901760
        %1550 = vmatmul.f32.gmra.mxu0 %v1549
        %v1551 = vpop.f32.mrf.mxu0
        %v1552 = vadd.f32 %v1259, %v1551
        %v1553 = vand.u32 %v296, 4294901760
        %1554 = vmatmul.f32.gmra.mxu0 %v1553
        %v1555 = vpop.f32.mrf.mxu0
        %v1556 = vadd.f32 %v1265, %v1555
        %v1557 = vand.u32 %v297, 4294901760
        %1558 = vmatmul.f32.gmra.mxu0 %v1557
        %v1559 = vpop.f32.mrf.mxu0
        %v1560 = vadd.f32 %v1271, %v1559
        %v1561 = vand.u32 %v298, 4294901760
        %1562 = vmatmul.f32.gmra.mxu0 %v1561
        %v1563 = vpop.f32.mrf.mxu0
        %v1564 = vadd.f32 %v1277, %v1563
        %v1565 = vand.u32 %v299, 4294901760
        %1566 = vmatmul.f32.gmra.mxu0 %v1565
        %v1567 = vpop.f32.mrf.mxu0
        %v1568 = vadd.f32 %v1283, %v1567
        %v1569 = vand.u32 %v301, 4294901760
        %1570 = vmatmul.f32.gmra.mxu0 %v1569
        %v1571 = vpop.f32.mrf.mxu0
        %v1572 = vadd.f32 %v1289, %v1571
        %v1573 = vand.u32 %v302, 4294901760
        %1574 = vmatmul.f32.gmra.mxu0 %v1573
        %v1575 = vpop.f32.mrf.mxu0
        %v1576 = vadd.f32 %v1295, %v1575
        %v1577 = vand.u32 %v304, 4294901760
        %1578 = vmatmul.f32.gmra.mxu0 %v1577
        %v1579 = vpop.f32.mrf.mxu0
        %v1580 = vadd.f32 %v1301, %v1579
        %v1581 = vand.u32 %v305, 4294901760
        %1582 = vmatmul.f32.gmra.mxu0 %v1581
        %v1583 = vpop.f32.mrf.mxu0
        %v1584 = vadd.f32 %v1307, %v1583
        %v1585 = vand.u32 %v307, 4294901760
        %1586 = vmatmul.f32.gmra.mxu0 %v1585
        %v1587 = vpop.f32.mrf.mxu0
        %v1588 = vadd.f32 %v1313, %v1587
        %v1589 = vand.u32 %v308, 4294901760
        %1590 = vmatmul.f32.gmra.mxu0 %v1589
        %v1591 = vpop.f32.mrf.mxu0
        %v1592 = vadd.f32 %v1319, %v1591
        %v1593 = vand.u32 %v309, 4294901760
        %1594 = vmatmul.f32.gmra.mxu0 %v1593
        %v1595 = vpop.f32.mrf.mxu0
        %v1596 = vadd.f32 %v1325, %v1595
        %v1597 = vand.u32 %v310, 4294901760
        %1598 = vmatmul.f32.gmra.mxu0 %v1597
        %v1599 = vpop.f32.mrf.mxu0
        %v1600 = vadd.f32 %v1331, %v1599
        %v1601 = vand.u32 %v311, 4294901760
        %1602 = vmatmul.f32.gmra.mxu0 %v1601
        %v1603 = vpop.f32.mrf.mxu0
        %v1604 = vadd.f32 %v1337, %v1603
        %v1605 = vand.u32 %v312, 4294901760
        %1606 = vmatmul.f32.gmra.mxu0 %v1605
        %v1607 = vpop.f32.mrf.mxu0
        %v1608 = vadd.f32 %v1343, %v1607
        %v1609 = vand.u32 %v313, 4294901760
        %1610 = vmatmul.f32.gmra.mxu0 %v1609
        %v1611 = vpop.f32.mrf.mxu0
        %v1612 = vadd.f32 %v1349, %v1611
        %v1613 = vand.u32 %v314, 4294901760
        %1614 = vmatmul.f32.gmra.mxu0 %v1613
        %v1615 = vpop.f32.mrf.mxu0
        %v1616 = vadd.f32 %v1355, %v1615
        %v1617 = vand.u32 %v315, 4294901760
        %1618 = vmatmul.f32.gmra.mxu0 %v1617
        %v1619 = vpop.f32.mrf.mxu0
        %v1620 = vadd.f32 %v1361, %v1619
        %v1621 = vand.u32 %v316, 4294901760
        %1622 = vmatmul.f32.gmra.mxu0 %v1621
        %v1623 = vpop.f32.mrf.mxu0
        %v1624 = vadd.f32 %v1367, %v1623
        %v1625 = vand.u32 %v317, 4294901760
        %1626 = vmatmul.f32.gmra.mxu0 %v1625
        %v1627 = vpop.f32.mrf.mxu0
        %v1628 = vadd.f32 %v1373, %v1627
        %v1629 = vand.u32 %v318, 4294901760
        %1630 = vmatmul.f32.gmra.mxu0 %v1629
        %v1631 = vpop.f32.mrf.mxu0
        %v1632 = vadd.f32 %v1379, %v1631
        %v1633 = vand.u32 %v319, 4294901760
        %1634 = vmatmul.f32.gmra.mxu0 %v1633
        %v1635 = vpop.f32.mrf.mxu0
        %v1636 = vadd.f32 %v1385, %v1635
        %v1637 = vand.u32 %v320, 4294901760
        %1638 = vmatmul.f32.gmra.mxu0 %v1637
        %v1639 = vpop.f32.mrf.mxu0
        %v1640 = vadd.f32 %v1391, %v1639
        %v1641 = vand.u32 %v321, 4294901760
        %1642 = vmatmul.f32.gmra.mxu0 %v1641
        %v1643 = vpop.f32.mrf.mxu0
        %v1644 = vadd.f32 %v1397, %v1643
        %v1645 = vand.u32 %v322, 4294901760
        %1646 = vmatmul.f32.gmra.mxu0 %v1645
        %v1647 = vpop.f32.mrf.mxu0
        %v1648 = vadd.f32 %v1403, %v1647
        %v1649 = vand.u32 %v323, 4294901760
        %1650 = vmatmul.f32.gmra.mxu0 %v1649
        %v1651 = vpop.f32.mrf.mxu0
        %v1652 = vadd.f32 %v1409, %v1651
        %v1653 = vand.u32 %v324, 4294901760
        %1654 = vmatmul.f32.gmra.mxu0 %v1653
        %v1655 = vpop.f32.mrf.mxu0
        %v1656 = vadd.f32 %v1415, %v1655
        %v1657 = vand.u32 %v325, 4294901760
        %1658 = vmatmul.f32.gmra.mxu0 %v1657
        %v1659 = vpop.f32.mrf.mxu0
        %v1660 = vadd.f32 %v1421, %v1659
        %v1661 = vand.u32 %v326, 4294901760
        %1662 = vmatmul.f32.gmra.mxu0 %v1661
        %v1663 = vpop.f32.mrf.mxu0
        %v1664 = vadd.f32 %v1427, %v1663
        %v1665 = vand.u32 %v327, 4294901760
        %1666 = vmatmul.f32.gmra.mxu0 %v1665
        %v1667 = vpop.f32.mrf.mxu0
        %v1668 = vadd.f32 %v1433, %v1667
        %v1669 = vand.u32 %v328, 4294901760
        %1670 = vmatmul.f32.gmra.mxu0 %v1669
        %v1671 = vpop.f32.mrf.mxu0
        %v1672 = vadd.f32 %v1439, %v1671
        %v1673 = vand.u32 %v329, 4294901760
        %1674 = vmatmul.f32.gmra.mxu0 %v1673
        %v1675 = vpop.f32.mrf.mxu0
        %v1676 = vadd.f32 %v1445, %v1675
        %v1677 = vand.u32 %v330, 4294901760
        %1678 = vmatmul.f32.gmra.mxu0 %v1677
        %v1679 = vpop.f32.mrf.mxu0
        %v1680 = vadd.f32 %v1451, %v1679
        %v1681 = vand.u32 %v331, 4294901760
        %1682 = vmatmul.f32.gmra.mxu0 %v1681
        %v1683 = vpop.f32.mrf.mxu0
        %v1684 = vadd.f32 %v1457, %v1683
        %v1685 = vand.u32 %v332, 4294901760
        %1686 = vmatmul.f32.gmra.mxu0 %v1685
        %v1687 = vpop.f32.mrf.mxu0
        %v1688 = vadd.f32 %v1463, %v1687
        %1689 = vdwg.mxu0
        %v1690 = vand.u32 %v284, 4294901760
        %1691 = vmatpush.msra.mxu0 %v1690
        %v1692 = vand.u32 %v283, 4294901760
        %1693 = vmatpush.msra.mxu0 %v1692
        %v1694 = vand.u32 %v282, 4294901760
        %1695 = vmatpush.msra.mxu0 %v1694
        %v1696 = vand.u32 %v281, 4294901760
        %1697 = vmatpush.msra.mxu0 %v1696
        %v1698 = vand.u32 %v280, 4294901760
        %1699 = vmatpush.msra.mxu0 %v1698
        %v1700 = vand.u32 %v279, 4294901760
        %1701 = vmatpush.msra.mxu0 %v1700
        %v1702 = vand.u32 %v278, 4294901760
        %1703 = vmatpush.msra.mxu0 %v1702
        %v1704 = vand.u32 %v277, 4294901760
        %1705 = vmatpush.msra.mxu0 %v1704
        %v1706 = vand.u32 %v276, 4294901760
        %1707 = vmatpush.msra.mxu0 %v1706
        %v1708 = vand.u32 %v275, 4294901760
        %1709 = vmatpush.msra.mxu0 %v1708
        %v1710 = vand.u32 %v274, 4294901760
        %1711 = vmatpush.msra.mxu0 %v1710
        %v1712 = vand.u32 %v273, 4294901760
        %1713 = vmatpush.msra.mxu0 %v1712
        %v1714 = vand.u32 %v272, 4294901760
        %1715 = vmatpush.msra.mxu0 %v1714
        %v1716 = vand.u32 %v271, 4294901760
        %1717 = vmatpush.msra.mxu0 %v1716
        %v1718 = vand.u32 %v270, 4294901760
        %1719 = vmatpush.msra.mxu0 %v1718
        %v1720 = vand.u32 %v269, 4294901760
        %1721 = vmatpush.msra.mxu0 %v1720
        %v1722 = vand.u32 %v287, 4294901760
        %1723 = vmatmul.f32.gmra.mxu0 %v1722
        %v1724 = vpop.f32.mrf.mxu0
        %v1725 = vadd.f32 %v1532, %v1724
        %v1726 = vand.u32 %v288, 4294901760
        %1727 = vmatmul.f32.gmra.mxu0 %v1726
        %v1728 = vpop.f32.mrf.mxu0
        %v1729 = vadd.f32 %v1536, %v1728
        %v1730 = vand.u32 %v290, 4294901760
        %1731 = vmatmul.f32.gmra.mxu0 %v1730
        %v1732 = vpop.f32.mrf.mxu0
        %v1733 = vadd.f32 %v1540, %v1732
        %v1734 = vand.u32 %v291, 4294901760
        %1735 = vmatmul.f32.gmra.mxu0 %v1734
        %v1736 = vpop.f32.mrf.mxu0
        %v1737 = vadd.f32 %v1544, %v1736
        %v1738 = vand.u32 %v293, 4294901760
        %1739 = vmatmul.f32.gmra.mxu0 %v1738
        %v1740 = vpop.f32.mrf.mxu0
        %v1741 = vadd.f32 %v1548, %v1740
        %v1742 = vand.u32 %v294, 4294901760
        %1743 = vmatmul.f32.gmra.mxu0 %v1742
        %v1744 = vpop.f32.mrf.mxu0
        %v1745 = vadd.f32 %v1552, %v1744
        %v1746 = vand.u32 %v296, 4294901760
        %1747 = vmatmul.f32.gmra.mxu0 %v1746
        %v1748 = vpop.f32.mrf.mxu0
        %v1749 = vadd.f32 %v1556, %v1748
        %v1750 = vand.u32 %v297, 4294901760
        %1751 = vmatmul.f32.gmra.mxu0 %v1750
        %v1752 = vpop.f32.mrf.mxu0
        %v1753 = vadd.f32 %v1560, %v1752
        %v1754 = vand.u32 %v298, 4294901760
        %1755 = vmatmul.f32.gmra.mxu0 %v1754
        %v1756 = vpop.f32.mrf.mxu0
        %v1757 = vadd.f32 %v1564, %v1756
        %v1758 = vand.u32 %v299, 4294901760
        %1759 = vmatmul.f32.gmra.mxu0 %v1758
        %v1760 = vpop.f32.mrf.mxu0
        %v1761 = vadd.f32 %v1568, %v1760
        %v1762 = vand.u32 %v301, 4294901760
        %1763 = vmatmul.f32.gmra.mxu0 %v1762
        %v1764 = vpop.f32.mrf.mxu0
        %v1765 = vadd.f32 %v1572, %v1764
        %v1766 = vand.u32 %v302, 4294901760
        %1767 = vmatmul.f32.gmra.mxu0 %v1766
        %v1768 = vpop.f32.mrf.mxu0
        %v1769 = vadd.f32 %v1576, %v1768
        %v1770 = vand.u32 %v304, 4294901760
        %1771 = vmatmul.f32.gmra.mxu0 %v1770
        %v1772 = vpop.f32.mrf.mxu0
        %v1773 = vadd.f32 %v1580, %v1772
        %v1774 = vand.u32 %v305, 4294901760
        %1775 = vmatmul.f32.gmra.mxu0 %v1774
        %v1776 = vpop.f32.mrf.mxu0
        %v1777 = vadd.f32 %v1584, %v1776
        %v1778 = vand.u32 %v307, 4294901760
        %1779 = vmatmul.f32.gmra.mxu0 %v1778
        %v1780 = vpop.f32.mrf.mxu0
        %v1781 = vadd.f32 %v1588, %v1780
        %v1782 = vand.u32 %v308, 4294901760
        %1783 = vmatmul.f32.gmra.mxu0 %v1782
        %v1784 = vpop.f32.mrf.mxu0
        %v1785 = vadd.f32 %v1592, %v1784
        %v1786 = vand.u32 %v309, 4294901760
        %1787 = vmatmul.f32.gmra.mxu0 %v1786
        %v1788 = vpop.f32.mrf.mxu0
        %v1789 = vadd.f32 %v1596, %v1788
        %v1790 = vand.u32 %v310, 4294901760
        %1791 = vmatmul.f32.gmra.mxu0 %v1790
        %v1792 = vpop.f32.mrf.mxu0
        %v1793 = vadd.f32 %v1600, %v1792
        %v1794 = vand.u32 %v311, 4294901760
        %1795 = vmatmul.f32.gmra.mxu0 %v1794
        %v1796 = vpop.f32.mrf.mxu0
        %v1797 = vadd.f32 %v1604, %v1796
        %v1798 = vand.u32 %v312, 4294901760
        %1799 = vmatmul.f32.gmra.mxu0 %v1798
        %v1800 = vpop.f32.mrf.mxu0
        %v1801 = vadd.f32 %v1608, %v1800
        %v1802 = vand.u32 %v313, 4294901760
        %1803 = vmatmul.f32.gmra.mxu0 %v1802
        %v1804 = vpop.f32.mrf.mxu0
        %v1805 = vadd.f32 %v1612, %v1804
        %v1806 = vand.u32 %v314, 4294901760
        %1807 = vmatmul.f32.gmra.mxu0 %v1806
        %v1808 = vpop.f32.mrf.mxu0
        %v1809 = vadd.f32 %v1616, %v1808
        %v1810 = vand.u32 %v315, 4294901760
        %1811 = vmatmul.f32.gmra.mxu0 %v1810
        %v1812 = vpop.f32.mrf.mxu0
        %v1813 = vadd.f32 %v1620, %v1812
        %v1814 = vand.u32 %v316, 4294901760
        %1815 = vmatmul.f32.gmra.mxu0 %v1814
        %v1816 = vpop.f32.mrf.mxu0
        %v1817 = vadd.f32 %v1624, %v1816
        %v1818 = vand.u32 %v317, 4294901760
        %1819 = vmatmul.f32.gmra.mxu0 %v1818
        %v1820 = vpop.f32.mrf.mxu0
        %v1821 = vadd.f32 %v1628, %v1820
        %v1822 = vand.u32 %v318, 4294901760
        %1823 = vmatmul.f32.gmra.mxu0 %v1822
        %v1824 = vpop.f32.mrf.mxu0
        %v1825 = vadd.f32 %v1632, %v1824
        %v1826 = vand.u32 %v319, 4294901760
        %1827 = vmatmul.f32.gmra.mxu0 %v1826
        %v1828 = vpop.f32.mrf.mxu0
        %v1829 = vadd.f32 %v1636, %v1828
        %v1830 = vand.u32 %v320, 4294901760
        %1831 = vmatmul.f32.gmra.mxu0 %v1830
        %v1832 = vpop.f32.mrf.mxu0
        %v1833 = vadd.f32 %v1640, %v1832
        %v1834 = vand.u32 %v321, 4294901760
        %1835 = vmatmul.f32.gmra.mxu0 %v1834
        %v1836 = vpop.f32.mrf.mxu0
        %v1837 = vadd.f32 %v1644, %v1836
        %v1838 = vand.u32 %v322, 4294901760
        %1839 = vmatmul.f32.gmra.mxu0 %v1838
        %v1840 = vpop.f32.mrf.mxu0
        %v1841 = vadd.f32 %v1648, %v1840
        %v1842 = vand.u32 %v323, 4294901760
        %1843 = vmatmul.f32.gmra.mxu0 %v1842
        %v1844 = vpop.f32.mrf.mxu0
        %v1845 = vadd.f32 %v1652, %v1844
        %v1846 = vand.u32 %v324, 4294901760
        %1847 = vmatmul.f32.gmra.mxu0 %v1846
        %v1848 = vpop.f32.mrf.mxu0
        %v1849 = vadd.f32 %v1656, %v1848
        %v1850 = vand.u32 %v325, 4294901760
        %1851 = vmatmul.f32.gmra.mxu0 %v1850
        %v1852 = vpop.f32.mrf.mxu0
        %v1853 = vadd.f32 %v1660, %v1852
        %v1854 = vand.u32 %v326, 4294901760
        %1855 = vmatmul.f32.gmra.mxu0 %v1854
        %v1856 = vpop.f32.mrf.mxu0
        %v1857 = vadd.f32 %v1664, %v1856
        %v1858 = vand.u32 %v327, 4294901760
        %1859 = vmatmul.f32.gmra.mxu0 %v1858
        %v1860 = vpop.f32.mrf.mxu0
        %v1861 = vadd.f32 %v1668, %v1860
        %v1862 = vand.u32 %v328, 4294901760
        %1863 = vmatmul.f32.gmra.mxu0 %v1862
        %v1864 = vpop.f32.mrf.mxu0
        %v1865 = vadd.f32 %v1672, %v1864
        %v1866 = vand.u32 %v329, 4294901760
        %1867 = vmatmul.f32.gmra.mxu0 %v1866
        %v1868 = vpop.f32.mrf.mxu0
        %v1869 = vadd.f32 %v1676, %v1868
        %v1870 = vand.u32 %v330, 4294901760
        %1871 = vmatmul.f32.gmra.mxu0 %v1870
        %v1872 = vpop.f32.mrf.mxu0
        %v1873 = vadd.f32 %v1680, %v1872
        %v1874 = vand.u32 %v331, 4294901760
        %1875 = vmatmul.f32.gmra.mxu0 %v1874
        %v1876 = vpop.f32.mrf.mxu0
        %v1877 = vadd.f32 %v1684, %v1876
        %v1878 = vand.u32 %v332, 4294901760
        %1879 = vmatmul.f32.gmra.mxu0 %v1878
        %v1880 = vpop.f32.mrf.mxu0
        %v1881 = vadd.f32 %v1688, %v1880
        %1882 = vdwg.mxu0
        %v1884 = vsel %vm244, %v285, 0
        %v1887 = vsel %vm244, %v286, 0
        %1889 = vmatpush.msra.mxu0 0.0
        %1890 = vmatpush.msra.mxu0 0.0
        %1891 = vmatpush.msra.mxu0 0.0
        %1892 = vmatpush.msra.mxu0 0.0
        %1893 = vmatpush.msra.mxu0 0.0
        %1894 = vmatpush.msra.mxu0 0.0
        %1895 = vmatpush.msra.mxu0 0.0
        %1896 = vmatpush.msra.mxu0 0.0
        %1897 = vmatpush.msra.mxu0 0.0
        %1898 = vmatpush.msra.mxu0 0.0
        %1899 = vmatpush.msra.mxu0 0.0
        %1900 = vmatpush.msra.mxu0 0.0
        %1901 = vmatpush.msra.mxu0 0.0
        %1902 = vmatpush.msra.mxu0 0.0
        %v1903 = vand.u32 %v1729, 4294901760
        %1904 = vmatpush.msra.mxu0 %v1903
        %v1905 = vand.u32 %v1725, 4294901760
        %1906 = vmatpush.msra.mxu0 %v1905
        %v1907 = vand.u32 %v1884, 4294901760
        %v1908 = vsub.f32 %v1884, %v1907
        %v1909 = vand.u32 %v1908, 4294901760
        %v1910 = vsub.f32 %v1908, %v1909
        %v1911 = vand.u32 %v1910, 4294901760
        %1912 = vmatmul.f32.gmra.mxu0 %v1911
        %v1913 = vpop.f32.mrf.mxu0
        %v1914 = vadd.f32 0.0, %v1913
        %v1915 = vand.u32 %v1887, 4294901760
        %v1916 = vsub.f32 %v1887, %v1915
        %v1917 = vand.u32 %v1916, 4294901760
        %v1918 = vsub.f32 %v1916, %v1917
        %v1919 = vand.u32 %v1918, 4294901760
        %1920 = vmatmul.f32.gmra.mxu0 %v1919
        %v1921 = vpop.f32.mrf.mxu0
        %v1922 = vadd.f32 0.0, %v1921
        %1923 = vdwg.mxu0
        %1924 = vmatpush.msra.mxu0 0.0
        %1925 = vmatpush.msra.mxu0 0.0
        %1926 = vmatpush.msra.mxu0 0.0
        %1927 = vmatpush.msra.mxu0 0.0
        %1928 = vmatpush.msra.mxu0 0.0
        %1929 = vmatpush.msra.mxu0 0.0
        %1930 = vmatpush.msra.mxu0 0.0
        %1931 = vmatpush.msra.mxu0 0.0
        %1932 = vmatpush.msra.mxu0 0.0
        %1933 = vmatpush.msra.mxu0 0.0
        %1934 = vmatpush.msra.mxu0 0.0
        %1935 = vmatpush.msra.mxu0 0.0
        %1936 = vmatpush.msra.mxu0 0.0
        %1937 = vmatpush.msra.mxu0 0.0
        %v1938 = vand.u32 %v1729, 4294901760
        %v1939 = vsub.f32 %v1729, %v1938
        %v1940 = vand.u32 %v1939, 4294901760
        %v1941 = vsub.f32 %v1939, %v1940
        %v1942 = vand.u32 %v1941, 4294901760
        %1943 = vmatpush.msra.mxu0 %v1942
        %v1944 = vand.u32 %v1725, 4294901760
        %v1945 = vsub.f32 %v1725, %v1944
        %v1946 = vand.u32 %v1945, 4294901760
        %v1947 = vsub.f32 %v1945, %v1946
        %v1948 = vand.u32 %v1947, 4294901760
        %1949 = vmatpush.msra.mxu0 %v1948
        %v1950 = vand.u32 %v1884, 4294901760
        %1951 = vmatmul.f32.gmra.mxu0 %v1950
        %v1952 = vpop.f32.mrf.mxu0
        %v1953 = vadd.f32 %v1914, %v1952
        %v1954 = vand.u32 %v1887, 4294901760
        %1955 = vmatmul.f32.gmra.mxu0 %v1954
        %v1956 = vpop.f32.mrf.mxu0
        %v1957 = vadd.f32 %v1922, %v1956
        %1958 = vdwg.mxu0
        %1959 = vmatpush.msra.mxu0 0.0
        %1960 = vmatpush.msra.mxu0 0.0
        %1961 = vmatpush.msra.mxu0 0.0
        %1962 = vmatpush.msra.mxu0 0.0
        %1963 = vmatpush.msra.mxu0 0.0
        %1964 = vmatpush.msra.mxu0 0.0
        %1965 = vmatpush.msra.mxu0 0.0
        %1966 = vmatpush.msra.mxu0 0.0
        %1967 = vmatpush.msra.mxu0 0.0
        %1968 = vmatpush.msra.mxu0 0.0
        %1969 = vmatpush.msra.mxu0 0.0
        %1970 = vmatpush.msra.mxu0 0.0
        %1971 = vmatpush.msra.mxu0 0.0
        %1972 = vmatpush.msra.mxu0 0.0
        %v1973 = vand.u32 %v1729, 4294901760
        %v1974 = vsub.f32 %v1729, %v1973
        %1975 = vmatpush.msra.mxu0 %v1974
        %v1976 = vand.u32 %v1725, 4294901760
        %v1977 = vsub.f32 %v1725, %v1976
        %1978 = vmatpush.msra.mxu0 %v1977
        %v1979 = vand.u32 %v1884, 4294901760
        %v1980 = vsub.f32 %v1884, %v1979
        %1981 = vmatmul.f32.gmra.mxu0 %v1980
        %v1982 = vpop.f32.mrf.mxu0
        %v1983 = vadd.f32 %v1953, %v1982
        %v1984 = vand.u32 %v1887, 4294901760
        %v1985 = vsub.f32 %v1887, %v1984
        %1986 = vmatmul.f32.gmra.mxu0 %v1985
        %v1987 = vpop.f32.mrf.mxu0
        %v1988 = vadd.f32 %v1957, %v1987
        %1989 = vdwg.mxu0
        %1990 = vmatpush.msra.mxu0 0.0
        %1991 = vmatpush.msra.mxu0 0.0
        %1992 = vmatpush.msra.mxu0 0.0
        %1993 = vmatpush.msra.mxu0 0.0
        %1994 = vmatpush.msra.mxu0 0.0
        %1995 = vmatpush.msra.mxu0 0.0
        %1996 = vmatpush.msra.mxu0 0.0
        %1997 = vmatpush.msra.mxu0 0.0
        %1998 = vmatpush.msra.mxu0 0.0
        %1999 = vmatpush.msra.mxu0 0.0
        %2000 = vmatpush.msra.mxu0 0.0
        %2001 = vmatpush.msra.mxu0 0.0
        %2002 = vmatpush.msra.mxu0 0.0
        %2003 = vmatpush.msra.mxu0 0.0
        %v2004 = vand.u32 %v1729, 4294901760
        %2005 = vmatpush.msra.mxu0 %v2004
        %v2006 = vand.u32 %v1725, 4294901760
        %2007 = vmatpush.msra.mxu0 %v2006
        %v2008 = vand.u32 %v1884, 4294901760
        %v2009 = vsub.f32 %v1884, %v2008
        %v2010 = vand.u32 %v2009, 4294901760
        %2011 = vmatmul.f32.gmra.mxu0 %v2010
        %v2012 = vpop.f32.mrf.mxu0
        %v2013 = vadd.f32 %v1983, %v2012
        %v2014 = vand.u32 %v1887, 4294901760
        %v2015 = vsub.f32 %v1887, %v2014
        %v2016 = vand.u32 %v2015, 4294901760
        %2017 = vmatmul.f32.gmra.mxu0 %v2016
        %v2018 = vpop.f32.mrf.mxu0
        %v2019 = vadd.f32 %v1988, %v2018
        %2020 = vdwg.mxu0
        %2021 = vmatpush.msra.mxu0 0.0
        %2022 = vmatpush.msra.mxu0 0.0
        %2023 = vmatpush.msra.mxu0 0.0
        %2024 = vmatpush.msra.mxu0 0.0
        %2025 = vmatpush.msra.mxu0 0.0
        %2026 = vmatpush.msra.mxu0 0.0
        %2027 = vmatpush.msra.mxu0 0.0
        %2028 = vmatpush.msra.mxu0 0.0
        %2029 = vmatpush.msra.mxu0 0.0
        %2030 = vmatpush.msra.mxu0 0.0
        %2031 = vmatpush.msra.mxu0 0.0
        %2032 = vmatpush.msra.mxu0 0.0
        %2033 = vmatpush.msra.mxu0 0.0
        %2034 = vmatpush.msra.mxu0 0.0
        %v2035 = vand.u32 %v1729, 4294901760
        %v2036 = vsub.f32 %v1729, %v2035
        %v2037 = vand.u32 %v2036, 4294901760
        %2038 = vmatpush.msra.mxu0 %v2037
        %v2039 = vand.u32 %v1725, 4294901760
        %v2040 = vsub.f32 %v1725, %v2039
        %v2041 = vand.u32 %v2040, 4294901760
        %2042 = vmatpush.msra.mxu0 %v2041
        %v2043 = vand.u32 %v1884, 4294901760
        %2044 = vmatmul.f32.gmra.mxu0 %v2043
        %v2045 = vpop.f32.mrf.mxu0
        %v2046 = vadd.f32 %v2013, %v2045
        %v2047 = vand.u32 %v1887, 4294901760
        %2048 = vmatmul.f32.gmra.mxu0 %v2047
        %v2049 = vpop.f32.mrf.mxu0
        %v2050 = vadd.f32 %v2019, %v2049
        %2051 = vdwg.mxu0
        %2052 = vmatpush.msra.mxu0 0.0
        %2053 = vmatpush.msra.mxu0 0.0
        %2054 = vmatpush.msra.mxu0 0.0
        %2055 = vmatpush.msra.mxu0 0.0
        %2056 = vmatpush.msra.mxu0 0.0
        %2057 = vmatpush.msra.mxu0 0.0
        %2058 = vmatpush.msra.mxu0 0.0
        %2059 = vmatpush.msra.mxu0 0.0
        %2060 = vmatpush.msra.mxu0 0.0
        %2061 = vmatpush.msra.mxu0 0.0
        %2062 = vmatpush.msra.mxu0 0.0
        %2063 = vmatpush.msra.mxu0 0.0
        %2064 = vmatpush.msra.mxu0 0.0
        %2065 = vmatpush.msra.mxu0 0.0
        %v2066 = vand.u32 %v1729, 4294901760
        %2067 = vmatpush.msra.mxu0 %v2066
        %v2068 = vand.u32 %v1725, 4294901760
        %2069 = vmatpush.msra.mxu0 %v2068
        %v2070 = vand.u32 %v1884, 4294901760
        %2071 = vmatmul.f32.gmra.mxu0 %v2070
        %v2072 = vpop.f32.mrf.mxu0
        %v2073 = vadd.f32 %v2046, %v2072
        %v2074 = vand.u32 %v1887, 4294901760
        %2075 = vmatmul.f32.gmra.mxu0 %v2074
        %v2076 = vpop.f32.mrf.mxu0
        %v2077 = vadd.f32 %v2050, %v2076
        %2078 = vdwg.mxu0
        %2079 = vmatpush.msra.mxu0 0.0
        %2080 = vmatpush.msra.mxu0 0.0
        %2081 = vmatpush.msra.mxu0 0.0
        %2082 = vmatpush.msra.mxu0 0.0
        %2083 = vmatpush.msra.mxu0 0.0
        %2084 = vmatpush.msra.mxu0 0.0
        %2085 = vmatpush.msra.mxu0 0.0
        %2086 = vmatpush.msra.mxu0 0.0
        %2087 = vmatpush.msra.mxu0 0.0
        %2088 = vmatpush.msra.mxu0 0.0
        %2089 = vmatpush.msra.mxu0 0.0
        %2090 = vmatpush.msra.mxu0 0.0
        %2091 = vmatpush.msra.mxu0 0.0
        %2092 = vmatpush.msra.mxu0 0.0
        %v2093 = vand.u32 %v1737, 4294901760
        %2094 = vmatpush.msra.mxu0 %v2093
        %v2095 = vand.u32 %v1733, 4294901760
        %2096 = vmatpush.msra.mxu0 %v2095
        %v2097 = vand.u32 %v1884, 4294901760
        %v2098 = vsub.f32 %v1884, %v2097
        %v2099 = vand.u32 %v2098, 4294901760
        %v2100 = vsub.f32 %v2098, %v2099
        %v2101 = vand.u32 %v2100, 4294901760
        %2102 = vmatmul.f32.gmra.mxu0 %v2101
        %v2103 = vpop.f32.mrf.mxu0
        %v2104 = vadd.f32 0.0, %v2103
        %v2105 = vand.u32 %v1887, 4294901760
        %v2106 = vsub.f32 %v1887, %v2105
        %v2107 = vand.u32 %v2106, 4294901760
        %v2108 = vsub.f32 %v2106, %v2107
        %v2109 = vand.u32 %v2108, 4294901760
        %2110 = vmatmul.f32.gmra.mxu0 %v2109
        %v2111 = vpop.f32.mrf.mxu0
        %v2112 = vadd.f32 0.0, %v2111
        %2113 = vdwg.mxu0
        %2114 = vmatpush.msra.mxu0 0.0
        %2115 = vmatpush.msra.mxu0 0.0
        %2116 = vmatpush.msra.mxu0 0.0
        %2117 = vmatpush.msra.mxu0 0.0
        %2118 = vmatpush.msra.mxu0 0.0
        %2119 = vmatpush.msra.mxu0 0.0
        %2120 = vmatpush.msra.mxu0 0.0
        %2121 = vmatpush.msra.mxu0 0.0
        %2122 = vmatpush.msra.mxu0 0.0
        %2123 = vmatpush.msra.mxu0 0.0
        %2124 = vmatpush.msra.mxu0 0.0
        %2125 = vmatpush.msra.mxu0 0.0
        %2126 = vmatpush.msra.mxu0 0.0
        %2127 = vmatpush.msra.mxu0 0.0
        %v2128 = vand.u32 %v1737, 4294901760
        %v2129 = vsub.f32 %v1737, %v2128
        %v2130 = vand.u32 %v2129, 4294901760
        %v2131 = vsub.f32 %v2129, %v2130
        %v2132 = vand.u32 %v2131, 4294901760
        %2133 = vmatpush.msra.mxu0 %v2132
        %v2134 = vand.u32 %v1733, 4294901760
        %v2135 = vsub.f32 %v1733, %v2134
        %v2136 = vand.u32 %v2135, 4294901760
        %v2137 = vsub.f32 %v2135, %v2136
        %v2138 = vand.u32 %v2137, 4294901760
        %2139 = vmatpush.msra.mxu0 %v2138
        %v2140 = vand.u32 %v1884, 4294901760
        %2141 = vmatmul.f32.gmra.mxu0 %v2140
        %v2142 = vpop.f32.mrf.mxu0
        %v2143 = vadd.f32 %v2104, %v2142
        %v2144 = vand.u32 %v1887, 4294901760
        %2145 = vmatmul.f32.gmra.mxu0 %v2144
        %v2146 = vpop.f32.mrf.mxu0
        %v2147 = vadd.f32 %v2112, %v2146
        %2148 = vdwg.mxu0
        %2149 = vmatpush.msra.mxu0 0.0
        %2150 = vmatpush.msra.mxu0 0.0
        %2151 = vmatpush.msra.mxu0 0.0
        %2152 = vmatpush.msra.mxu0 0.0
        %2153 = vmatpush.msra.mxu0 0.0
        %2154 = vmatpush.msra.mxu0 0.0
        %2155 = vmatpush.msra.mxu0 0.0
        %2156 = vmatpush.msra.mxu0 0.0
        %2157 = vmatpush.msra.mxu0 0.0
        %2158 = vmatpush.msra.mxu0 0.0
        %2159 = vmatpush.msra.mxu0 0.0
        %2160 = vmatpush.msra.mxu0 0.0
        %2161 = vmatpush.msra.mxu0 0.0
        %2162 = vmatpush.msra.mxu0 0.0
        %v2163 = vand.u32 %v1737, 4294901760
        %v2164 = vsub.f32 %v1737, %v2163
        %2165 = vmatpush.msra.mxu0 %v2164
        %v2166 = vand.u32 %v1733, 4294901760
        %v2167 = vsub.f32 %v1733, %v2166
        %2168 = vmatpush.msra.mxu0 %v2167
        %v2169 = vand.u32 %v1884, 4294901760
        %v2170 = vsub.f32 %v1884, %v2169
        %2171 = vmatmul.f32.gmra.mxu0 %v2170
        %v2172 = vpop.f32.mrf.mxu0
        %v2173 = vadd.f32 %v2143, %v2172
        %v2174 = vand.u32 %v1887, 4294901760
        %v2175 = vsub.f32 %v1887, %v2174
        %2176 = vmatmul.f32.gmra.mxu0 %v2175
        %v2177 = vpop.f32.mrf.mxu0
        %v2178 = vadd.f32 %v2147, %v2177
        %2179 = vdwg.mxu0
        %2180 = vmatpush.msra.mxu0 0.0
        %2181 = vmatpush.msra.mxu0 0.0
        %2182 = vmatpush.msra.mxu0 0.0
        %2183 = vmatpush.msra.mxu0 0.0
        %2184 = vmatpush.msra.mxu0 0.0
        %2185 = vmatpush.msra.mxu0 0.0
        %2186 = vmatpush.msra.mxu0 0.0
        %2187 = vmatpush.msra.mxu0 0.0
        %2188 = vmatpush.msra.mxu0 0.0
        %2189 = vmatpush.msra.mxu0 0.0
        %2190 = vmatpush.msra.mxu0 0.0
        %2191 = vmatpush.msra.mxu0 0.0
        %2192 = vmatpush.msra.mxu0 0.0
        %2193 = vmatpush.msra.mxu0 0.0
        %v2194 = vand.u32 %v1737, 4294901760
        %2195 = vmatpush.msra.mxu0 %v2194
        %v2196 = vand.u32 %v1733, 4294901760
        %2197 = vmatpush.msra.mxu0 %v2196
        %v2198 = vand.u32 %v1884, 4294901760
        %v2199 = vsub.f32 %v1884, %v2198
        %v2200 = vand.u32 %v2199, 4294901760
        %2201 = vmatmul.f32.gmra.mxu0 %v2200
        %v2202 = vpop.f32.mrf.mxu0
        %v2203 = vadd.f32 %v2173, %v2202
        %v2204 = vand.u32 %v1887, 4294901760
        %v2205 = vsub.f32 %v1887, %v2204
        %v2206 = vand.u32 %v2205, 4294901760
        %2207 = vmatmul.f32.gmra.mxu0 %v2206
        %v2208 = vpop.f32.mrf.mxu0
        %v2209 = vadd.f32 %v2178, %v2208
        %2210 = vdwg.mxu0
        %2211 = vmatpush.msra.mxu0 0.0
        %2212 = vmatpush.msra.mxu0 0.0
        %2213 = vmatpush.msra.mxu0 0.0
        %2214 = vmatpush.msra.mxu0 0.0
        %2215 = vmatpush.msra.mxu0 0.0
        %2216 = vmatpush.msra.mxu0 0.0
        %2217 = vmatpush.msra.mxu0 0.0
        %2218 = vmatpush.msra.mxu0 0.0
        %2219 = vmatpush.msra.mxu0 0.0
        %2220 = vmatpush.msra.mxu0 0.0
        %2221 = vmatpush.msra.mxu0 0.0
        %2222 = vmatpush.msra.mxu0 0.0
        %2223 = vmatpush.msra.mxu0 0.0
        %2224 = vmatpush.msra.mxu0 0.0
        %v2225 = vand.u32 %v1737, 4294901760
        %v2226 = vsub.f32 %v1737, %v2225
        %v2227 = vand.u32 %v2226, 4294901760
        %2228 = vmatpush.msra.mxu0 %v2227
        %v2229 = vand.u32 %v1733, 4294901760
        %v2230 = vsub.f32 %v1733, %v2229
        %v2231 = vand.u32 %v2230, 4294901760
        %2232 = vmatpush.msra.mxu0 %v2231
        %v2233 = vand.u32 %v1884, 4294901760
        %2234 = vmatmul.f32.gmra.mxu0 %v2233
        %v2235 = vpop.f32.mrf.mxu0
        %v2236 = vadd.f32 %v2203, %v2235
        %v2237 = vand.u32 %v1887, 4294901760
        %2238 = vmatmul.f32.gmra.mxu0 %v2237
        %v2239 = vpop.f32.mrf.mxu0
        %v2240 = vadd.f32 %v2209, %v2239
        %2241 = vdwg.mxu0
        %2242 = vmatpush.msra.mxu0 0.0
        %2243 = vmatpush.msra.mxu0 0.0
        %2244 = vmatpush.msra.mxu0 0.0
        %2245 = vmatpush.msra.mxu0 0.0
        %2246 = vmatpush.msra.mxu0 0.0
        %2247 = vmatpush.msra.mxu0 0.0
        %2248 = vmatpush.msra.mxu0 0.0
        %2249 = vmatpush.msra.mxu0 0.0
        %2250 = vmatpush.msra.mxu0 0.0
        %2251 = vmatpush.msra.mxu0 0.0
        %2252 = vmatpush.msra.mxu0 0.0
        %2253 = vmatpush.msra.mxu0 0.0
        %2254 = vmatpush.msra.mxu0 0.0
        %2255 = vmatpush.msra.mxu0 0.0
        %v2256 = vand.u32 %v1737, 4294901760
        %2257 = vmatpush.msra.mxu0 %v2256
        %v2258 = vand.u32 %v1733, 4294901760
        %2259 = vmatpush.msra.mxu0 %v2258
        %v2260 = vand.u32 %v1884, 4294901760
        %2261 = vmatmul.f32.gmra.mxu0 %v2260
        %v2262 = vpop.f32.mrf.mxu0
        %v2263 = vadd.f32 %v2236, %v2262
        %v2264 = vand.u32 %v1887, 4294901760
        %2265 = vmatmul.f32.gmra.mxu0 %v2264
        %v2266 = vpop.f32.mrf.mxu0
        %v2267 = vadd.f32 %v2240, %v2266
        %2268 = vdwg.mxu0
        %2269 = vmatpush.msra.mxu0 0.0
        %2270 = vmatpush.msra.mxu0 0.0
        %2271 = vmatpush.msra.mxu0 0.0
        %2272 = vmatpush.msra.mxu0 0.0
        %2273 = vmatpush.msra.mxu0 0.0
        %2274 = vmatpush.msra.mxu0 0.0
        %2275 = vmatpush.msra.mxu0 0.0
        %2276 = vmatpush.msra.mxu0 0.0
        %2277 = vmatpush.msra.mxu0 0.0
        %2278 = vmatpush.msra.mxu0 0.0
        %2279 = vmatpush.msra.mxu0 0.0
        %2280 = vmatpush.msra.mxu0 0.0
        %2281 = vmatpush.msra.mxu0 0.0
        %2282 = vmatpush.msra.mxu0 0.0
        %v2283 = vand.u32 %v1745, 4294901760
        %2284 = vmatpush.msra.mxu0 %v2283
        %v2285 = vand.u32 %v1741, 4294901760
        %2286 = vmatpush.msra.mxu0 %v2285
        %v2287 = vand.u32 %v1884, 4294901760
        %v2288 = vsub.f32 %v1884, %v2287
        %v2289 = vand.u32 %v2288, 4294901760
        %v2290 = vsub.f32 %v2288, %v2289
        %v2291 = vand.u32 %v2290, 4294901760
        %2292 = vmatmul.f32.gmra.mxu0 %v2291
        %v2293 = vpop.f32.mrf.mxu0
        %v2294 = vadd.f32 0.0, %v2293
        %v2295 = vand.u32 %v1887, 4294901760
        %v2296 = vsub.f32 %v1887, %v2295
        %v2297 = vand.u32 %v2296, 4294901760
        %v2298 = vsub.f32 %v2296, %v2297
        %v2299 = vand.u32 %v2298, 4294901760
        %2300 = vmatmul.f32.gmra.mxu0 %v2299
        %v2301 = vpop.f32.mrf.mxu0
        %v2302 = vadd.f32 0.0, %v2301
        %2303 = vdwg.mxu0
        %2304 = vmatpush.msra.mxu0 0.0
        %2305 = vmatpush.msra.mxu0 0.0
        %2306 = vmatpush.msra.mxu0 0.0
        %2307 = vmatpush.msra.mxu0 0.0
        %2308 = vmatpush.msra.mxu0 0.0
        %2309 = vmatpush.msra.mxu0 0.0
        %2310 = vmatpush.msra.mxu0 0.0
        %2311 = vmatpush.msra.mxu0 0.0
        %2312 = vmatpush.msra.mxu0 0.0
        %2313 = vmatpush.msra.mxu0 0.0
        %2314 = vmatpush.msra.mxu0 0.0
        %2315 = vmatpush.msra.mxu0 0.0
        %2316 = vmatpush.msra.mxu0 0.0
        %2317 = vmatpush.msra.mxu0 0.0
        %v2318 = vand.u32 %v1745, 4294901760
        %v2319 = vsub.f32 %v1745, %v2318
        %v2320 = vand.u32 %v2319, 4294901760
        %v2321 = vsub.f32 %v2319, %v2320
        %v2322 = vand.u32 %v2321, 4294901760
        %2323 = vmatpush.msra.mxu0 %v2322
        %v2324 = vand.u32 %v1741, 4294901760
        %v2325 = vsub.f32 %v1741, %v2324
        %v2326 = vand.u32 %v2325, 4294901760
        %v2327 = vsub.f32 %v2325, %v2326
        %v2328 = vand.u32 %v2327, 4294901760
        %2329 = vmatpush.msra.mxu0 %v2328
        %v2330 = vand.u32 %v1884, 4294901760
        %2331 = vmatmul.f32.gmra.mxu0 %v2330
        %v2332 = vpop.f32.mrf.mxu0
        %v2333 = vadd.f32 %v2294, %v2332
        %v2334 = vand.u32 %v1887, 4294901760
        %2335 = vmatmul.f32.gmra.mxu0 %v2334
        %v2336 = vpop.f32.mrf.mxu0
        %v2337 = vadd.f32 %v2302, %v2336
        %2338 = vdwg.mxu0
        %2339 = vmatpush.msra.mxu0 0.0
        %2340 = vmatpush.msra.mxu0 0.0
        %2341 = vmatpush.msra.mxu0 0.0
        %2342 = vmatpush.msra.mxu0 0.0
        %2343 = vmatpush.msra.mxu0 0.0
        %2344 = vmatpush.msra.mxu0 0.0
        %2345 = vmatpush.msra.mxu0 0.0
        %2346 = vmatpush.msra.mxu0 0.0
        %2347 = vmatpush.msra.mxu0 0.0
        %2348 = vmatpush.msra.mxu0 0.0
        %2349 = vmatpush.msra.mxu0 0.0
        %2350 = vmatpush.msra.mxu0 0.0
        %2351 = vmatpush.msra.mxu0 0.0
        %2352 = vmatpush.msra.mxu0 0.0
        %v2353 = vand.u32 %v1745, 4294901760
        %v2354 = vsub.f32 %v1745, %v2353
        %2355 = vmatpush.msra.mxu0 %v2354
        %v2356 = vand.u32 %v1741, 4294901760
        %v2357 = vsub.f32 %v1741, %v2356
        %2358 = vmatpush.msra.mxu0 %v2357
        %v2359 = vand.u32 %v1884, 4294901760
        %v2360 = vsub.f32 %v1884, %v2359
        %2361 = vmatmul.f32.gmra.mxu0 %v2360
        %v2362 = vpop.f32.mrf.mxu0
        %v2363 = vadd.f32 %v2333, %v2362
        %v2364 = vand.u32 %v1887, 4294901760
        %v2365 = vsub.f32 %v1887, %v2364
        %2366 = vmatmul.f32.gmra.mxu0 %v2365
        %v2367 = vpop.f32.mrf.mxu0
        %v2368 = vadd.f32 %v2337, %v2367
        %2369 = vdwg.mxu0
        %2370 = vmatpush.msra.mxu0 0.0
        %2371 = vmatpush.msra.mxu0 0.0
        %2372 = vmatpush.msra.mxu0 0.0
        %2373 = vmatpush.msra.mxu0 0.0
        %2374 = vmatpush.msra.mxu0 0.0
        %2375 = vmatpush.msra.mxu0 0.0
        %2376 = vmatpush.msra.mxu0 0.0
        %2377 = vmatpush.msra.mxu0 0.0
        %2378 = vmatpush.msra.mxu0 0.0
        %2379 = vmatpush.msra.mxu0 0.0
        %2380 = vmatpush.msra.mxu0 0.0
        %2381 = vmatpush.msra.mxu0 0.0
        %2382 = vmatpush.msra.mxu0 0.0
        %2383 = vmatpush.msra.mxu0 0.0
        %v2384 = vand.u32 %v1745, 4294901760
        %2385 = vmatpush.msra.mxu0 %v2384
        %v2386 = vand.u32 %v1741, 4294901760
        %2387 = vmatpush.msra.mxu0 %v2386
        %v2388 = vand.u32 %v1884, 4294901760
        %v2389 = vsub.f32 %v1884, %v2388
        %v2390 = vand.u32 %v2389, 4294901760
        %2391 = vmatmul.f32.gmra.mxu0 %v2390
        %v2392 = vpop.f32.mrf.mxu0
        %v2393 = vadd.f32 %v2363, %v2392
        %v2394 = vand.u32 %v1887, 4294901760
        %v2395 = vsub.f32 %v1887, %v2394
        %v2396 = vand.u32 %v2395, 4294901760
        %2397 = vmatmul.f32.gmra.mxu0 %v2396
        %v2398 = vpop.f32.mrf.mxu0
        %v2399 = vadd.f32 %v2368, %v2398
        %2400 = vdwg.mxu0
        %2401 = vmatpush.msra.mxu0 0.0
        %2402 = vmatpush.msra.mxu0 0.0
        %2403 = vmatpush.msra.mxu0 0.0
        %2404 = vmatpush.msra.mxu0 0.0
        %2405 = vmatpush.msra.mxu0 0.0
        %2406 = vmatpush.msra.mxu0 0.0
        %2407 = vmatpush.msra.mxu0 0.0
        %2408 = vmatpush.msra.mxu0 0.0
        %2409 = vmatpush.msra.mxu0 0.0
        %2410 = vmatpush.msra.mxu0 0.0
        %2411 = vmatpush.msra.mxu0 0.0
        %2412 = vmatpush.msra.mxu0 0.0
        %2413 = vmatpush.msra.mxu0 0.0
        %2414 = vmatpush.msra.mxu0 0.0
        %v2415 = vand.u32 %v1745, 4294901760
        %v2416 = vsub.f32 %v1745, %v2415
        %v2417 = vand.u32 %v2416, 4294901760
        %2418 = vmatpush.msra.mxu0 %v2417
        %v2419 = vand.u32 %v1741, 4294901760
        %v2420 = vsub.f32 %v1741, %v2419
        %v2421 = vand.u32 %v2420, 4294901760
        %2422 = vmatpush.msra.mxu0 %v2421
        %v2423 = vand.u32 %v1884, 4294901760
        %2424 = vmatmul.f32.gmra.mxu0 %v2423
        %v2425 = vpop.f32.mrf.mxu0
        %v2426 = vadd.f32 %v2393, %v2425
        %v2427 = vand.u32 %v1887, 4294901760
        %2428 = vmatmul.f32.gmra.mxu0 %v2427
        %v2429 = vpop.f32.mrf.mxu0
        %v2430 = vadd.f32 %v2399, %v2429
        %2431 = vdwg.mxu0
        %2432 = vmatpush.msra.mxu0 0.0
        %2433 = vmatpush.msra.mxu0 0.0
        %2434 = vmatpush.msra.mxu0 0.0
        %2435 = vmatpush.msra.mxu0 0.0
        %2436 = vmatpush.msra.mxu0 0.0
        %2437 = vmatpush.msra.mxu0 0.0
        %2438 = vmatpush.msra.mxu0 0.0
        %2439 = vmatpush.msra.mxu0 0.0
        %2440 = vmatpush.msra.mxu0 0.0
        %2441 = vmatpush.msra.mxu0 0.0
        %2442 = vmatpush.msra.mxu0 0.0
        %2443 = vmatpush.msra.mxu0 0.0
        %2444 = vmatpush.msra.mxu0 0.0
        %2445 = vmatpush.msra.mxu0 0.0
        %v2446 = vand.u32 %v1745, 4294901760
        %2447 = vmatpush.msra.mxu0 %v2446
        %v2448 = vand.u32 %v1741, 4294901760
        %2449 = vmatpush.msra.mxu0 %v2448
        %v2450 = vand.u32 %v1884, 4294901760
        %2451 = vmatmul.f32.gmra.mxu0 %v2450
        %v2452 = vpop.f32.mrf.mxu0
        %v2453 = vadd.f32 %v2426, %v2452
        %v2454 = vand.u32 %v1887, 4294901760
        %2455 = vmatmul.f32.gmra.mxu0 %v2454
        %v2456 = vpop.f32.mrf.mxu0
        %v2457 = vadd.f32 %v2430, %v2456
        %2458 = vdwg.mxu0
        %2459 = vmatpush.msra.mxu0 0.0
        %2460 = vmatpush.msra.mxu0 0.0
        %2461 = vmatpush.msra.mxu0 0.0
        %2462 = vmatpush.msra.mxu0 0.0
        %2463 = vmatpush.msra.mxu0 0.0
        %2464 = vmatpush.msra.mxu0 0.0
        %2465 = vmatpush.msra.mxu0 0.0
        %2466 = vmatpush.msra.mxu0 0.0
        %2467 = vmatpush.msra.mxu0 0.0
        %2468 = vmatpush.msra.mxu0 0.0
        %2469 = vmatpush.msra.mxu0 0.0
        %2470 = vmatpush.msra.mxu0 0.0
        %2471 = vmatpush.msra.mxu0 0.0
        %2472 = vmatpush.msra.mxu0 0.0
        %v2473 = vand.u32 %v1753, 4294901760
        %2474 = vmatpush.msra.mxu0 %v2473
        %v2475 = vand.u32 %v1749, 4294901760
        %2476 = vmatpush.msra.mxu0 %v2475
        %v2477 = vand.u32 %v1884, 4294901760
        %v2478 = vsub.f32 %v1884, %v2477
        %v2479 = vand.u32 %v2478, 4294901760
        %v2480 = vsub.f32 %v2478, %v2479
        %v2481 = vand.u32 %v2480, 4294901760
        %2482 = vmatmul.f32.gmra.mxu0 %v2481
        %v2483 = vpop.f32.mrf.mxu0
        %v2484 = vadd.f32 0.0, %v2483
        %v2485 = vand.u32 %v1887, 4294901760
        %v2486 = vsub.f32 %v1887, %v2485
        %v2487 = vand.u32 %v2486, 4294901760
        %v2488 = vsub.f32 %v2486, %v2487
        %v2489 = vand.u32 %v2488, 4294901760
        %2490 = vmatmul.f32.gmra.mxu0 %v2489
        %v2491 = vpop.f32.mrf.mxu0
        %v2492 = vadd.f32 0.0, %v2491
        %2493 = vdwg.mxu0
        %2494 = vmatpush.msra.mxu0 0.0
        %2495 = vmatpush.msra.mxu0 0.0
        %2496 = vmatpush.msra.mxu0 0.0
        %2497 = vmatpush.msra.mxu0 0.0
        %2498 = vmatpush.msra.mxu0 0.0
        %2499 = vmatpush.msra.mxu0 0.0
        %2500 = vmatpush.msra.mxu0 0.0
        %2501 = vmatpush.msra.mxu0 0.0
        %2502 = vmatpush.msra.mxu0 0.0
        %2503 = vmatpush.msra.mxu0 0.0
        %2504 = vmatpush.msra.mxu0 0.0
        %2505 = vmatpush.msra.mxu0 0.0
        %2506 = vmatpush.msra.mxu0 0.0
        %2507 = vmatpush.msra.mxu0 0.0
        %v2508 = vand.u32 %v1753, 4294901760
        %v2509 = vsub.f32 %v1753, %v2508
        %v2510 = vand.u32 %v2509, 4294901760
        %v2511 = vsub.f32 %v2509, %v2510
        %v2512 = vand.u32 %v2511, 4294901760
        %2513 = vmatpush.msra.mxu0 %v2512
        %v2514 = vand.u32 %v1749, 4294901760
        %v2515 = vsub.f32 %v1749, %v2514
        %v2516 = vand.u32 %v2515, 4294901760
        %v2517 = vsub.f32 %v2515, %v2516
        %v2518 = vand.u32 %v2517, 4294901760
        %2519 = vmatpush.msra.mxu0 %v2518
        %v2520 = vand.u32 %v1884, 4294901760
        %2521 = vmatmul.f32.gmra.mxu0 %v2520
        %v2522 = vpop.f32.mrf.mxu0
        %v2523 = vadd.f32 %v2484, %v2522
        %v2524 = vand.u32 %v1887, 4294901760
        %2525 = vmatmul.f32.gmra.mxu0 %v2524
        %v2526 = vpop.f32.mrf.mxu0
        %v2527 = vadd.f32 %v2492, %v2526
        %2528 = vdwg.mxu0
        %2529 = vmatpush.msra.mxu0 0.0
        %2530 = vmatpush.msra.mxu0 0.0
        %2531 = vmatpush.msra.mxu0 0.0
        %2532 = vmatpush.msra.mxu0 0.0
        %2533 = vmatpush.msra.mxu0 0.0
        %2534 = vmatpush.msra.mxu0 0.0
        %2535 = vmatpush.msra.mxu0 0.0
        %2536 = vmatpush.msra.mxu0 0.0
        %2537 = vmatpush.msra.mxu0 0.0
        %2538 = vmatpush.msra.mxu0 0.0
        %2539 = vmatpush.msra.mxu0 0.0
        %2540 = vmatpush.msra.mxu0 0.0
        %2541 = vmatpush.msra.mxu0 0.0
        %2542 = vmatpush.msra.mxu0 0.0
        %v2543 = vand.u32 %v1753, 4294901760
        %v2544 = vsub.f32 %v1753, %v2543
        %2545 = vmatpush.msra.mxu0 %v2544
        %v2546 = vand.u32 %v1749, 4294901760
        %v2547 = vsub.f32 %v1749, %v2546
        %2548 = vmatpush.msra.mxu0 %v2547
        %v2549 = vand.u32 %v1884, 4294901760
        %v2550 = vsub.f32 %v1884, %v2549
        %2551 = vmatmul.f32.gmra.mxu0 %v2550
        %v2552 = vpop.f32.mrf.mxu0
        %v2553 = vadd.f32 %v2523, %v2552
        %v2554 = vand.u32 %v1887, 4294901760
        %v2555 = vsub.f32 %v1887, %v2554
        %2556 = vmatmul.f32.gmra.mxu0 %v2555
        %v2557 = vpop.f32.mrf.mxu0
        %v2558 = vadd.f32 %v2527, %v2557
        %2559 = vdwg.mxu0
        %2560 = vmatpush.msra.mxu0 0.0
        %2561 = vmatpush.msra.mxu0 0.0
        %2562 = vmatpush.msra.mxu0 0.0
        %2563 = vmatpush.msra.mxu0 0.0
        %2564 = vmatpush.msra.mxu0 0.0
        %2565 = vmatpush.msra.mxu0 0.0
        %2566 = vmatpush.msra.mxu0 0.0
        %2567 = vmatpush.msra.mxu0 0.0
        %2568 = vmatpush.msra.mxu0 0.0
        %2569 = vmatpush.msra.mxu0 0.0
        %2570 = vmatpush.msra.mxu0 0.0
        %2571 = vmatpush.msra.mxu0 0.0
        %2572 = vmatpush.msra.mxu0 0.0
        %2573 = vmatpush.msra.mxu0 0.0
        %v2574 = vand.u32 %v1753, 4294901760
        %2575 = vmatpush.msra.mxu0 %v2574
        %v2576 = vand.u32 %v1749, 4294901760
        %2577 = vmatpush.msra.mxu0 %v2576
        %v2578 = vand.u32 %v1884, 4294901760
        %v2579 = vsub.f32 %v1884, %v2578
        %v2580 = vand.u32 %v2579, 4294901760
        %2581 = vmatmul.f32.gmra.mxu0 %v2580
        %v2582 = vpop.f32.mrf.mxu0
        %v2583 = vadd.f32 %v2553, %v2582
        %v2584 = vand.u32 %v1887, 4294901760
        %v2585 = vsub.f32 %v1887, %v2584
        %v2586 = vand.u32 %v2585, 4294901760
        %2587 = vmatmul.f32.gmra.mxu0 %v2586
        %v2588 = vpop.f32.mrf.mxu0
        %v2589 = vadd.f32 %v2558, %v2588
        %2590 = vdwg.mxu0
        %2591 = vmatpush.msra.mxu0 0.0
        %2592 = vmatpush.msra.mxu0 0.0
        %2593 = vmatpush.msra.mxu0 0.0
        %2594 = vmatpush.msra.mxu0 0.0
        %2595 = vmatpush.msra.mxu0 0.0
        %2596 = vmatpush.msra.mxu0 0.0
        %2597 = vmatpush.msra.mxu0 0.0
        %2598 = vmatpush.msra.mxu0 0.0
        %2599 = vmatpush.msra.mxu0 0.0
        %2600 = vmatpush.msra.mxu0 0.0
        %2601 = vmatpush.msra.mxu0 0.0
        %2602 = vmatpush.msra.mxu0 0.0
        %2603 = vmatpush.msra.mxu0 0.0
        %2604 = vmatpush.msra.mxu0 0.0
        %v2605 = vand.u32 %v1753, 4294901760
        %v2606 = vsub.f32 %v1753, %v2605
        %v2607 = vand.u32 %v2606, 4294901760
        %2608 = vmatpush.msra.mxu0 %v2607
        %v2609 = vand.u32 %v1749, 4294901760
        %v2610 = vsub.f32 %v1749, %v2609
        %v2611 = vand.u32 %v2610, 4294901760
        %2612 = vmatpush.msra.mxu0 %v2611
        %v2613 = vand.u32 %v1884, 4294901760
        %2614 = vmatmul.f32.gmra.mxu0 %v2613
        %v2615 = vpop.f32.mrf.mxu0
        %v2616 = vadd.f32 %v2583, %v2615
        %v2617 = vand.u32 %v1887, 4294901760
        %2618 = vmatmul.f32.gmra.mxu0 %v2617
        %v2619 = vpop.f32.mrf.mxu0
        %v2620 = vadd.f32 %v2589, %v2619
        %2621 = vdwg.mxu0
        %2622 = vmatpush.msra.mxu0 0.0
        %2623 = vmatpush.msra.mxu0 0.0
        %2624 = vmatpush.msra.mxu0 0.0
        %2625 = vmatpush.msra.mxu0 0.0
        %2626 = vmatpush.msra.mxu0 0.0
        %2627 = vmatpush.msra.mxu0 0.0
        %2628 = vmatpush.msra.mxu0 0.0
        %2629 = vmatpush.msra.mxu0 0.0
        %2630 = vmatpush.msra.mxu0 0.0
        %2631 = vmatpush.msra.mxu0 0.0
        %2632 = vmatpush.msra.mxu0 0.0
        %2633 = vmatpush.msra.mxu0 0.0
        %2634 = vmatpush.msra.mxu0 0.0
        %2635 = vmatpush.msra.mxu0 0.0
        %v2636 = vand.u32 %v1753, 4294901760
        %2637 = vmatpush.msra.mxu0 %v2636
        %v2638 = vand.u32 %v1749, 4294901760
        %2639 = vmatpush.msra.mxu0 %v2638
        %v2640 = vand.u32 %v1884, 4294901760
        %2641 = vmatmul.f32.gmra.mxu0 %v2640
        %v2642 = vpop.f32.mrf.mxu0
        %v2643 = vadd.f32 %v2616, %v2642
        %v2644 = vand.u32 %v1887, 4294901760
        %2645 = vmatmul.f32.gmra.mxu0 %v2644
        %v2646 = vpop.f32.mrf.mxu0
        %v2647 = vadd.f32 %v2620, %v2646
        %2648 = vdwg.mxu0
        %2649 = vmatpush.msra.mxu0 0.0
        %2650 = vmatpush.msra.mxu0 0.0
        %2651 = vmatpush.msra.mxu0 0.0
        %2652 = vmatpush.msra.mxu0 0.0
        %2653 = vmatpush.msra.mxu0 0.0
        %2654 = vmatpush.msra.mxu0 0.0
        %2655 = vmatpush.msra.mxu0 0.0
        %2656 = vmatpush.msra.mxu0 0.0
        %2657 = vmatpush.msra.mxu0 0.0
        %2658 = vmatpush.msra.mxu0 0.0
        %2659 = vmatpush.msra.mxu0 0.0
        %2660 = vmatpush.msra.mxu0 0.0
        %2661 = vmatpush.msra.mxu0 0.0
        %2662 = vmatpush.msra.mxu0 0.0
        %v2663 = vand.u32 %v1761, 4294901760
        %2664 = vmatpush.msra.mxu0 %v2663
        %v2665 = vand.u32 %v1757, 4294901760
        %2666 = vmatpush.msra.mxu0 %v2665
        %v2667 = vand.u32 %v1884, 4294901760
        %v2668 = vsub.f32 %v1884, %v2667
        %v2669 = vand.u32 %v2668, 4294901760
        %v2670 = vsub.f32 %v2668, %v2669
        %v2671 = vand.u32 %v2670, 4294901760
        %2672 = vmatmul.f32.gmra.mxu0 %v2671
        %v2673 = vpop.f32.mrf.mxu0
        %v2674 = vadd.f32 0.0, %v2673
        %v2675 = vand.u32 %v1887, 4294901760
        %v2676 = vsub.f32 %v1887, %v2675
        %v2677 = vand.u32 %v2676, 4294901760
        %v2678 = vsub.f32 %v2676, %v2677
        %v2679 = vand.u32 %v2678, 4294901760
        %2680 = vmatmul.f32.gmra.mxu0 %v2679
        %v2681 = vpop.f32.mrf.mxu0
        %v2682 = vadd.f32 0.0, %v2681
        %2683 = vdwg.mxu0
        %2684 = vmatpush.msra.mxu0 0.0
        %2685 = vmatpush.msra.mxu0 0.0
        %2686 = vmatpush.msra.mxu0 0.0
        %2687 = vmatpush.msra.mxu0 0.0
        %2688 = vmatpush.msra.mxu0 0.0
        %2689 = vmatpush.msra.mxu0 0.0
        %2690 = vmatpush.msra.mxu0 0.0
        %2691 = vmatpush.msra.mxu0 0.0
        %2692 = vmatpush.msra.mxu0 0.0
        %2693 = vmatpush.msra.mxu0 0.0
        %2694 = vmatpush.msra.mxu0 0.0
        %2695 = vmatpush.msra.mxu0 0.0
        %2696 = vmatpush.msra.mxu0 0.0
        %2697 = vmatpush.msra.mxu0 0.0
        %v2698 = vand.u32 %v1761, 4294901760
        %v2699 = vsub.f32 %v1761, %v2698
        %v2700 = vand.u32 %v2699, 4294901760
        %v2701 = vsub.f32 %v2699, %v2700
        %v2702 = vand.u32 %v2701, 4294901760
        %2703 = vmatpush.msra.mxu0 %v2702
        %v2704 = vand.u32 %v1757, 4294901760
        %v2705 = vsub.f32 %v1757, %v2704
        %v2706 = vand.u32 %v2705, 4294901760
        %v2707 = vsub.f32 %v2705, %v2706
        %v2708 = vand.u32 %v2707, 4294901760
        %2709 = vmatpush.msra.mxu0 %v2708
        %v2710 = vand.u32 %v1884, 4294901760
        %2711 = vmatmul.f32.gmra.mxu0 %v2710
        %v2712 = vpop.f32.mrf.mxu0
        %v2713 = vadd.f32 %v2674, %v2712
        %v2714 = vand.u32 %v1887, 4294901760
        %2715 = vmatmul.f32.gmra.mxu0 %v2714
        %v2716 = vpop.f32.mrf.mxu0
        %v2717 = vadd.f32 %v2682, %v2716
        %2718 = vdwg.mxu0
        %2719 = vmatpush.msra.mxu0 0.0
        %2720 = vmatpush.msra.mxu0 0.0
        %2721 = vmatpush.msra.mxu0 0.0
        %2722 = vmatpush.msra.mxu0 0.0
        %2723 = vmatpush.msra.mxu0 0.0
        %2724 = vmatpush.msra.mxu0 0.0
        %2725 = vmatpush.msra.mxu0 0.0
        %2726 = vmatpush.msra.mxu0 0.0
        %2727 = vmatpush.msra.mxu0 0.0
        %2728 = vmatpush.msra.mxu0 0.0
        %2729 = vmatpush.msra.mxu0 0.0
        %2730 = vmatpush.msra.mxu0 0.0
        %2731 = vmatpush.msra.mxu0 0.0
        %2732 = vmatpush.msra.mxu0 0.0
        %v2733 = vand.u32 %v1761, 4294901760
        %v2734 = vsub.f32 %v1761, %v2733
        %2735 = vmatpush.msra.mxu0 %v2734
        %v2736 = vand.u32 %v1757, 4294901760
        %v2737 = vsub.f32 %v1757, %v2736
        %2738 = vmatpush.msra.mxu0 %v2737
        %v2739 = vand.u32 %v1884, 4294901760
        %v2740 = vsub.f32 %v1884, %v2739
        %2741 = vmatmul.f32.gmra.mxu0 %v2740
        %v2742 = vpop.f32.mrf.mxu0
        %v2743 = vadd.f32 %v2713, %v2742
        %v2744 = vand.u32 %v1887, 4294901760
        %v2745 = vsub.f32 %v1887, %v2744
        %2746 = vmatmul.f32.gmra.mxu0 %v2745
        %v2747 = vpop.f32.mrf.mxu0
        %v2748 = vadd.f32 %v2717, %v2747
        %2749 = vdwg.mxu0
        %2750 = vmatpush.msra.mxu0 0.0
        %2751 = vmatpush.msra.mxu0 0.0
        %2752 = vmatpush.msra.mxu0 0.0
        %2753 = vmatpush.msra.mxu0 0.0
        %2754 = vmatpush.msra.mxu0 0.0
        %2755 = vmatpush.msra.mxu0 0.0
        %2756 = vmatpush.msra.mxu0 0.0
        %2757 = vmatpush.msra.mxu0 0.0
        %2758 = vmatpush.msra.mxu0 0.0
        %2759 = vmatpush.msra.mxu0 0.0
        %2760 = vmatpush.msra.mxu0 0.0
        %2761 = vmatpush.msra.mxu0 0.0
        %2762 = vmatpush.msra.mxu0 0.0
        %2763 = vmatpush.msra.mxu0 0.0
        %v2764 = vand.u32 %v1761, 4294901760
        %2765 = vmatpush.msra.mxu0 %v2764
        %v2766 = vand.u32 %v1757, 4294901760
        %2767 = vmatpush.msra.mxu0 %v2766
        %v2768 = vand.u32 %v1884, 4294901760
        %v2769 = vsub.f32 %v1884, %v2768
        %v2770 = vand.u32 %v2769, 4294901760
        %2771 = vmatmul.f32.gmra.mxu0 %v2770
        %v2772 = vpop.f32.mrf.mxu0
        %v2773 = vadd.f32 %v2743, %v2772
        %v2774 = vand.u32 %v1887, 4294901760
        %v2775 = vsub.f32 %v1887, %v2774
        %v2776 = vand.u32 %v2775, 4294901760
        %2777 = vmatmul.f32.gmra.mxu0 %v2776
        %v2778 = vpop.f32.mrf.mxu0
        %v2779 = vadd.f32 %v2748, %v2778
        %2780 = vdwg.mxu0
        %2781 = vmatpush.msra.mxu0 0.0
        %2782 = vmatpush.msra.mxu0 0.0
        %2783 = vmatpush.msra.mxu0 0.0
        %2784 = vmatpush.msra.mxu0 0.0
        %2785 = vmatpush.msra.mxu0 0.0
        %2786 = vmatpush.msra.mxu0 0.0
        %2787 = vmatpush.msra.mxu0 0.0
        %2788 = vmatpush.msra.mxu0 0.0
        %2789 = vmatpush.msra.mxu0 0.0
        %2790 = vmatpush.msra.mxu0 0.0
        %2791 = vmatpush.msra.mxu0 0.0
        %2792 = vmatpush.msra.mxu0 0.0
        %2793 = vmatpush.msra.mxu0 0.0
        %2794 = vmatpush.msra.mxu0 0.0
        %v2795 = vand.u32 %v1761, 4294901760
        %v2796 = vsub.f32 %v1761, %v2795
        %v2797 = vand.u32 %v2796, 4294901760
        %2798 = vmatpush.msra.mxu0 %v2797
        %v2799 = vand.u32 %v1757, 4294901760
        %v2800 = vsub.f32 %v1757, %v2799
        %v2801 = vand.u32 %v2800, 4294901760
        %2802 = vmatpush.msra.mxu0 %v2801
        %v2803 = vand.u32 %v1884, 4294901760
        %2804 = vmatmul.f32.gmra.mxu0 %v2803
        %v2805 = vpop.f32.mrf.mxu0
        %v2806 = vadd.f32 %v2773, %v2805
        %v2807 = vand.u32 %v1887, 4294901760
        %2808 = vmatmul.f32.gmra.mxu0 %v2807
        %v2809 = vpop.f32.mrf.mxu0
        %v2810 = vadd.f32 %v2779, %v2809
        %2811 = vdwg.mxu0
        %2812 = vmatpush.msra.mxu0 0.0
        %2813 = vmatpush.msra.mxu0 0.0
        %2814 = vmatpush.msra.mxu0 0.0
        %2815 = vmatpush.msra.mxu0 0.0
        %2816 = vmatpush.msra.mxu0 0.0
        %2817 = vmatpush.msra.mxu0 0.0
        %2818 = vmatpush.msra.mxu0 0.0
        %2819 = vmatpush.msra.mxu0 0.0
        %2820 = vmatpush.msra.mxu0 0.0
        %2821 = vmatpush.msra.mxu0 0.0
        %2822 = vmatpush.msra.mxu0 0.0
        %2823 = vmatpush.msra.mxu0 0.0
        %2824 = vmatpush.msra.mxu0 0.0
        %2825 = vmatpush.msra.mxu0 0.0
        %v2826 = vand.u32 %v1761, 4294901760
        %2827 = vmatpush.msra.mxu0 %v2826
        %v2828 = vand.u32 %v1757, 4294901760
        %2829 = vmatpush.msra.mxu0 %v2828
        %v2830 = vand.u32 %v1884, 4294901760
        %2831 = vmatmul.f32.gmra.mxu0 %v2830
        %v2832 = vpop.f32.mrf.mxu0
        %v2833 = vadd.f32 %v2806, %v2832
        %v2834 = vand.u32 %v1887, 4294901760
        %2835 = vmatmul.f32.gmra.mxu0 %v2834
        %v2836 = vpop.f32.mrf.mxu0
        %v2837 = vadd.f32 %v2810, %v2836
        %2838 = vdwg.mxu0
        %2839 = vmatpush.msra.mxu0 0.0
        %2840 = vmatpush.msra.mxu0 0.0
        %2841 = vmatpush.msra.mxu0 0.0
        %2842 = vmatpush.msra.mxu0 0.0
        %2843 = vmatpush.msra.mxu0 0.0
        %2844 = vmatpush.msra.mxu0 0.0
        %2845 = vmatpush.msra.mxu0 0.0
        %2846 = vmatpush.msra.mxu0 0.0
        %2847 = vmatpush.msra.mxu0 0.0
        %2848 = vmatpush.msra.mxu0 0.0
        %2849 = vmatpush.msra.mxu0 0.0
        %2850 = vmatpush.msra.mxu0 0.0
        %2851 = vmatpush.msra.mxu0 0.0
        %2852 = vmatpush.msra.mxu0 0.0
        %v2853 = vand.u32 %v1769, 4294901760
        %2854 = vmatpush.msra.mxu0 %v2853
        %v2855 = vand.u32 %v1765, 4294901760
        %2856 = vmatpush.msra.mxu0 %v2855
        %v2857 = vand.u32 %v1884, 4294901760
        %v2858 = vsub.f32 %v1884, %v2857
        %v2859 = vand.u32 %v2858, 4294901760
        %v2860 = vsub.f32 %v2858, %v2859
        %v2861 = vand.u32 %v2860, 4294901760
        %2862 = vmatmul.f32.gmra.mxu0 %v2861
        %v2863 = vpop.f32.mrf.mxu0
        %v2864 = vadd.f32 0.0, %v2863
        %v2865 = vand.u32 %v1887, 4294901760
        %v2866 = vsub.f32 %v1887, %v2865
        %v2867 = vand.u32 %v2866, 4294901760
        %v2868 = vsub.f32 %v2866, %v2867
        %v2869 = vand.u32 %v2868, 4294901760
        %2870 = vmatmul.f32.gmra.mxu0 %v2869
        %v2871 = vpop.f32.mrf.mxu0
        %v2872 = vadd.f32 0.0, %v2871
        %2873 = vdwg.mxu0
        %2874 = vmatpush.msra.mxu0 0.0
        %2875 = vmatpush.msra.mxu0 0.0
        %2876 = vmatpush.msra.mxu0 0.0
        %2877 = vmatpush.msra.mxu0 0.0
        %2878 = vmatpush.msra.mxu0 0.0
        %2879 = vmatpush.msra.mxu0 0.0
        %2880 = vmatpush.msra.mxu0 0.0
        %2881 = vmatpush.msra.mxu0 0.0
        %2882 = vmatpush.msra.mxu0 0.0
        %2883 = vmatpush.msra.mxu0 0.0
        %2884 = vmatpush.msra.mxu0 0.0
        %2885 = vmatpush.msra.mxu0 0.0
        %2886 = vmatpush.msra.mxu0 0.0
        %2887 = vmatpush.msra.mxu0 0.0
        %v2888 = vand.u32 %v1769, 4294901760
        %v2889 = vsub.f32 %v1769, %v2888
        %v2890 = vand.u32 %v2889, 4294901760
        %v2891 = vsub.f32 %v2889, %v2890
        %v2892 = vand.u32 %v2891, 4294901760
        %2893 = vmatpush.msra.mxu0 %v2892
        %v2894 = vand.u32 %v1765, 4294901760
        %v2895 = vsub.f32 %v1765, %v2894
        %v2896 = vand.u32 %v2895, 4294901760
        %v2897 = vsub.f32 %v2895, %v2896
        %v2898 = vand.u32 %v2897, 4294901760
        %2899 = vmatpush.msra.mxu0 %v2898
        %v2900 = vand.u32 %v1884, 4294901760
        %2901 = vmatmul.f32.gmra.mxu0 %v2900
        %v2902 = vpop.f32.mrf.mxu0
        %v2903 = vadd.f32 %v2864, %v2902
        %v2904 = vand.u32 %v1887, 4294901760
        %2905 = vmatmul.f32.gmra.mxu0 %v2904
        %v2906 = vpop.f32.mrf.mxu0
        %v2907 = vadd.f32 %v2872, %v2906
        %2908 = vdwg.mxu0
        %2909 = vmatpush.msra.mxu0 0.0
        %2910 = vmatpush.msra.mxu0 0.0
        %2911 = vmatpush.msra.mxu0 0.0
        %2912 = vmatpush.msra.mxu0 0.0
        %2913 = vmatpush.msra.mxu0 0.0
        %2914 = vmatpush.msra.mxu0 0.0
        %2915 = vmatpush.msra.mxu0 0.0
        %2916 = vmatpush.msra.mxu0 0.0
        %2917 = vmatpush.msra.mxu0 0.0
        %2918 = vmatpush.msra.mxu0 0.0
        %2919 = vmatpush.msra.mxu0 0.0
        %2920 = vmatpush.msra.mxu0 0.0
        %2921 = vmatpush.msra.mxu0 0.0
        %2922 = vmatpush.msra.mxu0 0.0
        %v2923 = vand.u32 %v1769, 4294901760
        %v2924 = vsub.f32 %v1769, %v2923
        %2925 = vmatpush.msra.mxu0 %v2924
        %v2926 = vand.u32 %v1765, 4294901760
        %v2927 = vsub.f32 %v1765, %v2926
        %2928 = vmatpush.msra.mxu0 %v2927
        %v2929 = vand.u32 %v1884, 4294901760
        %v2930 = vsub.f32 %v1884, %v2929
        %2931 = vmatmul.f32.gmra.mxu0 %v2930
        %v2932 = vpop.f32.mrf.mxu0
        %v2933 = vadd.f32 %v2903, %v2932
        %v2934 = vand.u32 %v1887, 4294901760
        %v2935 = vsub.f32 %v1887, %v2934
        %2936 = vmatmul.f32.gmra.mxu0 %v2935
        %v2937 = vpop.f32.mrf.mxu0
        %v2938 = vadd.f32 %v2907, %v2937
        %2939 = vdwg.mxu0
        %2940 = vmatpush.msra.mxu0 0.0
        %2941 = vmatpush.msra.mxu0 0.0
        %2942 = vmatpush.msra.mxu0 0.0
        %2943 = vmatpush.msra.mxu0 0.0
        %2944 = vmatpush.msra.mxu0 0.0
        %2945 = vmatpush.msra.mxu0 0.0
        %2946 = vmatpush.msra.mxu0 0.0
        %2947 = vmatpush.msra.mxu0 0.0
        %2948 = vmatpush.msra.mxu0 0.0
        %2949 = vmatpush.msra.mxu0 0.0
        %2950 = vmatpush.msra.mxu0 0.0
        %2951 = vmatpush.msra.mxu0 0.0
        %2952 = vmatpush.msra.mxu0 0.0
        %2953 = vmatpush.msra.mxu0 0.0
        %v2954 = vand.u32 %v1769, 4294901760
        %2955 = vmatpush.msra.mxu0 %v2954
        %v2956 = vand.u32 %v1765, 4294901760
        %2957 = vmatpush.msra.mxu0 %v2956
        %v2958 = vand.u32 %v1884, 4294901760
        %v2959 = vsub.f32 %v1884, %v2958
        %v2960 = vand.u32 %v2959, 4294901760
        %2961 = vmatmul.f32.gmra.mxu0 %v2960
        %v2962 = vpop.f32.mrf.mxu0
        %v2963 = vadd.f32 %v2933, %v2962
        %v2964 = vand.u32 %v1887, 4294901760
        %v2965 = vsub.f32 %v1887, %v2964
        %v2966 = vand.u32 %v2965, 4294901760
        %2967 = vmatmul.f32.gmra.mxu0 %v2966
        %v2968 = vpop.f32.mrf.mxu0
        %v2969 = vadd.f32 %v2938, %v2968
        %2970 = vdwg.mxu0
        %2971 = vmatpush.msra.mxu0 0.0
        %2972 = vmatpush.msra.mxu0 0.0
        %2973 = vmatpush.msra.mxu0 0.0
        %2974 = vmatpush.msra.mxu0 0.0
        %2975 = vmatpush.msra.mxu0 0.0
        %2976 = vmatpush.msra.mxu0 0.0
        %2977 = vmatpush.msra.mxu0 0.0
        %2978 = vmatpush.msra.mxu0 0.0
        %2979 = vmatpush.msra.mxu0 0.0
        %2980 = vmatpush.msra.mxu0 0.0
        %2981 = vmatpush.msra.mxu0 0.0
        %2982 = vmatpush.msra.mxu0 0.0
        %2983 = vmatpush.msra.mxu0 0.0
        %2984 = vmatpush.msra.mxu0 0.0
        %v2985 = vand.u32 %v1769, 4294901760
        %v2986 = vsub.f32 %v1769, %v2985
        %v2987 = vand.u32 %v2986, 4294901760
        %2988 = vmatpush.msra.mxu0 %v2987
        %v2989 = vand.u32 %v1765, 4294901760
        %v2990 = vsub.f32 %v1765, %v2989
        %v2991 = vand.u32 %v2990, 4294901760
        %2992 = vmatpush.msra.mxu0 %v2991
        %v2993 = vand.u32 %v1884, 4294901760
        %2994 = vmatmul.f32.gmra.mxu0 %v2993
        %v2995 = vpop.f32.mrf.mxu0
        %v2996 = vadd.f32 %v2963, %v2995
        %v2997 = vand.u32 %v1887, 4294901760
        %2998 = vmatmul.f32.gmra.mxu0 %v2997
        %v2999 = vpop.f32.mrf.mxu0
        %v3000 = vadd.f32 %v2969, %v2999
        %3001 = vdwg.mxu0
        %3002 = vmatpush.msra.mxu0 0.0
        %3003 = vmatpush.msra.mxu0 0.0
        %3004 = vmatpush.msra.mxu0 0.0
        %3005 = vmatpush.msra.mxu0 0.0
        %3006 = vmatpush.msra.mxu0 0.0
        %3007 = vmatpush.msra.mxu0 0.0
        %3008 = vmatpush.msra.mxu0 0.0
        %3009 = vmatpush.msra.mxu0 0.0
        %3010 = vmatpush.msra.mxu0 0.0
        %3011 = vmatpush.msra.mxu0 0.0
        %3012 = vmatpush.msra.mxu0 0.0
        %3013 = vmatpush.msra.mxu0 0.0
        %3014 = vmatpush.msra.mxu0 0.0
        %3015 = vmatpush.msra.mxu0 0.0
        %v3016 = vand.u32 %v1769, 4294901760
        %3017 = vmatpush.msra.mxu0 %v3016
        %v3018 = vand.u32 %v1765, 4294901760
        %3019 = vmatpush.msra.mxu0 %v3018
        %v3020 = vand.u32 %v1884, 4294901760
        %3021 = vmatmul.f32.gmra.mxu0 %v3020
        %v3022 = vpop.f32.mrf.mxu0
        %v3023 = vadd.f32 %v2996, %v3022
        %v3024 = vand.u32 %v1887, 4294901760
        %3025 = vmatmul.f32.gmra.mxu0 %v3024
        %v3026 = vpop.f32.mrf.mxu0
        %v3027 = vadd.f32 %v3000, %v3026
        %3028 = vdwg.mxu0
        %3029 = vmatpush.msra.mxu0 0.0
        %3030 = vmatpush.msra.mxu0 0.0
        %3031 = vmatpush.msra.mxu0 0.0
        %3032 = vmatpush.msra.mxu0 0.0
        %3033 = vmatpush.msra.mxu0 0.0
        %3034 = vmatpush.msra.mxu0 0.0
        %3035 = vmatpush.msra.mxu0 0.0
        %3036 = vmatpush.msra.mxu0 0.0
        %3037 = vmatpush.msra.mxu0 0.0
        %3038 = vmatpush.msra.mxu0 0.0
        %3039 = vmatpush.msra.mxu0 0.0
        %3040 = vmatpush.msra.mxu0 0.0
        %3041 = vmatpush.msra.mxu0 0.0
        %3042 = vmatpush.msra.mxu0 0.0
        %v3043 = vand.u32 %v1777, 4294901760
        %3044 = vmatpush.msra.mxu0 %v3043
        %v3045 = vand.u32 %v1773, 4294901760
        %3046 = vmatpush.msra.mxu0 %v3045
        %v3047 = vand.u32 %v1884, 4294901760
        %v3048 = vsub.f32 %v1884, %v3047
        %v3049 = vand.u32 %v3048, 4294901760
        %v3050 = vsub.f32 %v3048, %v3049
        %v3051 = vand.u32 %v3050, 4294901760
        %3052 = vmatmul.f32.gmra.mxu0 %v3051
        %v3053 = vpop.f32.mrf.mxu0
        %v3054 = vadd.f32 0.0, %v3053
        %v3055 = vand.u32 %v1887, 4294901760
        %v3056 = vsub.f32 %v1887, %v3055
        %v3057 = vand.u32 %v3056, 4294901760
        %v3058 = vsub.f32 %v3056, %v3057
        %v3059 = vand.u32 %v3058, 4294901760
        %3060 = vmatmul.f32.gmra.mxu0 %v3059
        %v3061 = vpop.f32.mrf.mxu0
        %v3062 = vadd.f32 0.0, %v3061
        %3063 = vdwg.mxu0
        %3064 = vmatpush.msra.mxu0 0.0
        %3065 = vmatpush.msra.mxu0 0.0
        %3066 = vmatpush.msra.mxu0 0.0
        %3067 = vmatpush.msra.mxu0 0.0
        %3068 = vmatpush.msra.mxu0 0.0
        %3069 = vmatpush.msra.mxu0 0.0
        %3070 = vmatpush.msra.mxu0 0.0
        %3071 = vmatpush.msra.mxu0 0.0
        %3072 = vmatpush.msra.mxu0 0.0
        %3073 = vmatpush.msra.mxu0 0.0
        %3074 = vmatpush.msra.mxu0 0.0
        %3075 = vmatpush.msra.mxu0 0.0
        %3076 = vmatpush.msra.mxu0 0.0
        %3077 = vmatpush.msra.mxu0 0.0
        %v3078 = vand.u32 %v1777, 4294901760
        %v3079 = vsub.f32 %v1777, %v3078
        %v3080 = vand.u32 %v3079, 4294901760
        %v3081 = vsub.f32 %v3079, %v3080
        %v3082 = vand.u32 %v3081, 4294901760
        %3083 = vmatpush.msra.mxu0 %v3082
        %v3084 = vand.u32 %v1773, 4294901760
        %v3085 = vsub.f32 %v1773, %v3084
        %v3086 = vand.u32 %v3085, 4294901760
        %v3087 = vsub.f32 %v3085, %v3086
        %v3088 = vand.u32 %v3087, 4294901760
        %3089 = vmatpush.msra.mxu0 %v3088
        %v3090 = vand.u32 %v1884, 4294901760
        %3091 = vmatmul.f32.gmra.mxu0 %v3090
        %v3092 = vpop.f32.mrf.mxu0
        %v3093 = vadd.f32 %v3054, %v3092
        %v3094 = vand.u32 %v1887, 4294901760
        %3095 = vmatmul.f32.gmra.mxu0 %v3094
        %v3096 = vpop.f32.mrf.mxu0
        %v3097 = vadd.f32 %v3062, %v3096
        %3098 = vdwg.mxu0
        %3099 = vmatpush.msra.mxu0 0.0
        %3100 = vmatpush.msra.mxu0 0.0
        %3101 = vmatpush.msra.mxu0 0.0
        %3102 = vmatpush.msra.mxu0 0.0
        %3103 = vmatpush.msra.mxu0 0.0
        %3104 = vmatpush.msra.mxu0 0.0
        %3105 = vmatpush.msra.mxu0 0.0
        %3106 = vmatpush.msra.mxu0 0.0
        %3107 = vmatpush.msra.mxu0 0.0
        %3108 = vmatpush.msra.mxu0 0.0
        %3109 = vmatpush.msra.mxu0 0.0
        %3110 = vmatpush.msra.mxu0 0.0
        %3111 = vmatpush.msra.mxu0 0.0
        %3112 = vmatpush.msra.mxu0 0.0
        %v3113 = vand.u32 %v1777, 4294901760
        %v3114 = vsub.f32 %v1777, %v3113
        %3115 = vmatpush.msra.mxu0 %v3114
        %v3116 = vand.u32 %v1773, 4294901760
        %v3117 = vsub.f32 %v1773, %v3116
        %3118 = vmatpush.msra.mxu0 %v3117
        %v3119 = vand.u32 %v1884, 4294901760
        %v3120 = vsub.f32 %v1884, %v3119
        %3121 = vmatmul.f32.gmra.mxu0 %v3120
        %v3122 = vpop.f32.mrf.mxu0
        %v3123 = vadd.f32 %v3093, %v3122
        %v3124 = vand.u32 %v1887, 4294901760
        %v3125 = vsub.f32 %v1887, %v3124
        %3126 = vmatmul.f32.gmra.mxu0 %v3125
        %v3127 = vpop.f32.mrf.mxu0
        %v3128 = vadd.f32 %v3097, %v3127
        %3129 = vdwg.mxu0
        %3130 = vmatpush.msra.mxu0 0.0
        %3131 = vmatpush.msra.mxu0 0.0
        %3132 = vmatpush.msra.mxu0 0.0
        %3133 = vmatpush.msra.mxu0 0.0
        %3134 = vmatpush.msra.mxu0 0.0
        %3135 = vmatpush.msra.mxu0 0.0
        %3136 = vmatpush.msra.mxu0 0.0
        %3137 = vmatpush.msra.mxu0 0.0
        %3138 = vmatpush.msra.mxu0 0.0
        %3139 = vmatpush.msra.mxu0 0.0
        %3140 = vmatpush.msra.mxu0 0.0
        %3141 = vmatpush.msra.mxu0 0.0
        %3142 = vmatpush.msra.mxu0 0.0
        %3143 = vmatpush.msra.mxu0 0.0
        %v3144 = vand.u32 %v1777, 4294901760
        %3145 = vmatpush.msra.mxu0 %v3144
        %v3146 = vand.u32 %v1773, 4294901760
        %3147 = vmatpush.msra.mxu0 %v3146
        %v3148 = vand.u32 %v1884, 4294901760
        %v3149 = vsub.f32 %v1884, %v3148
        %v3150 = vand.u32 %v3149, 4294901760
        %3151 = vmatmul.f32.gmra.mxu0 %v3150
        %v3152 = vpop.f32.mrf.mxu0
        %v3153 = vadd.f32 %v3123, %v3152
        %v3154 = vand.u32 %v1887, 4294901760
        %v3155 = vsub.f32 %v1887, %v3154
        %v3156 = vand.u32 %v3155, 4294901760
        %3157 = vmatmul.f32.gmra.mxu0 %v3156
        %v3158 = vpop.f32.mrf.mxu0
        %v3159 = vadd.f32 %v3128, %v3158
        %3160 = vdwg.mxu0
        %3161 = vmatpush.msra.mxu0 0.0
        %3162 = vmatpush.msra.mxu0 0.0
        %3163 = vmatpush.msra.mxu0 0.0
        %3164 = vmatpush.msra.mxu0 0.0
        %3165 = vmatpush.msra.mxu0 0.0
        %3166 = vmatpush.msra.mxu0 0.0
        %3167 = vmatpush.msra.mxu0 0.0
        %3168 = vmatpush.msra.mxu0 0.0
        %3169 = vmatpush.msra.mxu0 0.0
        %3170 = vmatpush.msra.mxu0 0.0
        %3171 = vmatpush.msra.mxu0 0.0
        %3172 = vmatpush.msra.mxu0 0.0
        %3173 = vmatpush.msra.mxu0 0.0
        %3174 = vmatpush.msra.mxu0 0.0
        %v3175 = vand.u32 %v1777, 4294901760
        %v3176 = vsub.f32 %v1777, %v3175
        %v3177 = vand.u32 %v3176, 4294901760
        %3178 = vmatpush.msra.mxu0 %v3177
        %v3179 = vand.u32 %v1773, 4294901760
        %v3180 = vsub.f32 %v1773, %v3179
        %v3181 = vand.u32 %v3180, 4294901760
        %3182 = vmatpush.msra.mxu0 %v3181
        %v3183 = vand.u32 %v1884, 4294901760
        %3184 = vmatmul.f32.gmra.mxu0 %v3183
        %v3185 = vpop.f32.mrf.mxu0
        %v3186 = vadd.f32 %v3153, %v3185
        %v3187 = vand.u32 %v1887, 4294901760
        %3188 = vmatmul.f32.gmra.mxu0 %v3187
        %v3189 = vpop.f32.mrf.mxu0
        %v3190 = vadd.f32 %v3159, %v3189
        %3191 = vdwg.mxu0
        %3192 = vmatpush.msra.mxu0 0.0
        %3193 = vmatpush.msra.mxu0 0.0
        %3194 = vmatpush.msra.mxu0 0.0
        %3195 = vmatpush.msra.mxu0 0.0
        %3196 = vmatpush.msra.mxu0 0.0
        %3197 = vmatpush.msra.mxu0 0.0
        %3198 = vmatpush.msra.mxu0 0.0
        %3199 = vmatpush.msra.mxu0 0.0
        %3200 = vmatpush.msra.mxu0 0.0
        %3201 = vmatpush.msra.mxu0 0.0
        %3202 = vmatpush.msra.mxu0 0.0
        %3203 = vmatpush.msra.mxu0 0.0
        %3204 = vmatpush.msra.mxu0 0.0
        %3205 = vmatpush.msra.mxu0 0.0
        %v3206 = vand.u32 %v1777, 4294901760
        %3207 = vmatpush.msra.mxu0 %v3206
        %v3208 = vand.u32 %v1773, 4294901760
        %3209 = vmatpush.msra.mxu0 %v3208
        %v3210 = vand.u32 %v1884, 4294901760
        %3211 = vmatmul.f32.gmra.mxu0 %v3210
        %v3212 = vpop.f32.mrf.mxu0
        %v3213 = vadd.f32 %v3186, %v3212
        %v3214 = vand.u32 %v1887, 4294901760
        %3215 = vmatmul.f32.gmra.mxu0 %v3214
        %v3216 = vpop.f32.mrf.mxu0
        %v3217 = vadd.f32 %v3190, %v3216
        %3218 = vdwg.mxu0
        %3219 = vmatpush.msra.mxu0 0.0
        %3220 = vmatpush.msra.mxu0 0.0
        %3221 = vmatpush.msra.mxu0 0.0
        %3222 = vmatpush.msra.mxu0 0.0
        %3223 = vmatpush.msra.mxu0 0.0
        %3224 = vmatpush.msra.mxu0 0.0
        %3225 = vmatpush.msra.mxu0 0.0
        %3226 = vmatpush.msra.mxu0 0.0
        %3227 = vmatpush.msra.mxu0 0.0
        %3228 = vmatpush.msra.mxu0 0.0
        %3229 = vmatpush.msra.mxu0 0.0
        %3230 = vmatpush.msra.mxu0 0.0
        %3231 = vmatpush.msra.mxu0 0.0
        %3232 = vmatpush.msra.mxu0 0.0
        %v3233 = vand.u32 %v1785, 4294901760
        %3234 = vmatpush.msra.mxu0 %v3233
        %v3235 = vand.u32 %v1781, 4294901760
        %3236 = vmatpush.msra.mxu0 %v3235
        %v3237 = vand.u32 %v1884, 4294901760
        %v3238 = vsub.f32 %v1884, %v3237
        %v3239 = vand.u32 %v3238, 4294901760
        %v3240 = vsub.f32 %v3238, %v3239
        %v3241 = vand.u32 %v3240, 4294901760
        %3242 = vmatmul.f32.gmra.mxu0 %v3241
        %v3243 = vpop.f32.mrf.mxu0
        %v3244 = vadd.f32 0.0, %v3243
        %v3245 = vand.u32 %v1887, 4294901760
        %v3246 = vsub.f32 %v1887, %v3245
        %v3247 = vand.u32 %v3246, 4294901760
        %v3248 = vsub.f32 %v3246, %v3247
        %v3249 = vand.u32 %v3248, 4294901760
        %3250 = vmatmul.f32.gmra.mxu0 %v3249
        %v3251 = vpop.f32.mrf.mxu0
        %v3252 = vadd.f32 0.0, %v3251
        %3253 = vdwg.mxu0
        %3254 = vmatpush.msra.mxu0 0.0
        %3255 = vmatpush.msra.mxu0 0.0
        %3256 = vmatpush.msra.mxu0 0.0
        %3257 = vmatpush.msra.mxu0 0.0
        %3258 = vmatpush.msra.mxu0 0.0
        %3259 = vmatpush.msra.mxu0 0.0
        %3260 = vmatpush.msra.mxu0 0.0
        %3261 = vmatpush.msra.mxu0 0.0
        %3262 = vmatpush.msra.mxu0 0.0
        %3263 = vmatpush.msra.mxu0 0.0
        %3264 = vmatpush.msra.mxu0 0.0
        %3265 = vmatpush.msra.mxu0 0.0
        %3266 = vmatpush.msra.mxu0 0.0
        %3267 = vmatpush.msra.mxu0 0.0
        %v3268 = vand.u32 %v1785, 4294901760
        %v3269 = vsub.f32 %v1785, %v3268
        %v3270 = vand.u32 %v3269, 4294901760
        %v3271 = vsub.f32 %v3269, %v3270
        %v3272 = vand.u32 %v3271, 4294901760
        %3273 = vmatpush.msra.mxu0 %v3272
        %v3274 = vand.u32 %v1781, 4294901760
        %v3275 = vsub.f32 %v1781, %v3274
        %v3276 = vand.u32 %v3275, 4294901760
        %v3277 = vsub.f32 %v3275, %v3276
        %v3278 = vand.u32 %v3277, 4294901760
        %3279 = vmatpush.msra.mxu0 %v3278
        %v3280 = vand.u32 %v1884, 4294901760
        %3281 = vmatmul.f32.gmra.mxu0 %v3280
        %v3282 = vpop.f32.mrf.mxu0
        %v3283 = vadd.f32 %v3244, %v3282
        %v3284 = vand.u32 %v1887, 4294901760
        %3285 = vmatmul.f32.gmra.mxu0 %v3284
        %v3286 = vpop.f32.mrf.mxu0
        %v3287 = vadd.f32 %v3252, %v3286
        %3288 = vdwg.mxu0
        %3289 = vmatpush.msra.mxu0 0.0
        %3290 = vmatpush.msra.mxu0 0.0
        %3291 = vmatpush.msra.mxu0 0.0
        %3292 = vmatpush.msra.mxu0 0.0
        %3293 = vmatpush.msra.mxu0 0.0
        %3294 = vmatpush.msra.mxu0 0.0
        %3295 = vmatpush.msra.mxu0 0.0
        %3296 = vmatpush.msra.mxu0 0.0
        %3297 = vmatpush.msra.mxu0 0.0
        %3298 = vmatpush.msra.mxu0 0.0
        %3299 = vmatpush.msra.mxu0 0.0
        %3300 = vmatpush.msra.mxu0 0.0
        %3301 = vmatpush.msra.mxu0 0.0
        %3302 = vmatpush.msra.mxu0 0.0
        %v3303 = vand.u32 %v1785, 4294901760
        %v3304 = vsub.f32 %v1785, %v3303
        %3305 = vmatpush.msra.mxu0 %v3304
        %v3306 = vand.u32 %v1781, 4294901760
        %v3307 = vsub.f32 %v1781, %v3306
        %3308 = vmatpush.msra.mxu0 %v3307
        %v3309 = vand.u32 %v1884, 4294901760
        %v3310 = vsub.f32 %v1884, %v3309
        %3311 = vmatmul.f32.gmra.mxu0 %v3310
        %v3312 = vpop.f32.mrf.mxu0
        %v3313 = vadd.f32 %v3283, %v3312
        %v3314 = vand.u32 %v1887, 4294901760
        %v3315 = vsub.f32 %v1887, %v3314
        %3316 = vmatmul.f32.gmra.mxu0 %v3315
        %v3317 = vpop.f32.mrf.mxu0
        %v3318 = vadd.f32 %v3287, %v3317
        %3319 = vdwg.mxu0
        %3320 = vmatpush.msra.mxu0 0.0
        %3321 = vmatpush.msra.mxu0 0.0
        %3322 = vmatpush.msra.mxu0 0.0
        %3323 = vmatpush.msra.mxu0 0.0
        %3324 = vmatpush.msra.mxu0 0.0
        %3325 = vmatpush.msra.mxu0 0.0
        %3326 = vmatpush.msra.mxu0 0.0
        %3327 = vmatpush.msra.mxu0 0.0
        %3328 = vmatpush.msra.mxu0 0.0
        %3329 = vmatpush.msra.mxu0 0.0
        %3330 = vmatpush.msra.mxu0 0.0
        %3331 = vmatpush.msra.mxu0 0.0
        %3332 = vmatpush.msra.mxu0 0.0
        %3333 = vmatpush.msra.mxu0 0.0
        %v3334 = vand.u32 %v1785, 4294901760
        %3335 = vmatpush.msra.mxu0 %v3334
        %v3336 = vand.u32 %v1781, 4294901760
        %3337 = vmatpush.msra.mxu0 %v3336
        %v3338 = vand.u32 %v1884, 4294901760
        %v3339 = vsub.f32 %v1884, %v3338
        %v3340 = vand.u32 %v3339, 4294901760
        %3341 = vmatmul.f32.gmra.mxu0 %v3340
        %v3342 = vpop.f32.mrf.mxu0
        %v3343 = vadd.f32 %v3313, %v3342
        %v3344 = vand.u32 %v1887, 4294901760
        %v3345 = vsub.f32 %v1887, %v3344
        %v3346 = vand.u32 %v3345, 4294901760
        %3347 = vmatmul.f32.gmra.mxu0 %v3346
        %v3348 = vpop.f32.mrf.mxu0
        %v3349 = vadd.f32 %v3318, %v3348
        %3350 = vdwg.mxu0
        %3351 = vmatpush.msra.mxu0 0.0
        %3352 = vmatpush.msra.mxu0 0.0
        %3353 = vmatpush.msra.mxu0 0.0
        %3354 = vmatpush.msra.mxu0 0.0
        %3355 = vmatpush.msra.mxu0 0.0
        %3356 = vmatpush.msra.mxu0 0.0
        %3357 = vmatpush.msra.mxu0 0.0
        %3358 = vmatpush.msra.mxu0 0.0
        %3359 = vmatpush.msra.mxu0 0.0
        %3360 = vmatpush.msra.mxu0 0.0
        %3361 = vmatpush.msra.mxu0 0.0
        %3362 = vmatpush.msra.mxu0 0.0
        %3363 = vmatpush.msra.mxu0 0.0
        %3364 = vmatpush.msra.mxu0 0.0
        %v3365 = vand.u32 %v1785, 4294901760
        %v3366 = vsub.f32 %v1785, %v3365
        %v3367 = vand.u32 %v3366, 4294901760
        %3368 = vmatpush.msra.mxu0 %v3367
        %v3369 = vand.u32 %v1781, 4294901760
        %v3370 = vsub.f32 %v1781, %v3369
        %v3371 = vand.u32 %v3370, 4294901760
        %3372 = vmatpush.msra.mxu0 %v3371
        %v3373 = vand.u32 %v1884, 4294901760
        %3374 = vmatmul.f32.gmra.mxu0 %v3373
        %v3375 = vpop.f32.mrf.mxu0
        %v3376 = vadd.f32 %v3343, %v3375
        %v3377 = vand.u32 %v1887, 4294901760
        %3378 = vmatmul.f32.gmra.mxu0 %v3377
        %v3379 = vpop.f32.mrf.mxu0
        %v3380 = vadd.f32 %v3349, %v3379
        %3381 = vdwg.mxu0
        %3382 = vmatpush.msra.mxu0 0.0
        %3383 = vmatpush.msra.mxu0 0.0
        %3384 = vmatpush.msra.mxu0 0.0
        %3385 = vmatpush.msra.mxu0 0.0
        %3386 = vmatpush.msra.mxu0 0.0
        %3387 = vmatpush.msra.mxu0 0.0
        %3388 = vmatpush.msra.mxu0 0.0
        %3389 = vmatpush.msra.mxu0 0.0
        %3390 = vmatpush.msra.mxu0 0.0
        %3391 = vmatpush.msra.mxu0 0.0
        %3392 = vmatpush.msra.mxu0 0.0
        %3393 = vmatpush.msra.mxu0 0.0
        %3394 = vmatpush.msra.mxu0 0.0
        %3395 = vmatpush.msra.mxu0 0.0
        %v3396 = vand.u32 %v1785, 4294901760
        %3397 = vmatpush.msra.mxu0 %v3396
        %v3398 = vand.u32 %v1781, 4294901760
        %3399 = vmatpush.msra.mxu0 %v3398
        %v3400 = vand.u32 %v1884, 4294901760
        %3401 = vmatmul.f32.gmra.mxu0 %v3400
        %v3402 = vpop.f32.mrf.mxu0
        %v3403 = vadd.f32 %v3376, %v3402
        %v3404 = vand.u32 %v1887, 4294901760
        %3405 = vmatmul.f32.gmra.mxu0 %v3404
        %v3406 = vpop.f32.mrf.mxu0
        %v3407 = vadd.f32 %v3380, %v3406
        %3408 = vdwg.mxu0
        %3409 = vmatpush.msra.mxu0 0.0
        %3410 = vmatpush.msra.mxu0 0.0
        %3411 = vmatpush.msra.mxu0 0.0
        %3412 = vmatpush.msra.mxu0 0.0
        %3413 = vmatpush.msra.mxu0 0.0
        %3414 = vmatpush.msra.mxu0 0.0
        %3415 = vmatpush.msra.mxu0 0.0
        %3416 = vmatpush.msra.mxu0 0.0
        %3417 = vmatpush.msra.mxu0 0.0
        %3418 = vmatpush.msra.mxu0 0.0
        %3419 = vmatpush.msra.mxu0 0.0
        %3420 = vmatpush.msra.mxu0 0.0
        %3421 = vmatpush.msra.mxu0 0.0
        %3422 = vmatpush.msra.mxu0 0.0
        %v3423 = vand.u32 %v1793, 4294901760
        %3424 = vmatpush.msra.mxu0 %v3423
        %v3425 = vand.u32 %v1789, 4294901760
        %3426 = vmatpush.msra.mxu0 %v3425
        %v3427 = vand.u32 %v1884, 4294901760
        %v3428 = vsub.f32 %v1884, %v3427
        %v3429 = vand.u32 %v3428, 4294901760
        %v3430 = vsub.f32 %v3428, %v3429
        %v3431 = vand.u32 %v3430, 4294901760
        %3432 = vmatmul.f32.gmra.mxu0 %v3431
        %v3433 = vpop.f32.mrf.mxu0
        %v3434 = vadd.f32 0.0, %v3433
        %v3435 = vand.u32 %v1887, 4294901760
        %v3436 = vsub.f32 %v1887, %v3435
        %v3437 = vand.u32 %v3436, 4294901760
        %v3438 = vsub.f32 %v3436, %v3437
        %v3439 = vand.u32 %v3438, 4294901760
        %3440 = vmatmul.f32.gmra.mxu0 %v3439
        %v3441 = vpop.f32.mrf.mxu0
        %v3442 = vadd.f32 0.0, %v3441
        %3443 = vdwg.mxu0
        %3444 = vmatpush.msra.mxu0 0.0
        %3445 = vmatpush.msra.mxu0 0.0
        %3446 = vmatpush.msra.mxu0 0.0
        %3447 = vmatpush.msra.mxu0 0.0
        %3448 = vmatpush.msra.mxu0 0.0
        %3449 = vmatpush.msra.mxu0 0.0
        %3450 = vmatpush.msra.mxu0 0.0
        %3451 = vmatpush.msra.mxu0 0.0
        %3452 = vmatpush.msra.mxu0 0.0
        %3453 = vmatpush.msra.mxu0 0.0
        %3454 = vmatpush.msra.mxu0 0.0
        %3455 = vmatpush.msra.mxu0 0.0
        %3456 = vmatpush.msra.mxu0 0.0
        %3457 = vmatpush.msra.mxu0 0.0
        %v3458 = vand.u32 %v1793, 4294901760
        %v3459 = vsub.f32 %v1793, %v3458
        %v3460 = vand.u32 %v3459, 4294901760
        %v3461 = vsub.f32 %v3459, %v3460
        %v3462 = vand.u32 %v3461, 4294901760
        %3463 = vmatpush.msra.mxu0 %v3462
        %v3464 = vand.u32 %v1789, 4294901760
        %v3465 = vsub.f32 %v1789, %v3464
        %v3466 = vand.u32 %v3465, 4294901760
        %v3467 = vsub.f32 %v3465, %v3466
        %v3468 = vand.u32 %v3467, 4294901760
        %3469 = vmatpush.msra.mxu0 %v3468
        %v3470 = vand.u32 %v1884, 4294901760
        %3471 = vmatmul.f32.gmra.mxu0 %v3470
        %v3472 = vpop.f32.mrf.mxu0
        %v3473 = vadd.f32 %v3434, %v3472
        %v3474 = vand.u32 %v1887, 4294901760
        %3475 = vmatmul.f32.gmra.mxu0 %v3474
        %v3476 = vpop.f32.mrf.mxu0
        %v3477 = vadd.f32 %v3442, %v3476
        %3478 = vdwg.mxu0
        %3479 = vmatpush.msra.mxu0 0.0
        %3480 = vmatpush.msra.mxu0 0.0
        %3481 = vmatpush.msra.mxu0 0.0
        %3482 = vmatpush.msra.mxu0 0.0
        %3483 = vmatpush.msra.mxu0 0.0
        %3484 = vmatpush.msra.mxu0 0.0
        %3485 = vmatpush.msra.mxu0 0.0
        %3486 = vmatpush.msra.mxu0 0.0
        %3487 = vmatpush.msra.mxu0 0.0
        %3488 = vmatpush.msra.mxu0 0.0
        %3489 = vmatpush.msra.mxu0 0.0
        %3490 = vmatpush.msra.mxu0 0.0
        %3491 = vmatpush.msra.mxu0 0.0
        %3492 = vmatpush.msra.mxu0 0.0
        %v3493 = vand.u32 %v1793, 4294901760
        %v3494 = vsub.f32 %v1793, %v3493
        %3495 = vmatpush.msra.mxu0 %v3494
        %v3496 = vand.u32 %v1789, 4294901760
        %v3497 = vsub.f32 %v1789, %v3496
        %3498 = vmatpush.msra.mxu0 %v3497
        %v3499 = vand.u32 %v1884, 4294901760
        %v3500 = vsub.f32 %v1884, %v3499
        %3501 = vmatmul.f32.gmra.mxu0 %v3500
        %v3502 = vpop.f32.mrf.mxu0
        %v3503 = vadd.f32 %v3473, %v3502
        %v3504 = vand.u32 %v1887, 4294901760
        %v3505 = vsub.f32 %v1887, %v3504
        %3506 = vmatmul.f32.gmra.mxu0 %v3505
        %v3507 = vpop.f32.mrf.mxu0
        %v3508 = vadd.f32 %v3477, %v3507
        %3509 = vdwg.mxu0
        %3510 = vmatpush.msra.mxu0 0.0
        %3511 = vmatpush.msra.mxu0 0.0
        %3512 = vmatpush.msra.mxu0 0.0
        %3513 = vmatpush.msra.mxu0 0.0
        %3514 = vmatpush.msra.mxu0 0.0
        %3515 = vmatpush.msra.mxu0 0.0
        %3516 = vmatpush.msra.mxu0 0.0
        %3517 = vmatpush.msra.mxu0 0.0
        %3518 = vmatpush.msra.mxu0 0.0
        %3519 = vmatpush.msra.mxu0 0.0
        %3520 = vmatpush.msra.mxu0 0.0
        %3521 = vmatpush.msra.mxu0 0.0
        %3522 = vmatpush.msra.mxu0 0.0
        %3523 = vmatpush.msra.mxu0 0.0
        %v3524 = vand.u32 %v1793, 4294901760
        %3525 = vmatpush.msra.mxu0 %v3524
        %v3526 = vand.u32 %v1789, 4294901760
        %3527 = vmatpush.msra.mxu0 %v3526
        %v3528 = vand.u32 %v1884, 4294901760
        %v3529 = vsub.f32 %v1884, %v3528
        %v3530 = vand.u32 %v3529, 4294901760
        %3531 = vmatmul.f32.gmra.mxu0 %v3530
        %v3532 = vpop.f32.mrf.mxu0
        %v3533 = vadd.f32 %v3503, %v3532
        %v3534 = vand.u32 %v1887, 4294901760
        %v3535 = vsub.f32 %v1887, %v3534
        %v3536 = vand.u32 %v3535, 4294901760
        %3537 = vmatmul.f32.gmra.mxu0 %v3536
        %v3538 = vpop.f32.mrf.mxu0
        %v3539 = vadd.f32 %v3508, %v3538
        %3540 = vdwg.mxu0
        %3541 = vmatpush.msra.mxu0 0.0
        %3542 = vmatpush.msra.mxu0 0.0
        %3543 = vmatpush.msra.mxu0 0.0
        %3544 = vmatpush.msra.mxu0 0.0
        %3545 = vmatpush.msra.mxu0 0.0
        %3546 = vmatpush.msra.mxu0 0.0
        %3547 = vmatpush.msra.mxu0 0.0
        %3548 = vmatpush.msra.mxu0 0.0
        %3549 = vmatpush.msra.mxu0 0.0
        %3550 = vmatpush.msra.mxu0 0.0
        %3551 = vmatpush.msra.mxu0 0.0
        %3552 = vmatpush.msra.mxu0 0.0
        %3553 = vmatpush.msra.mxu0 0.0
        %3554 = vmatpush.msra.mxu0 0.0
        %v3555 = vand.u32 %v1793, 4294901760
        %v3556 = vsub.f32 %v1793, %v3555
        %v3557 = vand.u32 %v3556, 4294901760
        %3558 = vmatpush.msra.mxu0 %v3557
        %v3559 = vand.u32 %v1789, 4294901760
        %v3560 = vsub.f32 %v1789, %v3559
        %v3561 = vand.u32 %v3560, 4294901760
        %3562 = vmatpush.msra.mxu0 %v3561
        %v3563 = vand.u32 %v1884, 4294901760
        %3564 = vmatmul.f32.gmra.mxu0 %v3563
        %v3565 = vpop.f32.mrf.mxu0
        %v3566 = vadd.f32 %v3533, %v3565
        %v3567 = vand.u32 %v1887, 4294901760
        %3568 = vmatmul.f32.gmra.mxu0 %v3567
        %v3569 = vpop.f32.mrf.mxu0
        %v3570 = vadd.f32 %v3539, %v3569
        %3571 = vdwg.mxu0
        %3572 = vmatpush.msra.mxu0 0.0
        %3573 = vmatpush.msra.mxu0 0.0
        %3574 = vmatpush.msra.mxu0 0.0
        %3575 = vmatpush.msra.mxu0 0.0
        %3576 = vmatpush.msra.mxu0 0.0
        %3577 = vmatpush.msra.mxu0 0.0
        %3578 = vmatpush.msra.mxu0 0.0
        %3579 = vmatpush.msra.mxu0 0.0
        %3580 = vmatpush.msra.mxu0 0.0
        %3581 = vmatpush.msra.mxu0 0.0
        %3582 = vmatpush.msra.mxu0 0.0
        %3583 = vmatpush.msra.mxu0 0.0
        %3584 = vmatpush.msra.mxu0 0.0
        %3585 = vmatpush.msra.mxu0 0.0
        %v3586 = vand.u32 %v1793, 4294901760
        %3587 = vmatpush.msra.mxu0 %v3586
        %v3588 = vand.u32 %v1789, 4294901760
        %3589 = vmatpush.msra.mxu0 %v3588
        %v3590 = vand.u32 %v1884, 4294901760
        %3591 = vmatmul.f32.gmra.mxu0 %v3590
        %v3592 = vpop.f32.mrf.mxu0
        %v3593 = vadd.f32 %v3566, %v3592
        %v3594 = vand.u32 %v1887, 4294901760
        %3595 = vmatmul.f32.gmra.mxu0 %v3594
        %v3596 = vpop.f32.mrf.mxu0
        %v3597 = vadd.f32 %v3570, %v3596
        %3598 = vdwg.mxu0
        %3599 = vmatpush.msra.mxu0 0.0
        %3600 = vmatpush.msra.mxu0 0.0
        %3601 = vmatpush.msra.mxu0 0.0
        %3602 = vmatpush.msra.mxu0 0.0
        %3603 = vmatpush.msra.mxu0 0.0
        %3604 = vmatpush.msra.mxu0 0.0
        %3605 = vmatpush.msra.mxu0 0.0
        %3606 = vmatpush.msra.mxu0 0.0
        %3607 = vmatpush.msra.mxu0 0.0
        %3608 = vmatpush.msra.mxu0 0.0
        %3609 = vmatpush.msra.mxu0 0.0
        %3610 = vmatpush.msra.mxu0 0.0
        %3611 = vmatpush.msra.mxu0 0.0
        %3612 = vmatpush.msra.mxu0 0.0
        %v3613 = vand.u32 %v1801, 4294901760
        %3614 = vmatpush.msra.mxu0 %v3613
        %v3615 = vand.u32 %v1797, 4294901760
        %3616 = vmatpush.msra.mxu0 %v3615
        %v3617 = vand.u32 %v1884, 4294901760
        %v3618 = vsub.f32 %v1884, %v3617
        %v3619 = vand.u32 %v3618, 4294901760
        %v3620 = vsub.f32 %v3618, %v3619
        %v3621 = vand.u32 %v3620, 4294901760
        %3622 = vmatmul.f32.gmra.mxu0 %v3621
        %v3623 = vpop.f32.mrf.mxu0
        %v3624 = vadd.f32 0.0, %v3623
        %v3625 = vand.u32 %v1887, 4294901760
        %v3626 = vsub.f32 %v1887, %v3625
        %v3627 = vand.u32 %v3626, 4294901760
        %v3628 = vsub.f32 %v3626, %v3627
        %v3629 = vand.u32 %v3628, 4294901760
        %3630 = vmatmul.f32.gmra.mxu0 %v3629
        %v3631 = vpop.f32.mrf.mxu0
        %v3632 = vadd.f32 0.0, %v3631
        %3633 = vdwg.mxu0
        %3634 = vmatpush.msra.mxu0 0.0
        %3635 = vmatpush.msra.mxu0 0.0
        %3636 = vmatpush.msra.mxu0 0.0
        %3637 = vmatpush.msra.mxu0 0.0
        %3638 = vmatpush.msra.mxu0 0.0
        %3639 = vmatpush.msra.mxu0 0.0
        %3640 = vmatpush.msra.mxu0 0.0
        %3641 = vmatpush.msra.mxu0 0.0
        %3642 = vmatpush.msra.mxu0 0.0
        %3643 = vmatpush.msra.mxu0 0.0
        %3644 = vmatpush.msra.mxu0 0.0
        %3645 = vmatpush.msra.mxu0 0.0
        %3646 = vmatpush.msra.mxu0 0.0
        %3647 = vmatpush.msra.mxu0 0.0
        %v3648 = vand.u32 %v1801, 4294901760
        %v3649 = vsub.f32 %v1801, %v3648
        %v3650 = vand.u32 %v3649, 4294901760
        %v3651 = vsub.f32 %v3649, %v3650
        %v3652 = vand.u32 %v3651, 4294901760
        %3653 = vmatpush.msra.mxu0 %v3652
        %v3654 = vand.u32 %v1797, 4294901760
        %v3655 = vsub.f32 %v1797, %v3654
        %v3656 = vand.u32 %v3655, 4294901760
        %v3657 = vsub.f32 %v3655, %v3656
        %v3658 = vand.u32 %v3657, 4294901760
        %3659 = vmatpush.msra.mxu0 %v3658
        %v3660 = vand.u32 %v1884, 4294901760
        %3661 = vmatmul.f32.gmra.mxu0 %v3660
        %v3662 = vpop.f32.mrf.mxu0
        %v3663 = vadd.f32 %v3624, %v3662
        %v3664 = vand.u32 %v1887, 4294901760
        %3665 = vmatmul.f32.gmra.mxu0 %v3664
        %v3666 = vpop.f32.mrf.mxu0
        %v3667 = vadd.f32 %v3632, %v3666
        %3668 = vdwg.mxu0
        %3669 = vmatpush.msra.mxu0 0.0
        %3670 = vmatpush.msra.mxu0 0.0
        %3671 = vmatpush.msra.mxu0 0.0
        %3672 = vmatpush.msra.mxu0 0.0
        %3673 = vmatpush.msra.mxu0 0.0
        %3674 = vmatpush.msra.mxu0 0.0
        %3675 = vmatpush.msra.mxu0 0.0
        %3676 = vmatpush.msra.mxu0 0.0
        %3677 = vmatpush.msra.mxu0 0.0
        %3678 = vmatpush.msra.mxu0 0.0
        %3679 = vmatpush.msra.mxu0 0.0
        %3680 = vmatpush.msra.mxu0 0.0
        %3681 = vmatpush.msra.mxu0 0.0
        %3682 = vmatpush.msra.mxu0 0.0
        %v3683 = vand.u32 %v1801, 4294901760
        %v3684 = vsub.f32 %v1801, %v3683
        %3685 = vmatpush.msra.mxu0 %v3684
        %v3686 = vand.u32 %v1797, 4294901760
        %v3687 = vsub.f32 %v1797, %v3686
        %3688 = vmatpush.msra.mxu0 %v3687
        %v3689 = vand.u32 %v1884, 4294901760
        %v3690 = vsub.f32 %v1884, %v3689
        %3691 = vmatmul.f32.gmra.mxu0 %v3690
        %v3692 = vpop.f32.mrf.mxu0
        %v3693 = vadd.f32 %v3663, %v3692
        %v3694 = vand.u32 %v1887, 4294901760
        %v3695 = vsub.f32 %v1887, %v3694
        %3696 = vmatmul.f32.gmra.mxu0 %v3695
        %v3697 = vpop.f32.mrf.mxu0
        %v3698 = vadd.f32 %v3667, %v3697
        %3699 = vdwg.mxu0
        %3700 = vmatpush.msra.mxu0 0.0
        %3701 = vmatpush.msra.mxu0 0.0
        %3702 = vmatpush.msra.mxu0 0.0
        %3703 = vmatpush.msra.mxu0 0.0
        %3704 = vmatpush.msra.mxu0 0.0
        %3705 = vmatpush.msra.mxu0 0.0
        %3706 = vmatpush.msra.mxu0 0.0
        %3707 = vmatpush.msra.mxu0 0.0
        %3708 = vmatpush.msra.mxu0 0.0
        %3709 = vmatpush.msra.mxu0 0.0
        %3710 = vmatpush.msra.mxu0 0.0
        %3711 = vmatpush.msra.mxu0 0.0
        %3712 = vmatpush.msra.mxu0 0.0
        %3713 = vmatpush.msra.mxu0 0.0
        %v3714 = vand.u32 %v1801, 4294901760
        %3715 = vmatpush.msra.mxu0 %v3714
        %v3716 = vand.u32 %v1797, 4294901760
        %3717 = vmatpush.msra.mxu0 %v3716
        %v3718 = vand.u32 %v1884, 4294901760
        %v3719 = vsub.f32 %v1884, %v3718
        %v3720 = vand.u32 %v3719, 4294901760
        %3721 = vmatmul.f32.gmra.mxu0 %v3720
        %v3722 = vpop.f32.mrf.mxu0
        %v3723 = vadd.f32 %v3693, %v3722
        %v3724 = vand.u32 %v1887, 4294901760
        %v3725 = vsub.f32 %v1887, %v3724
        %v3726 = vand.u32 %v3725, 4294901760
        %3727 = vmatmul.f32.gmra.mxu0 %v3726
        %v3728 = vpop.f32.mrf.mxu0
        %v3729 = vadd.f32 %v3698, %v3728
        %3730 = vdwg.mxu0
        %3731 = vmatpush.msra.mxu0 0.0
        %3732 = vmatpush.msra.mxu0 0.0
        %3733 = vmatpush.msra.mxu0 0.0
        %3734 = vmatpush.msra.mxu0 0.0
        %3735 = vmatpush.msra.mxu0 0.0
        %3736 = vmatpush.msra.mxu0 0.0
        %3737 = vmatpush.msra.mxu0 0.0
        %3738 = vmatpush.msra.mxu0 0.0
        %3739 = vmatpush.msra.mxu0 0.0
        %3740 = vmatpush.msra.mxu0 0.0
        %3741 = vmatpush.msra.mxu0 0.0
        %3742 = vmatpush.msra.mxu0 0.0
        %3743 = vmatpush.msra.mxu0 0.0
        %3744 = vmatpush.msra.mxu0 0.0
        %v3745 = vand.u32 %v1801, 4294901760
        %v3746 = vsub.f32 %v1801, %v3745
        %v3747 = vand.u32 %v3746, 4294901760
        %3748 = vmatpush.msra.mxu0 %v3747
        %v3749 = vand.u32 %v1797, 4294901760
        %v3750 = vsub.f32 %v1797, %v3749
        %v3751 = vand.u32 %v3750, 4294901760
        %3752 = vmatpush.msra.mxu0 %v3751
        %v3753 = vand.u32 %v1884, 4294901760
        %3754 = vmatmul.f32.gmra.mxu0 %v3753
        %v3755 = vpop.f32.mrf.mxu0
        %v3756 = vadd.f32 %v3723, %v3755
        %v3757 = vand.u32 %v1887, 4294901760
        %3758 = vmatmul.f32.gmra.mxu0 %v3757
        %v3759 = vpop.f32.mrf.mxu0
        %v3760 = vadd.f32 %v3729, %v3759
        %3761 = vdwg.mxu0
        %3762 = vmatpush.msra.mxu0 0.0
        %3763 = vmatpush.msra.mxu0 0.0
        %3764 = vmatpush.msra.mxu0 0.0
        %3765 = vmatpush.msra.mxu0 0.0
        %3766 = vmatpush.msra.mxu0 0.0
        %3767 = vmatpush.msra.mxu0 0.0
        %3768 = vmatpush.msra.mxu0 0.0
        %3769 = vmatpush.msra.mxu0 0.0
        %3770 = vmatpush.msra.mxu0 0.0
        %3771 = vmatpush.msra.mxu0 0.0
        %3772 = vmatpush.msra.mxu0 0.0
        %3773 = vmatpush.msra.mxu0 0.0
        %3774 = vmatpush.msra.mxu0 0.0
        %3775 = vmatpush.msra.mxu0 0.0
        %v3776 = vand.u32 %v1801, 4294901760
        %3777 = vmatpush.msra.mxu0 %v3776
        %v3778 = vand.u32 %v1797, 4294901760
        %3779 = vmatpush.msra.mxu0 %v3778
        %v3780 = vand.u32 %v1884, 4294901760
        %3781 = vmatmul.f32.gmra.mxu0 %v3780
        %v3782 = vpop.f32.mrf.mxu0
        %v3783 = vadd.f32 %v3756, %v3782
        %v3784 = vand.u32 %v1887, 4294901760
        %3785 = vmatmul.f32.gmra.mxu0 %v3784
        %v3786 = vpop.f32.mrf.mxu0
        %v3787 = vadd.f32 %v3760, %v3786
        %3788 = vdwg.mxu0
        %3789 = vmatpush.msra.mxu0 0.0
        %3790 = vmatpush.msra.mxu0 0.0
        %3791 = vmatpush.msra.mxu0 0.0
        %3792 = vmatpush.msra.mxu0 0.0
        %3793 = vmatpush.msra.mxu0 0.0
        %3794 = vmatpush.msra.mxu0 0.0
        %3795 = vmatpush.msra.mxu0 0.0
        %3796 = vmatpush.msra.mxu0 0.0
        %3797 = vmatpush.msra.mxu0 0.0
        %3798 = vmatpush.msra.mxu0 0.0
        %3799 = vmatpush.msra.mxu0 0.0
        %3800 = vmatpush.msra.mxu0 0.0
        %3801 = vmatpush.msra.mxu0 0.0
        %3802 = vmatpush.msra.mxu0 0.0
        %v3803 = vand.u32 %v1809, 4294901760
        %3804 = vmatpush.msra.mxu0 %v3803
        %v3805 = vand.u32 %v1805, 4294901760
        %3806 = vmatpush.msra.mxu0 %v3805
        %v3807 = vand.u32 %v1884, 4294901760
        %v3808 = vsub.f32 %v1884, %v3807
        %v3809 = vand.u32 %v3808, 4294901760
        %v3810 = vsub.f32 %v3808, %v3809
        %v3811 = vand.u32 %v3810, 4294901760
        %3812 = vmatmul.f32.gmra.mxu0 %v3811
        %v3813 = vpop.f32.mrf.mxu0
        %v3814 = vadd.f32 0.0, %v3813
        %v3815 = vand.u32 %v1887, 4294901760
        %v3816 = vsub.f32 %v1887, %v3815
        %v3817 = vand.u32 %v3816, 4294901760
        %v3818 = vsub.f32 %v3816, %v3817
        %v3819 = vand.u32 %v3818, 4294901760
        %3820 = vmatmul.f32.gmra.mxu0 %v3819
        %v3821 = vpop.f32.mrf.mxu0
        %v3822 = vadd.f32 0.0, %v3821
        %3823 = vdwg.mxu0
        %3824 = vmatpush.msra.mxu0 0.0
        %3825 = vmatpush.msra.mxu0 0.0
        %3826 = vmatpush.msra.mxu0 0.0
        %3827 = vmatpush.msra.mxu0 0.0
        %3828 = vmatpush.msra.mxu0 0.0
        %3829 = vmatpush.msra.mxu0 0.0
        %3830 = vmatpush.msra.mxu0 0.0
        %3831 = vmatpush.msra.mxu0 0.0
        %3832 = vmatpush.msra.mxu0 0.0
        %3833 = vmatpush.msra.mxu0 0.0
        %3834 = vmatpush.msra.mxu0 0.0
        %3835 = vmatpush.msra.mxu0 0.0
        %3836 = vmatpush.msra.mxu0 0.0
        %3837 = vmatpush.msra.mxu0 0.0
        %v3838 = vand.u32 %v1809, 4294901760
        %v3839 = vsub.f32 %v1809, %v3838
        %v3840 = vand.u32 %v3839, 4294901760
        %v3841 = vsub.f32 %v3839, %v3840
        %v3842 = vand.u32 %v3841, 4294901760
        %3843 = vmatpush.msra.mxu0 %v3842
        %v3844 = vand.u32 %v1805, 4294901760
        %v3845 = vsub.f32 %v1805, %v3844
        %v3846 = vand.u32 %v3845, 4294901760
        %v3847 = vsub.f32 %v3845, %v3846
        %v3848 = vand.u32 %v3847, 4294901760
        %3849 = vmatpush.msra.mxu0 %v3848
        %v3850 = vand.u32 %v1884, 4294901760
        %3851 = vmatmul.f32.gmra.mxu0 %v3850
        %v3852 = vpop.f32.mrf.mxu0
        %v3853 = vadd.f32 %v3814, %v3852
        %v3854 = vand.u32 %v1887, 4294901760
        %3855 = vmatmul.f32.gmra.mxu0 %v3854
        %v3856 = vpop.f32.mrf.mxu0
        %v3857 = vadd.f32 %v3822, %v3856
        %3858 = vdwg.mxu0
        %3859 = vmatpush.msra.mxu0 0.0
        %3860 = vmatpush.msra.mxu0 0.0
        %3861 = vmatpush.msra.mxu0 0.0
        %3862 = vmatpush.msra.mxu0 0.0
        %3863 = vmatpush.msra.mxu0 0.0
        %3864 = vmatpush.msra.mxu0 0.0
        %3865 = vmatpush.msra.mxu0 0.0
        %3866 = vmatpush.msra.mxu0 0.0
        %3867 = vmatpush.msra.mxu0 0.0
        %3868 = vmatpush.msra.mxu0 0.0
        %3869 = vmatpush.msra.mxu0 0.0
        %3870 = vmatpush.msra.mxu0 0.0
        %3871 = vmatpush.msra.mxu0 0.0
        %3872 = vmatpush.msra.mxu0 0.0
        %v3873 = vand.u32 %v1809, 4294901760
        %v3874 = vsub.f32 %v1809, %v3873
        %3875 = vmatpush.msra.mxu0 %v3874
        %v3876 = vand.u32 %v1805, 4294901760
        %v3877 = vsub.f32 %v1805, %v3876
        %3878 = vmatpush.msra.mxu0 %v3877
        %v3879 = vand.u32 %v1884, 4294901760
        %v3880 = vsub.f32 %v1884, %v3879
        %3881 = vmatmul.f32.gmra.mxu0 %v3880
        %v3882 = vpop.f32.mrf.mxu0
        %v3883 = vadd.f32 %v3853, %v3882
        %v3884 = vand.u32 %v1887, 4294901760
        %v3885 = vsub.f32 %v1887, %v3884
        %3886 = vmatmul.f32.gmra.mxu0 %v3885
        %v3887 = vpop.f32.mrf.mxu0
        %v3888 = vadd.f32 %v3857, %v3887
        %3889 = vdwg.mxu0
        %3890 = vmatpush.msra.mxu0 0.0
        %3891 = vmatpush.msra.mxu0 0.0
        %3892 = vmatpush.msra.mxu0 0.0
        %3893 = vmatpush.msra.mxu0 0.0
        %3894 = vmatpush.msra.mxu0 0.0
        %3895 = vmatpush.msra.mxu0 0.0
        %3896 = vmatpush.msra.mxu0 0.0
        %3897 = vmatpush.msra.mxu0 0.0
        %3898 = vmatpush.msra.mxu0 0.0
        %3899 = vmatpush.msra.mxu0 0.0
        %3900 = vmatpush.msra.mxu0 0.0
        %3901 = vmatpush.msra.mxu0 0.0
        %3902 = vmatpush.msra.mxu0 0.0
        %3903 = vmatpush.msra.mxu0 0.0
        %v3904 = vand.u32 %v1809, 4294901760
        %3905 = vmatpush.msra.mxu0 %v3904
        %v3906 = vand.u32 %v1805, 4294901760
        %3907 = vmatpush.msra.mxu0 %v3906
        %v3908 = vand.u32 %v1884, 4294901760
        %v3909 = vsub.f32 %v1884, %v3908
        %v3910 = vand.u32 %v3909, 4294901760
        %3911 = vmatmul.f32.gmra.mxu0 %v3910
        %v3912 = vpop.f32.mrf.mxu0
        %v3913 = vadd.f32 %v3883, %v3912
        %v3914 = vand.u32 %v1887, 4294901760
        %v3915 = vsub.f32 %v1887, %v3914
        %v3916 = vand.u32 %v3915, 4294901760
        %3917 = vmatmul.f32.gmra.mxu0 %v3916
        %v3918 = vpop.f32.mrf.mxu0
        %v3919 = vadd.f32 %v3888, %v3918
        %3920 = vdwg.mxu0
        %3921 = vmatpush.msra.mxu0 0.0
        %3922 = vmatpush.msra.mxu0 0.0
        %3923 = vmatpush.msra.mxu0 0.0
        %3924 = vmatpush.msra.mxu0 0.0
        %3925 = vmatpush.msra.mxu0 0.0
        %3926 = vmatpush.msra.mxu0 0.0
        %3927 = vmatpush.msra.mxu0 0.0
        %3928 = vmatpush.msra.mxu0 0.0
        %3929 = vmatpush.msra.mxu0 0.0
        %3930 = vmatpush.msra.mxu0 0.0
        %3931 = vmatpush.msra.mxu0 0.0
        %3932 = vmatpush.msra.mxu0 0.0
        %3933 = vmatpush.msra.mxu0 0.0
        %3934 = vmatpush.msra.mxu0 0.0
        %v3935 = vand.u32 %v1809, 4294901760
        %v3936 = vsub.f32 %v1809, %v3935
        %v3937 = vand.u32 %v3936, 4294901760
        %3938 = vmatpush.msra.mxu0 %v3937
        %v3939 = vand.u32 %v1805, 4294901760
        %v3940 = vsub.f32 %v1805, %v3939
        %v3941 = vand.u32 %v3940, 4294901760
        %3942 = vmatpush.msra.mxu0 %v3941
        %v3943 = vand.u32 %v1884, 4294901760
        %3944 = vmatmul.f32.gmra.mxu0 %v3943
        %v3945 = vpop.f32.mrf.mxu0
        %v3946 = vadd.f32 %v3913, %v3945
        %v3947 = vand.u32 %v1887, 4294901760
        %3948 = vmatmul.f32.gmra.mxu0 %v3947
        %v3949 = vpop.f32.mrf.mxu0
        %v3950 = vadd.f32 %v3919, %v3949
        %3951 = vdwg.mxu0
        %3952 = vmatpush.msra.mxu0 0.0
        %3953 = vmatpush.msra.mxu0 0.0
        %3954 = vmatpush.msra.mxu0 0.0
        %3955 = vmatpush.msra.mxu0 0.0
        %3956 = vmatpush.msra.mxu0 0.0
        %3957 = vmatpush.msra.mxu0 0.0
        %3958 = vmatpush.msra.mxu0 0.0
        %3959 = vmatpush.msra.mxu0 0.0
        %3960 = vmatpush.msra.mxu0 0.0
        %3961 = vmatpush.msra.mxu0 0.0
        %3962 = vmatpush.msra.mxu0 0.0
        %3963 = vmatpush.msra.mxu0 0.0
        %3964 = vmatpush.msra.mxu0 0.0
        %3965 = vmatpush.msra.mxu0 0.0
        %v3966 = vand.u32 %v1809, 4294901760
        %3967 = vmatpush.msra.mxu0 %v3966
        %v3968 = vand.u32 %v1805, 4294901760
        %3969 = vmatpush.msra.mxu0 %v3968
        %v3970 = vand.u32 %v1884, 4294901760
        %3971 = vmatmul.f32.gmra.mxu0 %v3970
        %v3972 = vpop.f32.mrf.mxu0
        %v3973 = vadd.f32 %v3946, %v3972
        %v3974 = vand.u32 %v1887, 4294901760
        %3975 = vmatmul.f32.gmra.mxu0 %v3974
        %v3976 = vpop.f32.mrf.mxu0
        %v3977 = vadd.f32 %v3950, %v3976
        %3978 = vdwg.mxu0
        %3979 = vmatpush.msra.mxu0 0.0
        %3980 = vmatpush.msra.mxu0 0.0
        %3981 = vmatpush.msra.mxu0 0.0
        %3982 = vmatpush.msra.mxu0 0.0
        %3983 = vmatpush.msra.mxu0 0.0
        %3984 = vmatpush.msra.mxu0 0.0
        %3985 = vmatpush.msra.mxu0 0.0
        %3986 = vmatpush.msra.mxu0 0.0
        %3987 = vmatpush.msra.mxu0 0.0
        %3988 = vmatpush.msra.mxu0 0.0
        %3989 = vmatpush.msra.mxu0 0.0
        %3990 = vmatpush.msra.mxu0 0.0
        %3991 = vmatpush.msra.mxu0 0.0
        %3992 = vmatpush.msra.mxu0 0.0
        %v3993 = vand.u32 %v1817, 4294901760
        %3994 = vmatpush.msra.mxu0 %v3993
        %v3995 = vand.u32 %v1813, 4294901760
        %3996 = vmatpush.msra.mxu0 %v3995
        %v3997 = vand.u32 %v1884, 4294901760
        %v3998 = vsub.f32 %v1884, %v3997
        %v3999 = vand.u32 %v3998, 4294901760
        %v4000 = vsub.f32 %v3998, %v3999
        %v4001 = vand.u32 %v4000, 4294901760
        %4002 = vmatmul.f32.gmra.mxu0 %v4001
        %v4003 = vpop.f32.mrf.mxu0
        %v4004 = vadd.f32 0.0, %v4003
        %v4005 = vand.u32 %v1887, 4294901760
        %v4006 = vsub.f32 %v1887, %v4005
        %v4007 = vand.u32 %v4006, 4294901760
        %v4008 = vsub.f32 %v4006, %v4007
        %v4009 = vand.u32 %v4008, 4294901760
        %4010 = vmatmul.f32.gmra.mxu0 %v4009
        %v4011 = vpop.f32.mrf.mxu0
        %v4012 = vadd.f32 0.0, %v4011
        %4013 = vdwg.mxu0
        %4014 = vmatpush.msra.mxu0 0.0
        %4015 = vmatpush.msra.mxu0 0.0
        %4016 = vmatpush.msra.mxu0 0.0
        %4017 = vmatpush.msra.mxu0 0.0
        %4018 = vmatpush.msra.mxu0 0.0
        %4019 = vmatpush.msra.mxu0 0.0
        %4020 = vmatpush.msra.mxu0 0.0
        %4021 = vmatpush.msra.mxu0 0.0
        %4022 = vmatpush.msra.mxu0 0.0
        %4023 = vmatpush.msra.mxu0 0.0
        %4024 = vmatpush.msra.mxu0 0.0
        %4025 = vmatpush.msra.mxu0 0.0
        %4026 = vmatpush.msra.mxu0 0.0
        %4027 = vmatpush.msra.mxu0 0.0
        %v4028 = vand.u32 %v1817, 4294901760
        %v4029 = vsub.f32 %v1817, %v4028
        %v4030 = vand.u32 %v4029, 4294901760
        %v4031 = vsub.f32 %v4029, %v4030
        %v4032 = vand.u32 %v4031, 4294901760
        %4033 = vmatpush.msra.mxu0 %v4032
        %v4034 = vand.u32 %v1813, 4294901760
        %v4035 = vsub.f32 %v1813, %v4034
        %v4036 = vand.u32 %v4035, 4294901760
        %v4037 = vsub.f32 %v4035, %v4036
        %v4038 = vand.u32 %v4037, 4294901760
        %4039 = vmatpush.msra.mxu0 %v4038
        %v4040 = vand.u32 %v1884, 4294901760
        %4041 = vmatmul.f32.gmra.mxu0 %v4040
        %v4042 = vpop.f32.mrf.mxu0
        %v4043 = vadd.f32 %v4004, %v4042
        %v4044 = vand.u32 %v1887, 4294901760
        %4045 = vmatmul.f32.gmra.mxu0 %v4044
        %v4046 = vpop.f32.mrf.mxu0
        %v4047 = vadd.f32 %v4012, %v4046
        %4048 = vdwg.mxu0
        %4049 = vmatpush.msra.mxu0 0.0
        %4050 = vmatpush.msra.mxu0 0.0
        %4051 = vmatpush.msra.mxu0 0.0
        %4052 = vmatpush.msra.mxu0 0.0
        %4053 = vmatpush.msra.mxu0 0.0
        %4054 = vmatpush.msra.mxu0 0.0
        %4055 = vmatpush.msra.mxu0 0.0
        %4056 = vmatpush.msra.mxu0 0.0
        %4057 = vmatpush.msra.mxu0 0.0
        %4058 = vmatpush.msra.mxu0 0.0
        %4059 = vmatpush.msra.mxu0 0.0
        %4060 = vmatpush.msra.mxu0 0.0
        %4061 = vmatpush.msra.mxu0 0.0
        %4062 = vmatpush.msra.mxu0 0.0
        %v4063 = vand.u32 %v1817, 4294901760
        %v4064 = vsub.f32 %v1817, %v4063
        %4065 = vmatpush.msra.mxu0 %v4064
        %v4066 = vand.u32 %v1813, 4294901760
        %v4067 = vsub.f32 %v1813, %v4066
        %4068 = vmatpush.msra.mxu0 %v4067
        %v4069 = vand.u32 %v1884, 4294901760
        %v4070 = vsub.f32 %v1884, %v4069
        %4071 = vmatmul.f32.gmra.mxu0 %v4070
        %v4072 = vpop.f32.mrf.mxu0
        %v4073 = vadd.f32 %v4043, %v4072
        %v4074 = vand.u32 %v1887, 4294901760
        %v4075 = vsub.f32 %v1887, %v4074
        %4076 = vmatmul.f32.gmra.mxu0 %v4075
        %v4077 = vpop.f32.mrf.mxu0
        %v4078 = vadd.f32 %v4047, %v4077
        %4079 = vdwg.mxu0
        %4080 = vmatpush.msra.mxu0 0.0
        %4081 = vmatpush.msra.mxu0 0.0
        %4082 = vmatpush.msra.mxu0 0.0
        %4083 = vmatpush.msra.mxu0 0.0
        %4084 = vmatpush.msra.mxu0 0.0
        %4085 = vmatpush.msra.mxu0 0.0
        %4086 = vmatpush.msra.mxu0 0.0
        %4087 = vmatpush.msra.mxu0 0.0
        %4088 = vmatpush.msra.mxu0 0.0
        %4089 = vmatpush.msra.mxu0 0.0
        %4090 = vmatpush.msra.mxu0 0.0
        %4091 = vmatpush.msra.mxu0 0.0
        %4092 = vmatpush.msra.mxu0 0.0
        %4093 = vmatpush.msra.mxu0 0.0
        %v4094 = vand.u32 %v1817, 4294901760
        %4095 = vmatpush.msra.mxu0 %v4094
        %v4096 = vand.u32 %v1813, 4294901760
        %4097 = vmatpush.msra.mxu0 %v4096
        %v4098 = vand.u32 %v1884, 4294901760
        %v4099 = vsub.f32 %v1884, %v4098
        %v4100 = vand.u32 %v4099, 4294901760
        %4101 = vmatmul.f32.gmra.mxu0 %v4100
        %v4102 = vpop.f32.mrf.mxu0
        %v4103 = vadd.f32 %v4073, %v4102
        %v4104 = vand.u32 %v1887, 4294901760
        %v4105 = vsub.f32 %v1887, %v4104
        %v4106 = vand.u32 %v4105, 4294901760
        %4107 = vmatmul.f32.gmra.mxu0 %v4106
        %v4108 = vpop.f32.mrf.mxu0
        %v4109 = vadd.f32 %v4078, %v4108
        %4110 = vdwg.mxu0
        %4111 = vmatpush.msra.mxu0 0.0
        %4112 = vmatpush.msra.mxu0 0.0
        %4113 = vmatpush.msra.mxu0 0.0
        %4114 = vmatpush.msra.mxu0 0.0
        %4115 = vmatpush.msra.mxu0 0.0
        %4116 = vmatpush.msra.mxu0 0.0
        %4117 = vmatpush.msra.mxu0 0.0
        %4118 = vmatpush.msra.mxu0 0.0
        %4119 = vmatpush.msra.mxu0 0.0
        %4120 = vmatpush.msra.mxu0 0.0
        %4121 = vmatpush.msra.mxu0 0.0
        %4122 = vmatpush.msra.mxu0 0.0
        %4123 = vmatpush.msra.mxu0 0.0
        %4124 = vmatpush.msra.mxu0 0.0
        %v4125 = vand.u32 %v1817, 4294901760
        %v4126 = vsub.f32 %v1817, %v4125
        %v4127 = vand.u32 %v4126, 4294901760
        %4128 = vmatpush.msra.mxu0 %v4127
        %v4129 = vand.u32 %v1813, 4294901760
        %v4130 = vsub.f32 %v1813, %v4129
        %v4131 = vand.u32 %v4130, 4294901760
        %4132 = vmatpush.msra.mxu0 %v4131
        %v4133 = vand.u32 %v1884, 4294901760
        %4134 = vmatmul.f32.gmra.mxu0 %v4133
        %v4135 = vpop.f32.mrf.mxu0
        %v4136 = vadd.f32 %v4103, %v4135
        %v4137 = vand.u32 %v1887, 4294901760
        %4138 = vmatmul.f32.gmra.mxu0 %v4137
        %v4139 = vpop.f32.mrf.mxu0
        %v4140 = vadd.f32 %v4109, %v4139
        %4141 = vdwg.mxu0
        %4142 = vmatpush.msra.mxu0 0.0
        %4143 = vmatpush.msra.mxu0 0.0
        %4144 = vmatpush.msra.mxu0 0.0
        %4145 = vmatpush.msra.mxu0 0.0
        %4146 = vmatpush.msra.mxu0 0.0
        %4147 = vmatpush.msra.mxu0 0.0
        %4148 = vmatpush.msra.mxu0 0.0
        %4149 = vmatpush.msra.mxu0 0.0
        %4150 = vmatpush.msra.mxu0 0.0
        %4151 = vmatpush.msra.mxu0 0.0
        %4152 = vmatpush.msra.mxu0 0.0
        %4153 = vmatpush.msra.mxu0 0.0
        %4154 = vmatpush.msra.mxu0 0.0
        %4155 = vmatpush.msra.mxu0 0.0
        %v4156 = vand.u32 %v1817, 4294901760
        %4157 = vmatpush.msra.mxu0 %v4156
        %v4158 = vand.u32 %v1813, 4294901760
        %4159 = vmatpush.msra.mxu0 %v4158
        %v4160 = vand.u32 %v1884, 4294901760
        %4161 = vmatmul.f32.gmra.mxu0 %v4160
        %v4162 = vpop.f32.mrf.mxu0
        %v4163 = vadd.f32 %v4136, %v4162
        %v4164 = vand.u32 %v1887, 4294901760
        %4165 = vmatmul.f32.gmra.mxu0 %v4164
        %v4166 = vpop.f32.mrf.mxu0
        %v4167 = vadd.f32 %v4140, %v4166
        %4168 = vdwg.mxu0
        %4169 = vmatpush.msra.mxu0 0.0
        %4170 = vmatpush.msra.mxu0 0.0
        %4171 = vmatpush.msra.mxu0 0.0
        %4172 = vmatpush.msra.mxu0 0.0
        %4173 = vmatpush.msra.mxu0 0.0
        %4174 = vmatpush.msra.mxu0 0.0
        %4175 = vmatpush.msra.mxu0 0.0
        %4176 = vmatpush.msra.mxu0 0.0
        %4177 = vmatpush.msra.mxu0 0.0
        %4178 = vmatpush.msra.mxu0 0.0
        %4179 = vmatpush.msra.mxu0 0.0
        %4180 = vmatpush.msra.mxu0 0.0
        %4181 = vmatpush.msra.mxu0 0.0
        %4182 = vmatpush.msra.mxu0 0.0
        %v4183 = vand.u32 %v1825, 4294901760
        %4184 = vmatpush.msra.mxu0 %v4183
        %v4185 = vand.u32 %v1821, 4294901760
        %4186 = vmatpush.msra.mxu0 %v4185
        %v4187 = vand.u32 %v1884, 4294901760
        %v4188 = vsub.f32 %v1884, %v4187
        %v4189 = vand.u32 %v4188, 4294901760
        %v4190 = vsub.f32 %v4188, %v4189
        %v4191 = vand.u32 %v4190, 4294901760
        %4192 = vmatmul.f32.gmra.mxu0 %v4191
        %v4193 = vpop.f32.mrf.mxu0
        %v4194 = vadd.f32 0.0, %v4193
        %v4195 = vand.u32 %v1887, 4294901760
        %v4196 = vsub.f32 %v1887, %v4195
        %v4197 = vand.u32 %v4196, 4294901760
        %v4198 = vsub.f32 %v4196, %v4197
        %v4199 = vand.u32 %v4198, 4294901760
        %4200 = vmatmul.f32.gmra.mxu0 %v4199
        %v4201 = vpop.f32.mrf.mxu0
        %v4202 = vadd.f32 0.0, %v4201
        %4203 = vdwg.mxu0
        %4204 = vmatpush.msra.mxu0 0.0
        %4205 = vmatpush.msra.mxu0 0.0
        %4206 = vmatpush.msra.mxu0 0.0
        %4207 = vmatpush.msra.mxu0 0.0
        %4208 = vmatpush.msra.mxu0 0.0
        %4209 = vmatpush.msra.mxu0 0.0
        %4210 = vmatpush.msra.mxu0 0.0
        %4211 = vmatpush.msra.mxu0 0.0
        %4212 = vmatpush.msra.mxu0 0.0
        %4213 = vmatpush.msra.mxu0 0.0
        %4214 = vmatpush.msra.mxu0 0.0
        %4215 = vmatpush.msra.mxu0 0.0
        %4216 = vmatpush.msra.mxu0 0.0
        %4217 = vmatpush.msra.mxu0 0.0
        %v4218 = vand.u32 %v1825, 4294901760
        %v4219 = vsub.f32 %v1825, %v4218
        %v4220 = vand.u32 %v4219, 4294901760
        %v4221 = vsub.f32 %v4219, %v4220
        %v4222 = vand.u32 %v4221, 4294901760
        %4223 = vmatpush.msra.mxu0 %v4222
        %v4224 = vand.u32 %v1821, 4294901760
        %v4225 = vsub.f32 %v1821, %v4224
        %v4226 = vand.u32 %v4225, 4294901760
        %v4227 = vsub.f32 %v4225, %v4226
        %v4228 = vand.u32 %v4227, 4294901760
        %4229 = vmatpush.msra.mxu0 %v4228
        %v4230 = vand.u32 %v1884, 4294901760
        %4231 = vmatmul.f32.gmra.mxu0 %v4230
        %v4232 = vpop.f32.mrf.mxu0
        %v4233 = vadd.f32 %v4194, %v4232
        %v4234 = vand.u32 %v1887, 4294901760
        %4235 = vmatmul.f32.gmra.mxu0 %v4234
        %v4236 = vpop.f32.mrf.mxu0
        %v4237 = vadd.f32 %v4202, %v4236
        %4238 = vdwg.mxu0
        %4239 = vmatpush.msra.mxu0 0.0
        %4240 = vmatpush.msra.mxu0 0.0
        %4241 = vmatpush.msra.mxu0 0.0
        %4242 = vmatpush.msra.mxu0 0.0
        %4243 = vmatpush.msra.mxu0 0.0
        %4244 = vmatpush.msra.mxu0 0.0
        %4245 = vmatpush.msra.mxu0 0.0
        %4246 = vmatpush.msra.mxu0 0.0
        %4247 = vmatpush.msra.mxu0 0.0
        %4248 = vmatpush.msra.mxu0 0.0
        %4249 = vmatpush.msra.mxu0 0.0
        %4250 = vmatpush.msra.mxu0 0.0
        %4251 = vmatpush.msra.mxu0 0.0
        %4252 = vmatpush.msra.mxu0 0.0
        %v4253 = vand.u32 %v1825, 4294901760
        %v4254 = vsub.f32 %v1825, %v4253
        %4255 = vmatpush.msra.mxu0 %v4254
        %v4256 = vand.u32 %v1821, 4294901760
        %v4257 = vsub.f32 %v1821, %v4256
        %4258 = vmatpush.msra.mxu0 %v4257
        %v4259 = vand.u32 %v1884, 4294901760
        %v4260 = vsub.f32 %v1884, %v4259
        %4261 = vmatmul.f32.gmra.mxu0 %v4260
        %v4262 = vpop.f32.mrf.mxu0
        %v4263 = vadd.f32 %v4233, %v4262
        %v4264 = vand.u32 %v1887, 4294901760
        %v4265 = vsub.f32 %v1887, %v4264
        %4266 = vmatmul.f32.gmra.mxu0 %v4265
        %v4267 = vpop.f32.mrf.mxu0
        %v4268 = vadd.f32 %v4237, %v4267
        %4269 = vdwg.mxu0
        %4270 = vmatpush.msra.mxu0 0.0
        %4271 = vmatpush.msra.mxu0 0.0
        %4272 = vmatpush.msra.mxu0 0.0
        %4273 = vmatpush.msra.mxu0 0.0
        %4274 = vmatpush.msra.mxu0 0.0
        %4275 = vmatpush.msra.mxu0 0.0
        %4276 = vmatpush.msra.mxu0 0.0
        %4277 = vmatpush.msra.mxu0 0.0
        %4278 = vmatpush.msra.mxu0 0.0
        %4279 = vmatpush.msra.mxu0 0.0
        %4280 = vmatpush.msra.mxu0 0.0
        %4281 = vmatpush.msra.mxu0 0.0
        %4282 = vmatpush.msra.mxu0 0.0
        %4283 = vmatpush.msra.mxu0 0.0
        %v4284 = vand.u32 %v1825, 4294901760
        %4285 = vmatpush.msra.mxu0 %v4284
        %v4286 = vand.u32 %v1821, 4294901760
        %4287 = vmatpush.msra.mxu0 %v4286
        %v4288 = vand.u32 %v1884, 4294901760
        %v4289 = vsub.f32 %v1884, %v4288
        %v4290 = vand.u32 %v4289, 4294901760
        %4291 = vmatmul.f32.gmra.mxu0 %v4290
        %v4292 = vpop.f32.mrf.mxu0
        %v4293 = vadd.f32 %v4263, %v4292
        %v4294 = vand.u32 %v1887, 4294901760
        %v4295 = vsub.f32 %v1887, %v4294
        %v4296 = vand.u32 %v4295, 4294901760
        %4297 = vmatmul.f32.gmra.mxu0 %v4296
        %v4298 = vpop.f32.mrf.mxu0
        %v4299 = vadd.f32 %v4268, %v4298
        %4300 = vdwg.mxu0
        %4301 = vmatpush.msra.mxu0 0.0
        %4302 = vmatpush.msra.mxu0 0.0
        %4303 = vmatpush.msra.mxu0 0.0
        %4304 = vmatpush.msra.mxu0 0.0
        %4305 = vmatpush.msra.mxu0 0.0
        %4306 = vmatpush.msra.mxu0 0.0
        %4307 = vmatpush.msra.mxu0 0.0
        %4308 = vmatpush.msra.mxu0 0.0
        %4309 = vmatpush.msra.mxu0 0.0
        %4310 = vmatpush.msra.mxu0 0.0
        %4311 = vmatpush.msra.mxu0 0.0
        %4312 = vmatpush.msra.mxu0 0.0
        %4313 = vmatpush.msra.mxu0 0.0
        %4314 = vmatpush.msra.mxu0 0.0
        %v4315 = vand.u32 %v1825, 4294901760
        %v4316 = vsub.f32 %v1825, %v4315
        %v4317 = vand.u32 %v4316, 4294901760
        %4318 = vmatpush.msra.mxu0 %v4317
        %v4319 = vand.u32 %v1821, 4294901760
        %v4320 = vsub.f32 %v1821, %v4319
        %v4321 = vand.u32 %v4320, 4294901760
        %4322 = vmatpush.msra.mxu0 %v4321
        %v4323 = vand.u32 %v1884, 4294901760
        %4324 = vmatmul.f32.gmra.mxu0 %v4323
        %v4325 = vpop.f32.mrf.mxu0
        %v4326 = vadd.f32 %v4293, %v4325
        %v4327 = vand.u32 %v1887, 4294901760
        %4328 = vmatmul.f32.gmra.mxu0 %v4327
        %v4329 = vpop.f32.mrf.mxu0
        %v4330 = vadd.f32 %v4299, %v4329
        %4331 = vdwg.mxu0
        %4332 = vmatpush.msra.mxu0 0.0
        %4333 = vmatpush.msra.mxu0 0.0
        %4334 = vmatpush.msra.mxu0 0.0
        %4335 = vmatpush.msra.mxu0 0.0
        %4336 = vmatpush.msra.mxu0 0.0
        %4337 = vmatpush.msra.mxu0 0.0
        %4338 = vmatpush.msra.mxu0 0.0
        %4339 = vmatpush.msra.mxu0 0.0
        %4340 = vmatpush.msra.mxu0 0.0
        %4341 = vmatpush.msra.mxu0 0.0
        %4342 = vmatpush.msra.mxu0 0.0
        %4343 = vmatpush.msra.mxu0 0.0
        %4344 = vmatpush.msra.mxu0 0.0
        %4345 = vmatpush.msra.mxu0 0.0
        %v4346 = vand.u32 %v1825, 4294901760
        %4347 = vmatpush.msra.mxu0 %v4346
        %v4348 = vand.u32 %v1821, 4294901760
        %4349 = vmatpush.msra.mxu0 %v4348
        %v4350 = vand.u32 %v1884, 4294901760
        %4351 = vmatmul.f32.gmra.mxu0 %v4350
        %v4352 = vpop.f32.mrf.mxu0
        %v4353 = vadd.f32 %v4326, %v4352
        %v4354 = vand.u32 %v1887, 4294901760
        %4355 = vmatmul.f32.gmra.mxu0 %v4354
        %v4356 = vpop.f32.mrf.mxu0
        %v4357 = vadd.f32 %v4330, %v4356
        %4358 = vdwg.mxu0
        %4359 = vmatpush.msra.mxu0 0.0
        %4360 = vmatpush.msra.mxu0 0.0
        %4361 = vmatpush.msra.mxu0 0.0
        %4362 = vmatpush.msra.mxu0 0.0
        %4363 = vmatpush.msra.mxu0 0.0
        %4364 = vmatpush.msra.mxu0 0.0
        %4365 = vmatpush.msra.mxu0 0.0
        %4366 = vmatpush.msra.mxu0 0.0
        %4367 = vmatpush.msra.mxu0 0.0
        %4368 = vmatpush.msra.mxu0 0.0
        %4369 = vmatpush.msra.mxu0 0.0
        %4370 = vmatpush.msra.mxu0 0.0
        %4371 = vmatpush.msra.mxu0 0.0
        %4372 = vmatpush.msra.mxu0 0.0
        %v4373 = vand.u32 %v1833, 4294901760
        %4374 = vmatpush.msra.mxu0 %v4373
        %v4375 = vand.u32 %v1829, 4294901760
        %4376 = vmatpush.msra.mxu0 %v4375
        %v4377 = vand.u32 %v1884, 4294901760
        %v4378 = vsub.f32 %v1884, %v4377
        %v4379 = vand.u32 %v4378, 4294901760
        %v4380 = vsub.f32 %v4378, %v4379
        %v4381 = vand.u32 %v4380, 4294901760
        %4382 = vmatmul.f32.gmra.mxu0 %v4381
        %v4383 = vpop.f32.mrf.mxu0
        %v4384 = vadd.f32 0.0, %v4383
        %v4385 = vand.u32 %v1887, 4294901760
        %v4386 = vsub.f32 %v1887, %v4385
        %v4387 = vand.u32 %v4386, 4294901760
        %v4388 = vsub.f32 %v4386, %v4387
        %v4389 = vand.u32 %v4388, 4294901760
        %4390 = vmatmul.f32.gmra.mxu0 %v4389
        %v4391 = vpop.f32.mrf.mxu0
        %v4392 = vadd.f32 0.0, %v4391
        %4393 = vdwg.mxu0
        %4394 = vmatpush.msra.mxu0 0.0
        %4395 = vmatpush.msra.mxu0 0.0
        %4396 = vmatpush.msra.mxu0 0.0
        %4397 = vmatpush.msra.mxu0 0.0
        %4398 = vmatpush.msra.mxu0 0.0
        %4399 = vmatpush.msra.mxu0 0.0
        %4400 = vmatpush.msra.mxu0 0.0
        %4401 = vmatpush.msra.mxu0 0.0
        %4402 = vmatpush.msra.mxu0 0.0
        %4403 = vmatpush.msra.mxu0 0.0
        %4404 = vmatpush.msra.mxu0 0.0
        %4405 = vmatpush.msra.mxu0 0.0
        %4406 = vmatpush.msra.mxu0 0.0
        %4407 = vmatpush.msra.mxu0 0.0
        %v4408 = vand.u32 %v1833, 4294901760
        %v4409 = vsub.f32 %v1833, %v4408
        %v4410 = vand.u32 %v4409, 4294901760
        %v4411 = vsub.f32 %v4409, %v4410
        %v4412 = vand.u32 %v4411, 4294901760
        %4413 = vmatpush.msra.mxu0 %v4412
        %v4414 = vand.u32 %v1829, 4294901760
        %v4415 = vsub.f32 %v1829, %v4414
        %v4416 = vand.u32 %v4415, 4294901760
        %v4417 = vsub.f32 %v4415, %v4416
        %v4418 = vand.u32 %v4417, 4294901760
        %4419 = vmatpush.msra.mxu0 %v4418
        %v4420 = vand.u32 %v1884, 4294901760
        %4421 = vmatmul.f32.gmra.mxu0 %v4420
        %v4422 = vpop.f32.mrf.mxu0
        %v4423 = vadd.f32 %v4384, %v4422
        %v4424 = vand.u32 %v1887, 4294901760
        %4425 = vmatmul.f32.gmra.mxu0 %v4424
        %v4426 = vpop.f32.mrf.mxu0
        %v4427 = vadd.f32 %v4392, %v4426
        %4428 = vdwg.mxu0
        %4429 = vmatpush.msra.mxu0 0.0
        %4430 = vmatpush.msra.mxu0 0.0
        %4431 = vmatpush.msra.mxu0 0.0
        %4432 = vmatpush.msra.mxu0 0.0
        %4433 = vmatpush.msra.mxu0 0.0
        %4434 = vmatpush.msra.mxu0 0.0
        %4435 = vmatpush.msra.mxu0 0.0
        %4436 = vmatpush.msra.mxu0 0.0
        %4437 = vmatpush.msra.mxu0 0.0
        %4438 = vmatpush.msra.mxu0 0.0
        %4439 = vmatpush.msra.mxu0 0.0
        %4440 = vmatpush.msra.mxu0 0.0
        %4441 = vmatpush.msra.mxu0 0.0
        %4442 = vmatpush.msra.mxu0 0.0
        %v4443 = vand.u32 %v1833, 4294901760
        %v4444 = vsub.f32 %v1833, %v4443
        %4445 = vmatpush.msra.mxu0 %v4444
        %v4446 = vand.u32 %v1829, 4294901760
        %v4447 = vsub.f32 %v1829, %v4446
        %4448 = vmatpush.msra.mxu0 %v4447
        %v4449 = vand.u32 %v1884, 4294901760
        %v4450 = vsub.f32 %v1884, %v4449
        %4451 = vmatmul.f32.gmra.mxu0 %v4450
        %v4452 = vpop.f32.mrf.mxu0
        %v4453 = vadd.f32 %v4423, %v4452
        %v4454 = vand.u32 %v1887, 4294901760
        %v4455 = vsub.f32 %v1887, %v4454
        %4456 = vmatmul.f32.gmra.mxu0 %v4455
        %v4457 = vpop.f32.mrf.mxu0
        %v4458 = vadd.f32 %v4427, %v4457
        %4459 = vdwg.mxu0
        %4460 = vmatpush.msra.mxu0 0.0
        %4461 = vmatpush.msra.mxu0 0.0
        %4462 = vmatpush.msra.mxu0 0.0
        %4463 = vmatpush.msra.mxu0 0.0
        %4464 = vmatpush.msra.mxu0 0.0
        %4465 = vmatpush.msra.mxu0 0.0
        %4466 = vmatpush.msra.mxu0 0.0
        %4467 = vmatpush.msra.mxu0 0.0
        %4468 = vmatpush.msra.mxu0 0.0
        %4469 = vmatpush.msra.mxu0 0.0
        %4470 = vmatpush.msra.mxu0 0.0
        %4471 = vmatpush.msra.mxu0 0.0
        %4472 = vmatpush.msra.mxu0 0.0
        %4473 = vmatpush.msra.mxu0 0.0
        %v4474 = vand.u32 %v1833, 4294901760
        %4475 = vmatpush.msra.mxu0 %v4474
        %v4476 = vand.u32 %v1829, 4294901760
        %4477 = vmatpush.msra.mxu0 %v4476
        %v4478 = vand.u32 %v1884, 4294901760
        %v4479 = vsub.f32 %v1884, %v4478
        %v4480 = vand.u32 %v4479, 4294901760
        %4481 = vmatmul.f32.gmra.mxu0 %v4480
        %v4482 = vpop.f32.mrf.mxu0
        %v4483 = vadd.f32 %v4453, %v4482
        %v4484 = vand.u32 %v1887, 4294901760
        %v4485 = vsub.f32 %v1887, %v4484
        %v4486 = vand.u32 %v4485, 4294901760
        %4487 = vmatmul.f32.gmra.mxu0 %v4486
        %v4488 = vpop.f32.mrf.mxu0
        %v4489 = vadd.f32 %v4458, %v4488
        %4490 = vdwg.mxu0
        %4491 = vmatpush.msra.mxu0 0.0
        %4492 = vmatpush.msra.mxu0 0.0
        %4493 = vmatpush.msra.mxu0 0.0
        %4494 = vmatpush.msra.mxu0 0.0
        %4495 = vmatpush.msra.mxu0 0.0
        %4496 = vmatpush.msra.mxu0 0.0
        %4497 = vmatpush.msra.mxu0 0.0
        %4498 = vmatpush.msra.mxu0 0.0
        %4499 = vmatpush.msra.mxu0 0.0
        %4500 = vmatpush.msra.mxu0 0.0
        %4501 = vmatpush.msra.mxu0 0.0
        %4502 = vmatpush.msra.mxu0 0.0
        %4503 = vmatpush.msra.mxu0 0.0
        %4504 = vmatpush.msra.mxu0 0.0
        %v4505 = vand.u32 %v1833, 4294901760
        %v4506 = vsub.f32 %v1833, %v4505
        %v4507 = vand.u32 %v4506, 4294901760
        %4508 = vmatpush.msra.mxu0 %v4507
        %v4509 = vand.u32 %v1829, 4294901760
        %v4510 = vsub.f32 %v1829, %v4509
        %v4511 = vand.u32 %v4510, 4294901760
        %4512 = vmatpush.msra.mxu0 %v4511
        %v4513 = vand.u32 %v1884, 4294901760
        %4514 = vmatmul.f32.gmra.mxu0 %v4513
        %v4515 = vpop.f32.mrf.mxu0
        %v4516 = vadd.f32 %v4483, %v4515
        %v4517 = vand.u32 %v1887, 4294901760
        %4518 = vmatmul.f32.gmra.mxu0 %v4517
        %v4519 = vpop.f32.mrf.mxu0
        %v4520 = vadd.f32 %v4489, %v4519
        %4521 = vdwg.mxu0
        %4522 = vmatpush.msra.mxu0 0.0
        %4523 = vmatpush.msra.mxu0 0.0
        %4524 = vmatpush.msra.mxu0 0.0
        %4525 = vmatpush.msra.mxu0 0.0
        %4526 = vmatpush.msra.mxu0 0.0
        %4527 = vmatpush.msra.mxu0 0.0
        %4528 = vmatpush.msra.mxu0 0.0
        %4529 = vmatpush.msra.mxu0 0.0
        %4530 = vmatpush.msra.mxu0 0.0
        %4531 = vmatpush.msra.mxu0 0.0
        %4532 = vmatpush.msra.mxu0 0.0
        %4533 = vmatpush.msra.mxu0 0.0
        %4534 = vmatpush.msra.mxu0 0.0
        %4535 = vmatpush.msra.mxu0 0.0
        %v4536 = vand.u32 %v1833, 4294901760
        %4537 = vmatpush.msra.mxu0 %v4536
        %v4538 = vand.u32 %v1829, 4294901760
        %4539 = vmatpush.msra.mxu0 %v4538
        %v4540 = vand.u32 %v1884, 4294901760
        %4541 = vmatmul.f32.gmra.mxu0 %v4540
        %v4542 = vpop.f32.mrf.mxu0
        %v4543 = vadd.f32 %v4516, %v4542
        %v4544 = vand.u32 %v1887, 4294901760
        %4545 = vmatmul.f32.gmra.mxu0 %v4544
        %v4546 = vpop.f32.mrf.mxu0
        %v4547 = vadd.f32 %v4520, %v4546
        %4548 = vdwg.mxu0
        %4549 = vmatpush.msra.mxu0 0.0
        %4550 = vmatpush.msra.mxu0 0.0
        %4551 = vmatpush.msra.mxu0 0.0
        %4552 = vmatpush.msra.mxu0 0.0
        %4553 = vmatpush.msra.mxu0 0.0
        %4554 = vmatpush.msra.mxu0 0.0
        %4555 = vmatpush.msra.mxu0 0.0
        %4556 = vmatpush.msra.mxu0 0.0
        %4557 = vmatpush.msra.mxu0 0.0
        %4558 = vmatpush.msra.mxu0 0.0
        %4559 = vmatpush.msra.mxu0 0.0
        %4560 = vmatpush.msra.mxu0 0.0
        %4561 = vmatpush.msra.mxu0 0.0
        %4562 = vmatpush.msra.mxu0 0.0
        %v4563 = vand.u32 %v1841, 4294901760
        %4564 = vmatpush.msra.mxu0 %v4563
        %v4565 = vand.u32 %v1837, 4294901760
        %4566 = vmatpush.msra.mxu0 %v4565
        %v4567 = vand.u32 %v1884, 4294901760
        %v4568 = vsub.f32 %v1884, %v4567
        %v4569 = vand.u32 %v4568, 4294901760
        %v4570 = vsub.f32 %v4568, %v4569
        %v4571 = vand.u32 %v4570, 4294901760
        %4572 = vmatmul.f32.gmra.mxu0 %v4571
        %v4573 = vpop.f32.mrf.mxu0
        %v4574 = vadd.f32 0.0, %v4573
        %v4575 = vand.u32 %v1887, 4294901760
        %v4576 = vsub.f32 %v1887, %v4575
        %v4577 = vand.u32 %v4576, 4294901760
        %v4578 = vsub.f32 %v4576, %v4577
        %v4579 = vand.u32 %v4578, 4294901760
        %4580 = vmatmul.f32.gmra.mxu0 %v4579
        %v4581 = vpop.f32.mrf.mxu0
        %v4582 = vadd.f32 0.0, %v4581
        %4583 = vdwg.mxu0
        %4584 = vmatpush.msra.mxu0 0.0
        %4585 = vmatpush.msra.mxu0 0.0
        %4586 = vmatpush.msra.mxu0 0.0
        %4587 = vmatpush.msra.mxu0 0.0
        %4588 = vmatpush.msra.mxu0 0.0
        %4589 = vmatpush.msra.mxu0 0.0
        %4590 = vmatpush.msra.mxu0 0.0
        %4591 = vmatpush.msra.mxu0 0.0
        %4592 = vmatpush.msra.mxu0 0.0
        %4593 = vmatpush.msra.mxu0 0.0
        %4594 = vmatpush.msra.mxu0 0.0
        %4595 = vmatpush.msra.mxu0 0.0
        %4596 = vmatpush.msra.mxu0 0.0
        %4597 = vmatpush.msra.mxu0 0.0
        %v4598 = vand.u32 %v1841, 4294901760
        %v4599 = vsub.f32 %v1841, %v4598
        %v4600 = vand.u32 %v4599, 4294901760
        %v4601 = vsub.f32 %v4599, %v4600
        %v4602 = vand.u32 %v4601, 4294901760
        %4603 = vmatpush.msra.mxu0 %v4602
        %v4604 = vand.u32 %v1837, 4294901760
        %v4605 = vsub.f32 %v1837, %v4604
        %v4606 = vand.u32 %v4605, 4294901760
        %v4607 = vsub.f32 %v4605, %v4606
        %v4608 = vand.u32 %v4607, 4294901760
        %4609 = vmatpush.msra.mxu0 %v4608
        %v4610 = vand.u32 %v1884, 4294901760
        %4611 = vmatmul.f32.gmra.mxu0 %v4610
        %v4612 = vpop.f32.mrf.mxu0
        %v4613 = vadd.f32 %v4574, %v4612
        %v4614 = vand.u32 %v1887, 4294901760
        %4615 = vmatmul.f32.gmra.mxu0 %v4614
        %v4616 = vpop.f32.mrf.mxu0
        %v4617 = vadd.f32 %v4582, %v4616
        %4618 = vdwg.mxu0
        %4619 = vmatpush.msra.mxu0 0.0
        %4620 = vmatpush.msra.mxu0 0.0
        %4621 = vmatpush.msra.mxu0 0.0
        %4622 = vmatpush.msra.mxu0 0.0
        %4623 = vmatpush.msra.mxu0 0.0
        %4624 = vmatpush.msra.mxu0 0.0
        %4625 = vmatpush.msra.mxu0 0.0
        %4626 = vmatpush.msra.mxu0 0.0
        %4627 = vmatpush.msra.mxu0 0.0
        %4628 = vmatpush.msra.mxu0 0.0
        %4629 = vmatpush.msra.mxu0 0.0
        %4630 = vmatpush.msra.mxu0 0.0
        %4631 = vmatpush.msra.mxu0 0.0
        %4632 = vmatpush.msra.mxu0 0.0
        %v4633 = vand.u32 %v1841, 4294901760
        %v4634 = vsub.f32 %v1841, %v4633
        %4635 = vmatpush.msra.mxu0 %v4634
        %v4636 = vand.u32 %v1837, 4294901760
        %v4637 = vsub.f32 %v1837, %v4636
        %4638 = vmatpush.msra.mxu0 %v4637
        %v4639 = vand.u32 %v1884, 4294901760
        %v4640 = vsub.f32 %v1884, %v4639
        %4641 = vmatmul.f32.gmra.mxu0 %v4640
        %v4642 = vpop.f32.mrf.mxu0
        %v4643 = vadd.f32 %v4613, %v4642
        %v4644 = vand.u32 %v1887, 4294901760
        %v4645 = vsub.f32 %v1887, %v4644
        %4646 = vmatmul.f32.gmra.mxu0 %v4645
        %v4647 = vpop.f32.mrf.mxu0
        %v4648 = vadd.f32 %v4617, %v4647
        %4649 = vdwg.mxu0
        %4650 = vmatpush.msra.mxu0 0.0
        %4651 = vmatpush.msra.mxu0 0.0
        %4652 = vmatpush.msra.mxu0 0.0
        %4653 = vmatpush.msra.mxu0 0.0
        %4654 = vmatpush.msra.mxu0 0.0
        %4655 = vmatpush.msra.mxu0 0.0
        %4656 = vmatpush.msra.mxu0 0.0
        %4657 = vmatpush.msra.mxu0 0.0
        %4658 = vmatpush.msra.mxu0 0.0
        %4659 = vmatpush.msra.mxu0 0.0
        %4660 = vmatpush.msra.mxu0 0.0
        %4661 = vmatpush.msra.mxu0 0.0
        %4662 = vmatpush.msra.mxu0 0.0
        %4663 = vmatpush.msra.mxu0 0.0
        %v4664 = vand.u32 %v1841, 4294901760
        %4665 = vmatpush.msra.mxu0 %v4664
        %v4666 = vand.u32 %v1837, 4294901760
        %4667 = vmatpush.msra.mxu0 %v4666
        %v4668 = vand.u32 %v1884, 4294901760
        %v4669 = vsub.f32 %v1884, %v4668
        %v4670 = vand.u32 %v4669, 4294901760
        %4671 = vmatmul.f32.gmra.mxu0 %v4670
        %v4672 = vpop.f32.mrf.mxu0
        %v4673 = vadd.f32 %v4643, %v4672
        %v4674 = vand.u32 %v1887, 4294901760
        %v4675 = vsub.f32 %v1887, %v4674
        %v4676 = vand.u32 %v4675, 4294901760
        %4677 = vmatmul.f32.gmra.mxu0 %v4676
        %v4678 = vpop.f32.mrf.mxu0
        %v4679 = vadd.f32 %v4648, %v4678
        %4680 = vdwg.mxu0
        %4681 = vmatpush.msra.mxu0 0.0
        %4682 = vmatpush.msra.mxu0 0.0
        %4683 = vmatpush.msra.mxu0 0.0
        %4684 = vmatpush.msra.mxu0 0.0
        %4685 = vmatpush.msra.mxu0 0.0
        %4686 = vmatpush.msra.mxu0 0.0
        %4687 = vmatpush.msra.mxu0 0.0
        %4688 = vmatpush.msra.mxu0 0.0
        %4689 = vmatpush.msra.mxu0 0.0
        %4690 = vmatpush.msra.mxu0 0.0
        %4691 = vmatpush.msra.mxu0 0.0
        %4692 = vmatpush.msra.mxu0 0.0
        %4693 = vmatpush.msra.mxu0 0.0
        %4694 = vmatpush.msra.mxu0 0.0
        %v4695 = vand.u32 %v1841, 4294901760
        %v4696 = vsub.f32 %v1841, %v4695
        %v4697 = vand.u32 %v4696, 4294901760
        %4698 = vmatpush.msra.mxu0 %v4697
        %v4699 = vand.u32 %v1837, 4294901760
        %v4700 = vsub.f32 %v1837, %v4699
        %v4701 = vand.u32 %v4700, 4294901760
        %4702 = vmatpush.msra.mxu0 %v4701
        %v4703 = vand.u32 %v1884, 4294901760
        %4704 = vmatmul.f32.gmra.mxu0 %v4703
        %v4705 = vpop.f32.mrf.mxu0
        %v4706 = vadd.f32 %v4673, %v4705
        %v4707 = vand.u32 %v1887, 4294901760
        %4708 = vmatmul.f32.gmra.mxu0 %v4707
        %v4709 = vpop.f32.mrf.mxu0
        %v4710 = vadd.f32 %v4679, %v4709
        %4711 = vdwg.mxu0
        %4712 = vmatpush.msra.mxu0 0.0
        %4713 = vmatpush.msra.mxu0 0.0
        %4714 = vmatpush.msra.mxu0 0.0
        %4715 = vmatpush.msra.mxu0 0.0
        %4716 = vmatpush.msra.mxu0 0.0
        %4717 = vmatpush.msra.mxu0 0.0
        %4718 = vmatpush.msra.mxu0 0.0
        %4719 = vmatpush.msra.mxu0 0.0
        %4720 = vmatpush.msra.mxu0 0.0
        %4721 = vmatpush.msra.mxu0 0.0
        %4722 = vmatpush.msra.mxu0 0.0
        %4723 = vmatpush.msra.mxu0 0.0
        %4724 = vmatpush.msra.mxu0 0.0
        %4725 = vmatpush.msra.mxu0 0.0
        %v4726 = vand.u32 %v1841, 4294901760
        %4727 = vmatpush.msra.mxu0 %v4726
        %v4728 = vand.u32 %v1837, 4294901760
        %4729 = vmatpush.msra.mxu0 %v4728
        %v4730 = vand.u32 %v1884, 4294901760
        %4731 = vmatmul.f32.gmra.mxu0 %v4730
        %v4732 = vpop.f32.mrf.mxu0
        %v4733 = vadd.f32 %v4706, %v4732
        %v4734 = vand.u32 %v1887, 4294901760
        %4735 = vmatmul.f32.gmra.mxu0 %v4734
        %v4736 = vpop.f32.mrf.mxu0
        %v4737 = vadd.f32 %v4710, %v4736
        %4738 = vdwg.mxu0
        %4739 = vmatpush.msra.mxu0 0.0
        %4740 = vmatpush.msra.mxu0 0.0
        %4741 = vmatpush.msra.mxu0 0.0
        %4742 = vmatpush.msra.mxu0 0.0
        %4743 = vmatpush.msra.mxu0 0.0
        %4744 = vmatpush.msra.mxu0 0.0
        %4745 = vmatpush.msra.mxu0 0.0
        %4746 = vmatpush.msra.mxu0 0.0
        %4747 = vmatpush.msra.mxu0 0.0
        %4748 = vmatpush.msra.mxu0 0.0
        %4749 = vmatpush.msra.mxu0 0.0
        %4750 = vmatpush.msra.mxu0 0.0
        %4751 = vmatpush.msra.mxu0 0.0
        %4752 = vmatpush.msra.mxu0 0.0
        %v4753 = vand.u32 %v1849, 4294901760
        %4754 = vmatpush.msra.mxu0 %v4753
        %v4755 = vand.u32 %v1845, 4294901760
        %4756 = vmatpush.msra.mxu0 %v4755
        %v4757 = vand.u32 %v1884, 4294901760
        %v4758 = vsub.f32 %v1884, %v4757
        %v4759 = vand.u32 %v4758, 4294901760
        %v4760 = vsub.f32 %v4758, %v4759
        %v4761 = vand.u32 %v4760, 4294901760
        %4762 = vmatmul.f32.gmra.mxu0 %v4761
        %v4763 = vpop.f32.mrf.mxu0
        %v4764 = vadd.f32 0.0, %v4763
        %v4765 = vand.u32 %v1887, 4294901760
        %v4766 = vsub.f32 %v1887, %v4765
        %v4767 = vand.u32 %v4766, 4294901760
        %v4768 = vsub.f32 %v4766, %v4767
        %v4769 = vand.u32 %v4768, 4294901760
        %4770 = vmatmul.f32.gmra.mxu0 %v4769
        %v4771 = vpop.f32.mrf.mxu0
        %v4772 = vadd.f32 0.0, %v4771
        %4773 = vdwg.mxu0
        %4774 = vmatpush.msra.mxu0 0.0
        %4775 = vmatpush.msra.mxu0 0.0
        %4776 = vmatpush.msra.mxu0 0.0
        %4777 = vmatpush.msra.mxu0 0.0
        %4778 = vmatpush.msra.mxu0 0.0
        %4779 = vmatpush.msra.mxu0 0.0
        %4780 = vmatpush.msra.mxu0 0.0
        %4781 = vmatpush.msra.mxu0 0.0
        %4782 = vmatpush.msra.mxu0 0.0
        %4783 = vmatpush.msra.mxu0 0.0
        %4784 = vmatpush.msra.mxu0 0.0
        %4785 = vmatpush.msra.mxu0 0.0
        %4786 = vmatpush.msra.mxu0 0.0
        %4787 = vmatpush.msra.mxu0 0.0
        %v4788 = vand.u32 %v1849, 4294901760
        %v4789 = vsub.f32 %v1849, %v4788
        %v4790 = vand.u32 %v4789, 4294901760
        %v4791 = vsub.f32 %v4789, %v4790
        %v4792 = vand.u32 %v4791, 4294901760
        %4793 = vmatpush.msra.mxu0 %v4792
        %v4794 = vand.u32 %v1845, 4294901760
        %v4795 = vsub.f32 %v1845, %v4794
        %v4796 = vand.u32 %v4795, 4294901760
        %v4797 = vsub.f32 %v4795, %v4796
        %v4798 = vand.u32 %v4797, 4294901760
        %4799 = vmatpush.msra.mxu0 %v4798
        %v4800 = vand.u32 %v1884, 4294901760
        %4801 = vmatmul.f32.gmra.mxu0 %v4800
        %v4802 = vpop.f32.mrf.mxu0
        %v4803 = vadd.f32 %v4764, %v4802
        %v4804 = vand.u32 %v1887, 4294901760
        %4805 = vmatmul.f32.gmra.mxu0 %v4804
        %v4806 = vpop.f32.mrf.mxu0
        %v4807 = vadd.f32 %v4772, %v4806
        %4808 = vdwg.mxu0
        %4809 = vmatpush.msra.mxu0 0.0
        %4810 = vmatpush.msra.mxu0 0.0
        %4811 = vmatpush.msra.mxu0 0.0
        %4812 = vmatpush.msra.mxu0 0.0
        %4813 = vmatpush.msra.mxu0 0.0
        %4814 = vmatpush.msra.mxu0 0.0
        %4815 = vmatpush.msra.mxu0 0.0
        %4816 = vmatpush.msra.mxu0 0.0
        %4817 = vmatpush.msra.mxu0 0.0
        %4818 = vmatpush.msra.mxu0 0.0
        %4819 = vmatpush.msra.mxu0 0.0
        %4820 = vmatpush.msra.mxu0 0.0
        %4821 = vmatpush.msra.mxu0 0.0
        %4822 = vmatpush.msra.mxu0 0.0
        %v4823 = vand.u32 %v1849, 4294901760
        %v4824 = vsub.f32 %v1849, %v4823
        %4825 = vmatpush.msra.mxu0 %v4824
        %v4826 = vand.u32 %v1845, 4294901760
        %v4827 = vsub.f32 %v1845, %v4826
        %4828 = vmatpush.msra.mxu0 %v4827
        %v4829 = vand.u32 %v1884, 4294901760
        %v4830 = vsub.f32 %v1884, %v4829
        %4831 = vmatmul.f32.gmra.mxu0 %v4830
        %v4832 = vpop.f32.mrf.mxu0
        %v4833 = vadd.f32 %v4803, %v4832
        %v4834 = vand.u32 %v1887, 4294901760
        %v4835 = vsub.f32 %v1887, %v4834
        %4836 = vmatmul.f32.gmra.mxu0 %v4835
        %v4837 = vpop.f32.mrf.mxu0
        %v4838 = vadd.f32 %v4807, %v4837
        %4839 = vdwg.mxu0
        %4840 = vmatpush.msra.mxu0 0.0
        %4841 = vmatpush.msra.mxu0 0.0
        %4842 = vmatpush.msra.mxu0 0.0
        %4843 = vmatpush.msra.mxu0 0.0
        %4844 = vmatpush.msra.mxu0 0.0
        %4845 = vmatpush.msra.mxu0 0.0
        %4846 = vmatpush.msra.mxu0 0.0
        %4847 = vmatpush.msra.mxu0 0.0
        %4848 = vmatpush.msra.mxu0 0.0
        %4849 = vmatpush.msra.mxu0 0.0
        %4850 = vmatpush.msra.mxu0 0.0
        %4851 = vmatpush.msra.mxu0 0.0
        %4852 = vmatpush.msra.mxu0 0.0
        %4853 = vmatpush.msra.mxu0 0.0
        %v4854 = vand.u32 %v1849, 4294901760
        %4855 = vmatpush.msra.mxu0 %v4854
        %v4856 = vand.u32 %v1845, 4294901760
        %4857 = vmatpush.msra.mxu0 %v4856
        %v4858 = vand.u32 %v1884, 4294901760
        %v4859 = vsub.f32 %v1884, %v4858
        %v4860 = vand.u32 %v4859, 4294901760
        %4861 = vmatmul.f32.gmra.mxu0 %v4860
        %v4862 = vpop.f32.mrf.mxu0
        %v4863 = vadd.f32 %v4833, %v4862
        %v4864 = vand.u32 %v1887, 4294901760
        %v4865 = vsub.f32 %v1887, %v4864
        %v4866 = vand.u32 %v4865, 4294901760
        %4867 = vmatmul.f32.gmra.mxu0 %v4866
        %v4868 = vpop.f32.mrf.mxu0
        %v4869 = vadd.f32 %v4838, %v4868
        %4870 = vdwg.mxu0
        %4871 = vmatpush.msra.mxu0 0.0
        %4872 = vmatpush.msra.mxu0 0.0
        %4873 = vmatpush.msra.mxu0 0.0
        %4874 = vmatpush.msra.mxu0 0.0
        %4875 = vmatpush.msra.mxu0 0.0
        %4876 = vmatpush.msra.mxu0 0.0
        %4877 = vmatpush.msra.mxu0 0.0
        %4878 = vmatpush.msra.mxu0 0.0
        %4879 = vmatpush.msra.mxu0 0.0
        %4880 = vmatpush.msra.mxu0 0.0
        %4881 = vmatpush.msra.mxu0 0.0
        %4882 = vmatpush.msra.mxu0 0.0
        %4883 = vmatpush.msra.mxu0 0.0
        %4884 = vmatpush.msra.mxu0 0.0
        %v4885 = vand.u32 %v1849, 4294901760
        %v4886 = vsub.f32 %v1849, %v4885
        %v4887 = vand.u32 %v4886, 4294901760
        %4888 = vmatpush.msra.mxu0 %v4887
        %v4889 = vand.u32 %v1845, 4294901760
        %v4890 = vsub.f32 %v1845, %v4889
        %v4891 = vand.u32 %v4890, 4294901760
        %4892 = vmatpush.msra.mxu0 %v4891
        %v4893 = vand.u32 %v1884, 4294901760
        %4894 = vmatmul.f32.gmra.mxu0 %v4893
        %v4895 = vpop.f32.mrf.mxu0
        %v4896 = vadd.f32 %v4863, %v4895
        %v4897 = vand.u32 %v1887, 4294901760
        %4898 = vmatmul.f32.gmra.mxu0 %v4897
        %v4899 = vpop.f32.mrf.mxu0
        %v4900 = vadd.f32 %v4869, %v4899
        %4901 = vdwg.mxu0
        %4902 = vmatpush.msra.mxu0 0.0
        %4903 = vmatpush.msra.mxu0 0.0
        %4904 = vmatpush.msra.mxu0 0.0
        %4905 = vmatpush.msra.mxu0 0.0
        %4906 = vmatpush.msra.mxu0 0.0
        %4907 = vmatpush.msra.mxu0 0.0
        %4908 = vmatpush.msra.mxu0 0.0
        %4909 = vmatpush.msra.mxu0 0.0
        %4910 = vmatpush.msra.mxu0 0.0
        %4911 = vmatpush.msra.mxu0 0.0
        %4912 = vmatpush.msra.mxu0 0.0
        %4913 = vmatpush.msra.mxu0 0.0
        %4914 = vmatpush.msra.mxu0 0.0
        %4915 = vmatpush.msra.mxu0 0.0
        %v4916 = vand.u32 %v1849, 4294901760
        %4917 = vmatpush.msra.mxu0 %v4916
        %v4918 = vand.u32 %v1845, 4294901760
        %4919 = vmatpush.msra.mxu0 %v4918
        %v4920 = vand.u32 %v1884, 4294901760
        %4921 = vmatmul.f32.gmra.mxu0 %v4920
        %v4922 = vpop.f32.mrf.mxu0
        %v4923 = vadd.f32 %v4896, %v4922
        %v4924 = vand.u32 %v1887, 4294901760
        %4925 = vmatmul.f32.gmra.mxu0 %v4924
        %v4926 = vpop.f32.mrf.mxu0
        %v4927 = vadd.f32 %v4900, %v4926
        %4928 = vdwg.mxu0
        %4929 = vmatpush.msra.mxu0 0.0
        %4930 = vmatpush.msra.mxu0 0.0
        %4931 = vmatpush.msra.mxu0 0.0
        %4932 = vmatpush.msra.mxu0 0.0
        %4933 = vmatpush.msra.mxu0 0.0
        %4934 = vmatpush.msra.mxu0 0.0
        %4935 = vmatpush.msra.mxu0 0.0
        %4936 = vmatpush.msra.mxu0 0.0
        %4937 = vmatpush.msra.mxu0 0.0
        %4938 = vmatpush.msra.mxu0 0.0
        %4939 = vmatpush.msra.mxu0 0.0
        %4940 = vmatpush.msra.mxu0 0.0
        %4941 = vmatpush.msra.mxu0 0.0
        %4942 = vmatpush.msra.mxu0 0.0
        %v4943 = vand.u32 %v1857, 4294901760
        %4944 = vmatpush.msra.mxu0 %v4943
        %v4945 = vand.u32 %v1853, 4294901760
        %4946 = vmatpush.msra.mxu0 %v4945
        %v4947 = vand.u32 %v1884, 4294901760
        %v4948 = vsub.f32 %v1884, %v4947
        %v4949 = vand.u32 %v4948, 4294901760
        %v4950 = vsub.f32 %v4948, %v4949
        %v4951 = vand.u32 %v4950, 4294901760
        %4952 = vmatmul.f32.gmra.mxu0 %v4951
        %v4953 = vpop.f32.mrf.mxu0
        %v4954 = vadd.f32 0.0, %v4953
        %v4955 = vand.u32 %v1887, 4294901760
        %v4956 = vsub.f32 %v1887, %v4955
        %v4957 = vand.u32 %v4956, 4294901760
        %v4958 = vsub.f32 %v4956, %v4957
        %v4959 = vand.u32 %v4958, 4294901760
        %4960 = vmatmul.f32.gmra.mxu0 %v4959
        %v4961 = vpop.f32.mrf.mxu0
        %v4962 = vadd.f32 0.0, %v4961
        %4963 = vdwg.mxu0
        %4964 = vmatpush.msra.mxu0 0.0
        %4965 = vmatpush.msra.mxu0 0.0
        %4966 = vmatpush.msra.mxu0 0.0
        %4967 = vmatpush.msra.mxu0 0.0
        %4968 = vmatpush.msra.mxu0 0.0
        %4969 = vmatpush.msra.mxu0 0.0
        %4970 = vmatpush.msra.mxu0 0.0
        %4971 = vmatpush.msra.mxu0 0.0
        %4972 = vmatpush.msra.mxu0 0.0
        %4973 = vmatpush.msra.mxu0 0.0
        %4974 = vmatpush.msra.mxu0 0.0
        %4975 = vmatpush.msra.mxu0 0.0
        %4976 = vmatpush.msra.mxu0 0.0
        %4977 = vmatpush.msra.mxu0 0.0
        %v4978 = vand.u32 %v1857, 4294901760
        %v4979 = vsub.f32 %v1857, %v4978
        %v4980 = vand.u32 %v4979, 4294901760
        %v4981 = vsub.f32 %v4979, %v4980
        %v4982 = vand.u32 %v4981, 4294901760
        %4983 = vmatpush.msra.mxu0 %v4982
        %v4984 = vand.u32 %v1853, 4294901760
        %v4985 = vsub.f32 %v1853, %v4984
        %v4986 = vand.u32 %v4985, 4294901760
        %v4987 = vsub.f32 %v4985, %v4986
        %v4988 = vand.u32 %v4987, 4294901760
        %4989 = vmatpush.msra.mxu0 %v4988
        %v4990 = vand.u32 %v1884, 4294901760
        %4991 = vmatmul.f32.gmra.mxu0 %v4990
        %v4992 = vpop.f32.mrf.mxu0
        %v4993 = vadd.f32 %v4954, %v4992
        %v4994 = vand.u32 %v1887, 4294901760
        %4995 = vmatmul.f32.gmra.mxu0 %v4994
        %v4996 = vpop.f32.mrf.mxu0
        %v4997 = vadd.f32 %v4962, %v4996
        %4998 = vdwg.mxu0
        %4999 = vmatpush.msra.mxu0 0.0
        %5000 = vmatpush.msra.mxu0 0.0
        %5001 = vmatpush.msra.mxu0 0.0
        %5002 = vmatpush.msra.mxu0 0.0
        %5003 = vmatpush.msra.mxu0 0.0
        %5004 = vmatpush.msra.mxu0 0.0
        %5005 = vmatpush.msra.mxu0 0.0
        %5006 = vmatpush.msra.mxu0 0.0
        %5007 = vmatpush.msra.mxu0 0.0
        %5008 = vmatpush.msra.mxu0 0.0
        %5009 = vmatpush.msra.mxu0 0.0
        %5010 = vmatpush.msra.mxu0 0.0
        %5011 = vmatpush.msra.mxu0 0.0
        %5012 = vmatpush.msra.mxu0 0.0
        %v5013 = vand.u32 %v1857, 4294901760
        %v5014 = vsub.f32 %v1857, %v5013
        %5015 = vmatpush.msra.mxu0 %v5014
        %v5016 = vand.u32 %v1853, 4294901760
        %v5017 = vsub.f32 %v1853, %v5016
        %5018 = vmatpush.msra.mxu0 %v5017
        %v5019 = vand.u32 %v1884, 4294901760
        %v5020 = vsub.f32 %v1884, %v5019
        %5021 = vmatmul.f32.gmra.mxu0 %v5020
        %v5022 = vpop.f32.mrf.mxu0
        %v5023 = vadd.f32 %v4993, %v5022
        %v5024 = vand.u32 %v1887, 4294901760
        %v5025 = vsub.f32 %v1887, %v5024
        %5026 = vmatmul.f32.gmra.mxu0 %v5025
        %v5027 = vpop.f32.mrf.mxu0
        %v5028 = vadd.f32 %v4997, %v5027
        %5029 = vdwg.mxu0
        %5030 = vmatpush.msra.mxu0 0.0
        %5031 = vmatpush.msra.mxu0 0.0
        %5032 = vmatpush.msra.mxu0 0.0
        %5033 = vmatpush.msra.mxu0 0.0
        %5034 = vmatpush.msra.mxu0 0.0
        %5035 = vmatpush.msra.mxu0 0.0
        %5036 = vmatpush.msra.mxu0 0.0
        %5037 = vmatpush.msra.mxu0 0.0
        %5038 = vmatpush.msra.mxu0 0.0
        %5039 = vmatpush.msra.mxu0 0.0
        %5040 = vmatpush.msra.mxu0 0.0
        %5041 = vmatpush.msra.mxu0 0.0
        %5042 = vmatpush.msra.mxu0 0.0
        %5043 = vmatpush.msra.mxu0 0.0
        %v5044 = vand.u32 %v1857, 4294901760
        %5045 = vmatpush.msra.mxu0 %v5044
        %v5046 = vand.u32 %v1853, 4294901760
        %5047 = vmatpush.msra.mxu0 %v5046
        %v5048 = vand.u32 %v1884, 4294901760
        %v5049 = vsub.f32 %v1884, %v5048
        %v5050 = vand.u32 %v5049, 4294901760
        %5051 = vmatmul.f32.gmra.mxu0 %v5050
        %v5052 = vpop.f32.mrf.mxu0
        %v5053 = vadd.f32 %v5023, %v5052
        %v5054 = vand.u32 %v1887, 4294901760
        %v5055 = vsub.f32 %v1887, %v5054
        %v5056 = vand.u32 %v5055, 4294901760
        %5057 = vmatmul.f32.gmra.mxu0 %v5056
        %v5058 = vpop.f32.mrf.mxu0
        %v5059 = vadd.f32 %v5028, %v5058
        %5060 = vdwg.mxu0
        %5061 = vmatpush.msra.mxu0 0.0
        %5062 = vmatpush.msra.mxu0 0.0
        %5063 = vmatpush.msra.mxu0 0.0
        %5064 = vmatpush.msra.mxu0 0.0
        %5065 = vmatpush.msra.mxu0 0.0
        %5066 = vmatpush.msra.mxu0 0.0
        %5067 = vmatpush.msra.mxu0 0.0
        %5068 = vmatpush.msra.mxu0 0.0
        %5069 = vmatpush.msra.mxu0 0.0
        %5070 = vmatpush.msra.mxu0 0.0
        %5071 = vmatpush.msra.mxu0 0.0
        %5072 = vmatpush.msra.mxu0 0.0
        %5073 = vmatpush.msra.mxu0 0.0
        %5074 = vmatpush.msra.mxu0 0.0
        %v5075 = vand.u32 %v1857, 4294901760
        %v5076 = vsub.f32 %v1857, %v5075
        %v5077 = vand.u32 %v5076, 4294901760
        %5078 = vmatpush.msra.mxu0 %v5077
        %v5079 = vand.u32 %v1853, 4294901760
        %v5080 = vsub.f32 %v1853, %v5079
        %v5081 = vand.u32 %v5080, 4294901760
        %5082 = vmatpush.msra.mxu0 %v5081
        %v5083 = vand.u32 %v1884, 4294901760
        %5084 = vmatmul.f32.gmra.mxu0 %v5083
        %v5085 = vpop.f32.mrf.mxu0
        %v5086 = vadd.f32 %v5053, %v5085
        %v5087 = vand.u32 %v1887, 4294901760
        %5088 = vmatmul.f32.gmra.mxu0 %v5087
        %v5089 = vpop.f32.mrf.mxu0
        %v5090 = vadd.f32 %v5059, %v5089
        %5091 = vdwg.mxu0
        %5092 = vmatpush.msra.mxu0 0.0
        %5093 = vmatpush.msra.mxu0 0.0
        %5094 = vmatpush.msra.mxu0 0.0
        %5095 = vmatpush.msra.mxu0 0.0
        %5096 = vmatpush.msra.mxu0 0.0
        %5097 = vmatpush.msra.mxu0 0.0
        %5098 = vmatpush.msra.mxu0 0.0
        %5099 = vmatpush.msra.mxu0 0.0
        %5100 = vmatpush.msra.mxu0 0.0
        %5101 = vmatpush.msra.mxu0 0.0
        %5102 = vmatpush.msra.mxu0 0.0
        %5103 = vmatpush.msra.mxu0 0.0
        %5104 = vmatpush.msra.mxu0 0.0
        %5105 = vmatpush.msra.mxu0 0.0
        %v5106 = vand.u32 %v1857, 4294901760
        %5107 = vmatpush.msra.mxu0 %v5106
        %v5108 = vand.u32 %v1853, 4294901760
        %5109 = vmatpush.msra.mxu0 %v5108
        %v5110 = vand.u32 %v1884, 4294901760
        %5111 = vmatmul.f32.gmra.mxu0 %v5110
        %v5112 = vpop.f32.mrf.mxu0
        %v5113 = vadd.f32 %v5086, %v5112
        %v5114 = vand.u32 %v1887, 4294901760
        %5115 = vmatmul.f32.gmra.mxu0 %v5114
        %v5116 = vpop.f32.mrf.mxu0
        %v5117 = vadd.f32 %v5090, %v5116
        %5118 = vdwg.mxu0
        %5119 = vmatpush.msra.mxu0 0.0
        %5120 = vmatpush.msra.mxu0 0.0
        %5121 = vmatpush.msra.mxu0 0.0
        %5122 = vmatpush.msra.mxu0 0.0
        %5123 = vmatpush.msra.mxu0 0.0
        %5124 = vmatpush.msra.mxu0 0.0
        %5125 = vmatpush.msra.mxu0 0.0
        %5126 = vmatpush.msra.mxu0 0.0
        %5127 = vmatpush.msra.mxu0 0.0
        %5128 = vmatpush.msra.mxu0 0.0
        %5129 = vmatpush.msra.mxu0 0.0
        %5130 = vmatpush.msra.mxu0 0.0
        %5131 = vmatpush.msra.mxu0 0.0
        %5132 = vmatpush.msra.mxu0 0.0
        %v5133 = vand.u32 %v1865, 4294901760
        %5134 = vmatpush.msra.mxu0 %v5133
        %v5135 = vand.u32 %v1861, 4294901760
        %5136 = vmatpush.msra.mxu0 %v5135
        %v5137 = vand.u32 %v1884, 4294901760
        %v5138 = vsub.f32 %v1884, %v5137
        %v5139 = vand.u32 %v5138, 4294901760
        %v5140 = vsub.f32 %v5138, %v5139
        %v5141 = vand.u32 %v5140, 4294901760
        %5142 = vmatmul.f32.gmra.mxu0 %v5141
        %v5143 = vpop.f32.mrf.mxu0
        %v5144 = vadd.f32 0.0, %v5143
        %v5145 = vand.u32 %v1887, 4294901760
        %v5146 = vsub.f32 %v1887, %v5145
        %v5147 = vand.u32 %v5146, 4294901760
        %v5148 = vsub.f32 %v5146, %v5147
        %v5149 = vand.u32 %v5148, 4294901760
        %5150 = vmatmul.f32.gmra.mxu0 %v5149
        %v5151 = vpop.f32.mrf.mxu0
        %v5152 = vadd.f32 0.0, %v5151
        %5153 = vdwg.mxu0
        %5154 = vmatpush.msra.mxu0 0.0
        %5155 = vmatpush.msra.mxu0 0.0
        %5156 = vmatpush.msra.mxu0 0.0
        %5157 = vmatpush.msra.mxu0 0.0
        %5158 = vmatpush.msra.mxu0 0.0
        %5159 = vmatpush.msra.mxu0 0.0
        %5160 = vmatpush.msra.mxu0 0.0
        %5161 = vmatpush.msra.mxu0 0.0
        %5162 = vmatpush.msra.mxu0 0.0
        %5163 = vmatpush.msra.mxu0 0.0
        %5164 = vmatpush.msra.mxu0 0.0
        %5165 = vmatpush.msra.mxu0 0.0
        %5166 = vmatpush.msra.mxu0 0.0
        %5167 = vmatpush.msra.mxu0 0.0
        %v5168 = vand.u32 %v1865, 4294901760
        %v5169 = vsub.f32 %v1865, %v5168
        %v5170 = vand.u32 %v5169, 4294901760
        %v5171 = vsub.f32 %v5169, %v5170
        %v5172 = vand.u32 %v5171, 4294901760
        %5173 = vmatpush.msra.mxu0 %v5172
        %v5174 = vand.u32 %v1861, 4294901760
        %v5175 = vsub.f32 %v1861, %v5174
        %v5176 = vand.u32 %v5175, 4294901760
        %v5177 = vsub.f32 %v5175, %v5176
        %v5178 = vand.u32 %v5177, 4294901760
        %5179 = vmatpush.msra.mxu0 %v5178
        %v5180 = vand.u32 %v1884, 4294901760
        %5181 = vmatmul.f32.gmra.mxu0 %v5180
        %v5182 = vpop.f32.mrf.mxu0
        %v5183 = vadd.f32 %v5144, %v5182
        %v5184 = vand.u32 %v1887, 4294901760
        %5185 = vmatmul.f32.gmra.mxu0 %v5184
        %v5186 = vpop.f32.mrf.mxu0
        %v5187 = vadd.f32 %v5152, %v5186
        %5188 = vdwg.mxu0
        %5189 = vmatpush.msra.mxu0 0.0
        %5190 = vmatpush.msra.mxu0 0.0
        %5191 = vmatpush.msra.mxu0 0.0
        %5192 = vmatpush.msra.mxu0 0.0
        %5193 = vmatpush.msra.mxu0 0.0
        %5194 = vmatpush.msra.mxu0 0.0
        %5195 = vmatpush.msra.mxu0 0.0
        %5196 = vmatpush.msra.mxu0 0.0
        %5197 = vmatpush.msra.mxu0 0.0
        %5198 = vmatpush.msra.mxu0 0.0
        %5199 = vmatpush.msra.mxu0 0.0
        %5200 = vmatpush.msra.mxu0 0.0
        %5201 = vmatpush.msra.mxu0 0.0
        %5202 = vmatpush.msra.mxu0 0.0
        %v5203 = vand.u32 %v1865, 4294901760
        %v5204 = vsub.f32 %v1865, %v5203
        %5205 = vmatpush.msra.mxu0 %v5204
        %v5206 = vand.u32 %v1861, 4294901760
        %v5207 = vsub.f32 %v1861, %v5206
        %5208 = vmatpush.msra.mxu0 %v5207
        %v5209 = vand.u32 %v1884, 4294901760
        %v5210 = vsub.f32 %v1884, %v5209
        %5211 = vmatmul.f32.gmra.mxu0 %v5210
        %v5212 = vpop.f32.mrf.mxu0
        %v5213 = vadd.f32 %v5183, %v5212
        %v5214 = vand.u32 %v1887, 4294901760
        %v5215 = vsub.f32 %v1887, %v5214
        %5216 = vmatmul.f32.gmra.mxu0 %v5215
        %v5217 = vpop.f32.mrf.mxu0
        %v5218 = vadd.f32 %v5187, %v5217
        %5219 = vdwg.mxu0
        %5220 = vmatpush.msra.mxu0 0.0
        %5221 = vmatpush.msra.mxu0 0.0
        %5222 = vmatpush.msra.mxu0 0.0
        %5223 = vmatpush.msra.mxu0 0.0
        %5224 = vmatpush.msra.mxu0 0.0
        %5225 = vmatpush.msra.mxu0 0.0
        %5226 = vmatpush.msra.mxu0 0.0
        %5227 = vmatpush.msra.mxu0 0.0
        %5228 = vmatpush.msra.mxu0 0.0
        %5229 = vmatpush.msra.mxu0 0.0
        %5230 = vmatpush.msra.mxu0 0.0
        %5231 = vmatpush.msra.mxu0 0.0
        %5232 = vmatpush.msra.mxu0 0.0
        %5233 = vmatpush.msra.mxu0 0.0
        %v5234 = vand.u32 %v1865, 4294901760
        %5235 = vmatpush.msra.mxu0 %v5234
        %v5236 = vand.u32 %v1861, 4294901760
        %5237 = vmatpush.msra.mxu0 %v5236
        %v5238 = vand.u32 %v1884, 4294901760
        %v5239 = vsub.f32 %v1884, %v5238
        %v5240 = vand.u32 %v5239, 4294901760
        %5241 = vmatmul.f32.gmra.mxu0 %v5240
        %v5242 = vpop.f32.mrf.mxu0
        %v5243 = vadd.f32 %v5213, %v5242
        %v5244 = vand.u32 %v1887, 4294901760
        %v5245 = vsub.f32 %v1887, %v5244
        %v5246 = vand.u32 %v5245, 4294901760
        %5247 = vmatmul.f32.gmra.mxu0 %v5246
        %v5248 = vpop.f32.mrf.mxu0
        %v5249 = vadd.f32 %v5218, %v5248
        %5250 = vdwg.mxu0
        %5251 = vmatpush.msra.mxu0 0.0
        %5252 = vmatpush.msra.mxu0 0.0
        %5253 = vmatpush.msra.mxu0 0.0
        %5254 = vmatpush.msra.mxu0 0.0
        %5255 = vmatpush.msra.mxu0 0.0
        %5256 = vmatpush.msra.mxu0 0.0
        %5257 = vmatpush.msra.mxu0 0.0
        %5258 = vmatpush.msra.mxu0 0.0
        %5259 = vmatpush.msra.mxu0 0.0
        %5260 = vmatpush.msra.mxu0 0.0
        %5261 = vmatpush.msra.mxu0 0.0
        %5262 = vmatpush.msra.mxu0 0.0
        %5263 = vmatpush.msra.mxu0 0.0
        %5264 = vmatpush.msra.mxu0 0.0
        %v5265 = vand.u32 %v1865, 4294901760
        %v5266 = vsub.f32 %v1865, %v5265
        %v5267 = vand.u32 %v5266, 4294901760
        %5268 = vmatpush.msra.mxu0 %v5267
        %v5269 = vand.u32 %v1861, 4294901760
        %v5270 = vsub.f32 %v1861, %v5269
        %v5271 = vand.u32 %v5270, 4294901760
        %5272 = vmatpush.msra.mxu0 %v5271
        %v5273 = vand.u32 %v1884, 4294901760
        %5274 = vmatmul.f32.gmra.mxu0 %v5273
        %v5275 = vpop.f32.mrf.mxu0
        %v5276 = vadd.f32 %v5243, %v5275
        %v5277 = vand.u32 %v1887, 4294901760
        %5278 = vmatmul.f32.gmra.mxu0 %v5277
        %v5279 = vpop.f32.mrf.mxu0
        %v5280 = vadd.f32 %v5249, %v5279
        %5281 = vdwg.mxu0
        %5282 = vmatpush.msra.mxu0 0.0
        %5283 = vmatpush.msra.mxu0 0.0
        %5284 = vmatpush.msra.mxu0 0.0
        %5285 = vmatpush.msra.mxu0 0.0
        %5286 = vmatpush.msra.mxu0 0.0
        %5287 = vmatpush.msra.mxu0 0.0
        %5288 = vmatpush.msra.mxu0 0.0
        %5289 = vmatpush.msra.mxu0 0.0
        %5290 = vmatpush.msra.mxu0 0.0
        %5291 = vmatpush.msra.mxu0 0.0
        %5292 = vmatpush.msra.mxu0 0.0
        %5293 = vmatpush.msra.mxu0 0.0
        %5294 = vmatpush.msra.mxu0 0.0
        %5295 = vmatpush.msra.mxu0 0.0
        %v5296 = vand.u32 %v1865, 4294901760
        %5297 = vmatpush.msra.mxu0 %v5296
        %v5298 = vand.u32 %v1861, 4294901760
        %5299 = vmatpush.msra.mxu0 %v5298
        %v5300 = vand.u32 %v1884, 4294901760
        %5301 = vmatmul.f32.gmra.mxu0 %v5300
        %v5302 = vpop.f32.mrf.mxu0
        %v5303 = vadd.f32 %v5276, %v5302
        %v5304 = vand.u32 %v1887, 4294901760
        %5305 = vmatmul.f32.gmra.mxu0 %v5304
        %v5306 = vpop.f32.mrf.mxu0
        %v5307 = vadd.f32 %v5280, %v5306
        %5308 = vdwg.mxu0
        %5309 = vmatpush.msra.mxu0 0.0
        %5310 = vmatpush.msra.mxu0 0.0
        %5311 = vmatpush.msra.mxu0 0.0
        %5312 = vmatpush.msra.mxu0 0.0
        %5313 = vmatpush.msra.mxu0 0.0
        %5314 = vmatpush.msra.mxu0 0.0
        %5315 = vmatpush.msra.mxu0 0.0
        %5316 = vmatpush.msra.mxu0 0.0
        %5317 = vmatpush.msra.mxu0 0.0
        %5318 = vmatpush.msra.mxu0 0.0
        %5319 = vmatpush.msra.mxu0 0.0
        %5320 = vmatpush.msra.mxu0 0.0
        %5321 = vmatpush.msra.mxu0 0.0
        %5322 = vmatpush.msra.mxu0 0.0
        %v5323 = vand.u32 %v1873, 4294901760
        %5324 = vmatpush.msra.mxu0 %v5323
        %v5325 = vand.u32 %v1869, 4294901760
        %5326 = vmatpush.msra.mxu0 %v5325
        %v5327 = vand.u32 %v1884, 4294901760
        %v5328 = vsub.f32 %v1884, %v5327
        %v5329 = vand.u32 %v5328, 4294901760
        %v5330 = vsub.f32 %v5328, %v5329
        %v5331 = vand.u32 %v5330, 4294901760
        %5332 = vmatmul.f32.gmra.mxu0 %v5331
        %v5333 = vpop.f32.mrf.mxu0
        %v5334 = vadd.f32 0.0, %v5333
        %v5335 = vand.u32 %v1887, 4294901760
        %v5336 = vsub.f32 %v1887, %v5335
        %v5337 = vand.u32 %v5336, 4294901760
        %v5338 = vsub.f32 %v5336, %v5337
        %v5339 = vand.u32 %v5338, 4294901760
        %5340 = vmatmul.f32.gmra.mxu0 %v5339
        %v5341 = vpop.f32.mrf.mxu0
        %v5342 = vadd.f32 0.0, %v5341
        %5343 = vdwg.mxu0
        %5344 = vmatpush.msra.mxu0 0.0
        %5345 = vmatpush.msra.mxu0 0.0
        %5346 = vmatpush.msra.mxu0 0.0
        %5347 = vmatpush.msra.mxu0 0.0
        %5348 = vmatpush.msra.mxu0 0.0
        %5349 = vmatpush.msra.mxu0 0.0
        %5350 = vmatpush.msra.mxu0 0.0
        %5351 = vmatpush.msra.mxu0 0.0
        %5352 = vmatpush.msra.mxu0 0.0
        %5353 = vmatpush.msra.mxu0 0.0
        %5354 = vmatpush.msra.mxu0 0.0
        %5355 = vmatpush.msra.mxu0 0.0
        %5356 = vmatpush.msra.mxu0 0.0
        %5357 = vmatpush.msra.mxu0 0.0
        %v5358 = vand.u32 %v1873, 4294901760
        %v5359 = vsub.f32 %v1873, %v5358
        %v5360 = vand.u32 %v5359, 4294901760
        %v5361 = vsub.f32 %v5359, %v5360
        %v5362 = vand.u32 %v5361, 4294901760
        %5363 = vmatpush.msra.mxu0 %v5362
        %v5364 = vand.u32 %v1869, 4294901760
        %v5365 = vsub.f32 %v1869, %v5364
        %v5366 = vand.u32 %v5365, 4294901760
        %v5367 = vsub.f32 %v5365, %v5366
        %v5368 = vand.u32 %v5367, 4294901760
        %5369 = vmatpush.msra.mxu0 %v5368
        %v5370 = vand.u32 %v1884, 4294901760
        %5371 = vmatmul.f32.gmra.mxu0 %v5370
        %v5372 = vpop.f32.mrf.mxu0
        %v5373 = vadd.f32 %v5334, %v5372
        %v5374 = vand.u32 %v1887, 4294901760
        %5375 = vmatmul.f32.gmra.mxu0 %v5374
        %v5376 = vpop.f32.mrf.mxu0
        %v5377 = vadd.f32 %v5342, %v5376
        %5378 = vdwg.mxu0
        %5379 = vmatpush.msra.mxu0 0.0
        %5380 = vmatpush.msra.mxu0 0.0
        %5381 = vmatpush.msra.mxu0 0.0
        %5382 = vmatpush.msra.mxu0 0.0
        %5383 = vmatpush.msra.mxu0 0.0
        %5384 = vmatpush.msra.mxu0 0.0
        %5385 = vmatpush.msra.mxu0 0.0
        %5386 = vmatpush.msra.mxu0 0.0
        %5387 = vmatpush.msra.mxu0 0.0
        %5388 = vmatpush.msra.mxu0 0.0
        %5389 = vmatpush.msra.mxu0 0.0
        %5390 = vmatpush.msra.mxu0 0.0
        %5391 = vmatpush.msra.mxu0 0.0
        %5392 = vmatpush.msra.mxu0 0.0
        %v5393 = vand.u32 %v1873, 4294901760
        %v5394 = vsub.f32 %v1873, %v5393
        %5395 = vmatpush.msra.mxu0 %v5394
        %v5396 = vand.u32 %v1869, 4294901760
        %v5397 = vsub.f32 %v1869, %v5396
        %5398 = vmatpush.msra.mxu0 %v5397
        %v5399 = vand.u32 %v1884, 4294901760
        %v5400 = vsub.f32 %v1884, %v5399
        %5401 = vmatmul.f32.gmra.mxu0 %v5400
        %v5402 = vpop.f32.mrf.mxu0
        %v5403 = vadd.f32 %v5373, %v5402
        %v5404 = vand.u32 %v1887, 4294901760
        %v5405 = vsub.f32 %v1887, %v5404
        %5406 = vmatmul.f32.gmra.mxu0 %v5405
        %v5407 = vpop.f32.mrf.mxu0
        %v5408 = vadd.f32 %v5377, %v5407
        %5409 = vdwg.mxu0
        %5410 = vmatpush.msra.mxu0 0.0
        %5411 = vmatpush.msra.mxu0 0.0
        %5412 = vmatpush.msra.mxu0 0.0
        %5413 = vmatpush.msra.mxu0 0.0
        %5414 = vmatpush.msra.mxu0 0.0
        %5415 = vmatpush.msra.mxu0 0.0
        %5416 = vmatpush.msra.mxu0 0.0
        %5417 = vmatpush.msra.mxu0 0.0
        %5418 = vmatpush.msra.mxu0 0.0
        %5419 = vmatpush.msra.mxu0 0.0
        %5420 = vmatpush.msra.mxu0 0.0
        %5421 = vmatpush.msra.mxu0 0.0
        %5422 = vmatpush.msra.mxu0 0.0
        %5423 = vmatpush.msra.mxu0 0.0
        %v5424 = vand.u32 %v1873, 4294901760
        %5425 = vmatpush.msra.mxu0 %v5424
        %v5426 = vand.u32 %v1869, 4294901760
        %5427 = vmatpush.msra.mxu0 %v5426
        %v5428 = vand.u32 %v1884, 4294901760
        %v5429 = vsub.f32 %v1884, %v5428
        %v5430 = vand.u32 %v5429, 4294901760
        %5431 = vmatmul.f32.gmra.mxu0 %v5430
        %v5432 = vpop.f32.mrf.mxu0
        %v5433 = vadd.f32 %v5403, %v5432
        %v5434 = vand.u32 %v1887, 4294901760
        %v5435 = vsub.f32 %v1887, %v5434
        %v5436 = vand.u32 %v5435, 4294901760
        %5437 = vmatmul.f32.gmra.mxu0 %v5436
        %v5438 = vpop.f32.mrf.mxu0
        %v5439 = vadd.f32 %v5408, %v5438
        %5440 = vdwg.mxu0
        %5441 = vmatpush.msra.mxu0 0.0
        %5442 = vmatpush.msra.mxu0 0.0
        %5443 = vmatpush.msra.mxu0 0.0
        %5444 = vmatpush.msra.mxu0 0.0
        %5445 = vmatpush.msra.mxu0 0.0
        %5446 = vmatpush.msra.mxu0 0.0
        %5447 = vmatpush.msra.mxu0 0.0
        %5448 = vmatpush.msra.mxu0 0.0
        %5449 = vmatpush.msra.mxu0 0.0
        %5450 = vmatpush.msra.mxu0 0.0
        %5451 = vmatpush.msra.mxu0 0.0
        %5452 = vmatpush.msra.mxu0 0.0
        %5453 = vmatpush.msra.mxu0 0.0
        %5454 = vmatpush.msra.mxu0 0.0
        %v5455 = vand.u32 %v1873, 4294901760
        %v5456 = vsub.f32 %v1873, %v5455
        %v5457 = vand.u32 %v5456, 4294901760
        %5458 = vmatpush.msra.mxu0 %v5457
        %v5459 = vand.u32 %v1869, 4294901760
        %v5460 = vsub.f32 %v1869, %v5459
        %v5461 = vand.u32 %v5460, 4294901760
        %5462 = vmatpush.msra.mxu0 %v5461
        %v5463 = vand.u32 %v1884, 4294901760
        %5464 = vmatmul.f32.gmra.mxu0 %v5463
        %v5465 = vpop.f32.mrf.mxu0
        %v5466 = vadd.f32 %v5433, %v5465
        %v5467 = vand.u32 %v1887, 4294901760
        %5468 = vmatmul.f32.gmra.mxu0 %v5467
        %v5469 = vpop.f32.mrf.mxu0
        %v5470 = vadd.f32 %v5439, %v5469
        %5471 = vdwg.mxu0
        %5472 = vmatpush.msra.mxu0 0.0
        %5473 = vmatpush.msra.mxu0 0.0
        %5474 = vmatpush.msra.mxu0 0.0
        %5475 = vmatpush.msra.mxu0 0.0
        %5476 = vmatpush.msra.mxu0 0.0
        %5477 = vmatpush.msra.mxu0 0.0
        %5478 = vmatpush.msra.mxu0 0.0
        %5479 = vmatpush.msra.mxu0 0.0
        %5480 = vmatpush.msra.mxu0 0.0
        %5481 = vmatpush.msra.mxu0 0.0
        %5482 = vmatpush.msra.mxu0 0.0
        %5483 = vmatpush.msra.mxu0 0.0
        %5484 = vmatpush.msra.mxu0 0.0
        %5485 = vmatpush.msra.mxu0 0.0
        %v5486 = vand.u32 %v1873, 4294901760
        %5487 = vmatpush.msra.mxu0 %v5486
        %v5488 = vand.u32 %v1869, 4294901760
        %5489 = vmatpush.msra.mxu0 %v5488
        %v5490 = vand.u32 %v1884, 4294901760
        %5491 = vmatmul.f32.gmra.mxu0 %v5490
        %v5492 = vpop.f32.mrf.mxu0
        %v5493 = vadd.f32 %v5466, %v5492
        %v5494 = vand.u32 %v1887, 4294901760
        %5495 = vmatmul.f32.gmra.mxu0 %v5494
        %v5496 = vpop.f32.mrf.mxu0
        %v5497 = vadd.f32 %v5470, %v5496
        %5498 = vdwg.mxu0
        %5499 = vmatpush.msra.mxu0 0.0
        %5500 = vmatpush.msra.mxu0 0.0
        %5501 = vmatpush.msra.mxu0 0.0
        %5502 = vmatpush.msra.mxu0 0.0
        %5503 = vmatpush.msra.mxu0 0.0
        %5504 = vmatpush.msra.mxu0 0.0
        %5505 = vmatpush.msra.mxu0 0.0
        %5506 = vmatpush.msra.mxu0 0.0
        %5507 = vmatpush.msra.mxu0 0.0
        %5508 = vmatpush.msra.mxu0 0.0
        %5509 = vmatpush.msra.mxu0 0.0
        %5510 = vmatpush.msra.mxu0 0.0
        %5511 = vmatpush.msra.mxu0 0.0
        %5512 = vmatpush.msra.mxu0 0.0
        %v5513 = vand.u32 %v1881, 4294901760
        %5514 = vmatpush.msra.mxu0 %v5513
        %v5515 = vand.u32 %v1877, 4294901760
        %5516 = vmatpush.msra.mxu0 %v5515
        %v5517 = vand.u32 %v1884, 4294901760
        %v5518 = vsub.f32 %v1884, %v5517
        %v5519 = vand.u32 %v5518, 4294901760
        %v5520 = vsub.f32 %v5518, %v5519
        %v5521 = vand.u32 %v5520, 4294901760
        %5522 = vmatmul.f32.gmra.mxu0 %v5521
        %v5523 = vpop.f32.mrf.mxu0
        %v5524 = vadd.f32 0.0, %v5523
        %v5525 = vand.u32 %v1887, 4294901760
        %v5526 = vsub.f32 %v1887, %v5525
        %v5527 = vand.u32 %v5526, 4294901760
        %v5528 = vsub.f32 %v5526, %v5527
        %v5529 = vand.u32 %v5528, 4294901760
        %5530 = vmatmul.f32.gmra.mxu0 %v5529
        %v5531 = vpop.f32.mrf.mxu0
        %v5532 = vadd.f32 0.0, %v5531
        %5533 = vdwg.mxu0
        %5534 = vmatpush.msra.mxu0 0.0
        %5535 = vmatpush.msra.mxu0 0.0
        %5536 = vmatpush.msra.mxu0 0.0
        %5537 = vmatpush.msra.mxu0 0.0
        %5538 = vmatpush.msra.mxu0 0.0
        %5539 = vmatpush.msra.mxu0 0.0
        %5540 = vmatpush.msra.mxu0 0.0
        %5541 = vmatpush.msra.mxu0 0.0
        %5542 = vmatpush.msra.mxu0 0.0
        %5543 = vmatpush.msra.mxu0 0.0
        %5544 = vmatpush.msra.mxu0 0.0
        %5545 = vmatpush.msra.mxu0 0.0
        %5546 = vmatpush.msra.mxu0 0.0
        %5547 = vmatpush.msra.mxu0 0.0
        %v5548 = vand.u32 %v1881, 4294901760
        %v5549 = vsub.f32 %v1881, %v5548
        %v5550 = vand.u32 %v5549, 4294901760
        %v5551 = vsub.f32 %v5549, %v5550
        %v5552 = vand.u32 %v5551, 4294901760
        %5553 = vmatpush.msra.mxu0 %v5552
        %v5554 = vand.u32 %v1877, 4294901760
        %v5555 = vsub.f32 %v1877, %v5554
        %v5556 = vand.u32 %v5555, 4294901760
        %v5557 = vsub.f32 %v5555, %v5556
        %v5558 = vand.u32 %v5557, 4294901760
        %5559 = vmatpush.msra.mxu0 %v5558
        %v5560 = vand.u32 %v1884, 4294901760
        %5561 = vmatmul.f32.gmra.mxu0 %v5560
        %v5562 = vpop.f32.mrf.mxu0
        %v5563 = vadd.f32 %v5524, %v5562
        %v5564 = vand.u32 %v1887, 4294901760
        %5565 = vmatmul.f32.gmra.mxu0 %v5564
        %v5566 = vpop.f32.mrf.mxu0
        %v5567 = vadd.f32 %v5532, %v5566
        %5568 = vdwg.mxu0
        %5569 = vmatpush.msra.mxu0 0.0
        %5570 = vmatpush.msra.mxu0 0.0
        %5571 = vmatpush.msra.mxu0 0.0
        %5572 = vmatpush.msra.mxu0 0.0
        %5573 = vmatpush.msra.mxu0 0.0
        %5574 = vmatpush.msra.mxu0 0.0
        %5575 = vmatpush.msra.mxu0 0.0
        %5576 = vmatpush.msra.mxu0 0.0
        %5577 = vmatpush.msra.mxu0 0.0
        %5578 = vmatpush.msra.mxu0 0.0
        %5579 = vmatpush.msra.mxu0 0.0
        %5580 = vmatpush.msra.mxu0 0.0
        %5581 = vmatpush.msra.mxu0 0.0
        %5582 = vmatpush.msra.mxu0 0.0
        %v5583 = vand.u32 %v1881, 4294901760
        %v5584 = vsub.f32 %v1881, %v5583
        %5585 = vmatpush.msra.mxu0 %v5584
        %v5586 = vand.u32 %v1877, 4294901760
        %v5587 = vsub.f32 %v1877, %v5586
        %5588 = vmatpush.msra.mxu0 %v5587
        %v5589 = vand.u32 %v1884, 4294901760
        %v5590 = vsub.f32 %v1884, %v5589
        %5591 = vmatmul.f32.gmra.mxu0 %v5590
        %v5592 = vpop.f32.mrf.mxu0
        %v5593 = vadd.f32 %v5563, %v5592
        %v5594 = vand.u32 %v1887, 4294901760
        %v5595 = vsub.f32 %v1887, %v5594
        %5596 = vmatmul.f32.gmra.mxu0 %v5595
        %v5597 = vpop.f32.mrf.mxu0
        %v5598 = vadd.f32 %v5567, %v5597
        %5599 = vdwg.mxu0
        %5600 = vmatpush.msra.mxu0 0.0
        %5601 = vmatpush.msra.mxu0 0.0
        %5602 = vmatpush.msra.mxu0 0.0
        %5603 = vmatpush.msra.mxu0 0.0
        %5604 = vmatpush.msra.mxu0 0.0
        %5605 = vmatpush.msra.mxu0 0.0
        %5606 = vmatpush.msra.mxu0 0.0
        %5607 = vmatpush.msra.mxu0 0.0
        %5608 = vmatpush.msra.mxu0 0.0
        %5609 = vmatpush.msra.mxu0 0.0
        %5610 = vmatpush.msra.mxu0 0.0
        %5611 = vmatpush.msra.mxu0 0.0
        %5612 = vmatpush.msra.mxu0 0.0
        %5613 = vmatpush.msra.mxu0 0.0
        %v5614 = vand.u32 %v1881, 4294901760
        %5615 = vmatpush.msra.mxu0 %v5614
        %v5616 = vand.u32 %v1877, 4294901760
        %5617 = vmatpush.msra.mxu0 %v5616
        %v5618 = vand.u32 %v1884, 4294901760
        %v5619 = vsub.f32 %v1884, %v5618
        %v5620 = vand.u32 %v5619, 4294901760
        %5621 = vmatmul.f32.gmra.mxu0 %v5620
        %v5622 = vpop.f32.mrf.mxu0
        %v5623 = vadd.f32 %v5593, %v5622
        %v5624 = vand.u32 %v1887, 4294901760
        %v5625 = vsub.f32 %v1887, %v5624
        %v5626 = vand.u32 %v5625, 4294901760
        %5627 = vmatmul.f32.gmra.mxu0 %v5626
        %v5628 = vpop.f32.mrf.mxu0
        %v5629 = vadd.f32 %v5598, %v5628
        %5630 = vdwg.mxu0
        %5631 = vmatpush.msra.mxu0 0.0
        %5632 = vmatpush.msra.mxu0 0.0
        %5633 = vmatpush.msra.mxu0 0.0
        %5634 = vmatpush.msra.mxu0 0.0
        %5635 = vmatpush.msra.mxu0 0.0
        %5636 = vmatpush.msra.mxu0 0.0
        %5637 = vmatpush.msra.mxu0 0.0
        %5638 = vmatpush.msra.mxu0 0.0
        %5639 = vmatpush.msra.mxu0 0.0
        %5640 = vmatpush.msra.mxu0 0.0
        %5641 = vmatpush.msra.mxu0 0.0
        %5642 = vmatpush.msra.mxu0 0.0
        %5643 = vmatpush.msra.mxu0 0.0
        %5644 = vmatpush.msra.mxu0 0.0
        %v5645 = vand.u32 %v1881, 4294901760
        %v5646 = vsub.f32 %v1881, %v5645
        %v5647 = vand.u32 %v5646, 4294901760
        %5648 = vmatpush.msra.mxu0 %v5647
        %v5649 = vand.u32 %v1877, 4294901760
        %v5650 = vsub.f32 %v1877, %v5649
        %v5651 = vand.u32 %v5650, 4294901760
        %5652 = vmatpush.msra.mxu0 %v5651
        %v5653 = vand.u32 %v1884, 4294901760
        %5654 = vmatmul.f32.gmra.mxu0 %v5653
        %v5655 = vpop.f32.mrf.mxu0
        %v5656 = vadd.f32 %v5623, %v5655
        %v5657 = vand.u32 %v1887, 4294901760
        %5658 = vmatmul.f32.gmra.mxu0 %v5657
        %v5659 = vpop.f32.mrf.mxu0
        %v5660 = vadd.f32 %v5629, %v5659
        %5661 = vdwg.mxu0
        %5662 = vmatpush.msra.mxu0 0.0
        %5663 = vmatpush.msra.mxu0 0.0
        %5664 = vmatpush.msra.mxu0 0.0
        %5665 = vmatpush.msra.mxu0 0.0
        %5666 = vmatpush.msra.mxu0 0.0
        %5667 = vmatpush.msra.mxu0 0.0
        %5668 = vmatpush.msra.mxu0 0.0
        %5669 = vmatpush.msra.mxu0 0.0
        %5670 = vmatpush.msra.mxu0 0.0
        %5671 = vmatpush.msra.mxu0 0.0
        %5672 = vmatpush.msra.mxu0 0.0
        %5673 = vmatpush.msra.mxu0 0.0
        %5674 = vmatpush.msra.mxu0 0.0
        %5675 = vmatpush.msra.mxu0 0.0
        %v5676 = vand.u32 %v1881, 4294901760
        %5677 = vmatpush.msra.mxu0 %v5676
        %v5678 = vand.u32 %v1877, 4294901760
        %5679 = vmatpush.msra.mxu0 %v5678
        %v5680 = vand.u32 %v1884, 4294901760
        %5681 = vmatmul.f32.gmra.mxu0 %v5680
        %v5682 = vpop.f32.mrf.mxu0
        %v5683 = vadd.f32 %v5656, %v5682
        %v5684 = vand.u32 %v1887, 4294901760
        %5685 = vmatmul.f32.gmra.mxu0 %v5684
        %v5686 = vpop.f32.mrf.mxu0
        %v5687 = vadd.f32 %v5660, %v5686
        %5688 = vdwg.mxu0
        %v5689 = vmul.f32 %v2073, %v2073
        %v5690 = vmul.f32 %v2263, %v2263
        %v5691 = vmul.f32 %v2453, %v2453
        %v5692 = vmul.f32 %v2643, %v2643
        %v5693 = vmul.f32 %v2077, %v2077
        %v5694 = vmul.f32 %v2267, %v2267
        %v5695 = vmul.f32 %v2457, %v2457
        %v5696 = vmul.f32 %v2647, %v2647
        %v5697 = vmul.f32 %v2833, %v2833
        %v5698 = vmul.f32 %v3023, %v3023
        %v5699 = vmul.f32 %v3213, %v3213
        %v5700 = vmul.f32 %v3403, %v3403
        %v5701 = vmul.f32 %v2837, %v2837
        %v5702 = vmul.f32 %v3027, %v3027
        %v5703 = vmul.f32 %v3217, %v3217
        %v5704 = vmul.f32 %v3407, %v3407
        %v5705 = vmul.f32 %v2073, %v2833
        %v5706 = vmul.f32 %v2263, %v3023
        %v5707 = vmul.f32 %v2453, %v3213
        %v5708 = vmul.f32 %v2643, %v3403
        %v5709 = vmul.f32 %v2077, %v2837
        %v5710 = vmul.f32 %v2267, %v3027
        %v5711 = vmul.f32 %v2457, %v3217
        %v5712 = vmul.f32 %v2647, %v3407
        %v5713 = vsub.f32 %v3593, %v5689
        %v5714 = vsub.f32 %v3783, %v5690
        %v5715 = vsub.f32 %v3973, %v5691
        %v5716 = vsub.f32 %v4163, %v5692
        %v5717 = vsub.f32 %v3597, %v5693
        %v5718 = vsub.f32 %v3787, %v5694
        %v5719 = vsub.f32 %v3977, %v5695
        %v5720 = vsub.f32 %v4167, %v5696
        %v5721 = vsub.f32 %v4353, %v5697
        %v5722 = vsub.f32 %v4543, %v5698
        %v5723 = vsub.f32 %v4733, %v5699
        %v5724 = vsub.f32 %v4923, %v5700
        %v5725 = vsub.f32 %v4357, %v5701
        %v5726 = vsub.f32 %v4547, %v5702
        %v5727 = vsub.f32 %v4737, %v5703
        %v5728 = vsub.f32 %v4927, %v5704
        %v5729 = vsub.f32 %v5113, %v5705
        %v5730 = vsub.f32 %v5303, %v5706
        %v5731 = vsub.f32 %v5493, %v5707
        %v5732 = vsub.f32 %v5683, %v5708
        %v5733 = vsub.f32 %v5117, %v5709
        %v5734 = vsub.f32 %v5307, %v5710
        %v5735 = vsub.f32 %v5497, %v5711
        %v5736 = vsub.f32 %v5687, %v5712
        %v5737 = vmul.f32 %v5705, 2.0
        %v5738 = vmul.f32 %v5706, 2.0
        %v5739 = vmul.f32 %v5707, 2.0
        %v5740 = vmul.f32 %v5708, 2.0
        %v5741 = vmul.f32 %v5709, 2.0
        %v5742 = vmul.f32 %v5710, 2.0
        %v5743 = vmul.f32 %v5711, 2.0
        %v5744 = vmul.f32 %v5712, 2.0
        %v5745 = vadd.f32 %v5737, 0.0001
        %v5746 = vadd.f32 %v5738, 0.0001
        %v5747 = vadd.f32 %v5739, 0.0001
        %v5748 = vadd.f32 %v5740, 0.0001
        %v5749 = vadd.f32 %v5741, 0.0001
        %v5750 = vadd.f32 %v5742, 0.0001
        %v5751 = vadd.f32 %v5743, 0.0001
        %v5752 = vadd.f32 %v5744, 0.0001
        %v5753 = vmul.f32 %v5729, 2.0
        %v5754 = vmul.f32 %v5730, 2.0
        %v5755 = vmul.f32 %v5731, 2.0
        %v5756 = vmul.f32 %v5732, 2.0
        %v5757 = vmul.f32 %v5733, 2.0
        %v5758 = vmul.f32 %v5734, 2.0
        %v5759 = vmul.f32 %v5735, 2.0
        %v5760 = vmul.f32 %v5736, 2.0
        %v5761 = vadd.f32 %v5753, 0.0009
        %v5762 = vadd.f32 %v5754, 0.0009
        %v5763 = vadd.f32 %v5755, 0.0009
        %v5764 = vadd.f32 %v5756, 0.0009
        %v5765 = vadd.f32 %v5757, 0.0009
        %v5766 = vadd.f32 %v5758, 0.0009
        %v5767 = vadd.f32 %v5759, 0.0009
        %v5768 = vadd.f32 %v5760, 0.0009
        %v5769 = vmul.f32 %v5745, %v5761
        %v5770 = vmul.f32 %v5746, %v5762
        %v5771 = vmul.f32 %v5747, %v5763
        %v5772 = vmul.f32 %v5748, %v5764
        %v5773 = vmul.f32 %v5749, %v5765
        %v5774 = vmul.f32 %v5750, %v5766
        %v5775 = vmul.f32 %v5751, %v5767
        %v5776 = vmul.f32 %v5752, %v5768
        %v5777 = vadd.f32 %v5689, %v5697
        %v5778 = vadd.f32 %v5690, %v5698
        %v5779 = vadd.f32 %v5691, %v5699
        %v5780 = vadd.f32 %v5692, %v5700
        %v5781 = vadd.f32 %v5693, %v5701
        %v5782 = vadd.f32 %v5694, %v5702
        %v5783 = vadd.f32 %v5695, %v5703
        %v5784 = vadd.f32 %v5696, %v5704
        %v5785 = vadd.f32 %v5777, 0.0001
        %v5786 = vadd.f32 %v5778, 0.0001
        %v5787 = vadd.f32 %v5779, 0.0001
        %v5788 = vadd.f32 %v5780, 0.0001
        %v5789 = vadd.f32 %v5781, 0.0001
        %v5790 = vadd.f32 %v5782, 0.0001
        %v5791 = vadd.f32 %v5783, 0.0001
        %v5792 = vadd.f32 %v5784, 0.0001
        %v5793 = vadd.f32 %v5713, %v5721
        %v5794 = vadd.f32 %v5714, %v5722
        %v5795 = vadd.f32 %v5715, %v5723
        %v5796 = vadd.f32 %v5716, %v5724
        %v5797 = vadd.f32 %v5717, %v5725
        %v5798 = vadd.f32 %v5718, %v5726
        %v5799 = vadd.f32 %v5719, %v5727
        %v5800 = vadd.f32 %v5720, %v5728
        %v5801 = vadd.f32 %v5793, 0.0009
        %v5802 = vadd.f32 %v5794, 0.0009
        %v5803 = vadd.f32 %v5795, 0.0009
        %v5804 = vadd.f32 %v5796, 0.0009
        %v5805 = vadd.f32 %v5797, 0.0009
        %v5806 = vadd.f32 %v5798, 0.0009
        %v5807 = vadd.f32 %v5799, 0.0009
        %v5808 = vadd.f32 %v5800, 0.0009
        %v5809 = vmul.f32 %v5785, %v5801
        %v5810 = vmul.f32 %v5786, %v5802
        %v5811 = vmul.f32 %v5787, %v5803
        %v5812 = vmul.f32 %v5788, %v5804
        %v5813 = vmul.f32 %v5789, %v5805
        %v5814 = vmul.f32 %v5790, %v5806
        %v5815 = vmul.f32 %v5791, %v5807
        %v5816 = vmul.f32 %v5792, %v5808
        %v5817 = vrcp.pop %v5809
        %v5818 = vrcp.pop %v5810
        %v5819 = vrcp.pop %v5811
        %v5820 = vrcp.pop %v5812
        %v5821 = vrcp.pop %v5813
        %v5822 = vrcp.pop %v5814
        %v5823 = vrcp.pop %v5815
        %v5824 = vrcp.pop %v5816
        %v5825 = vmul.f32 %v5769, %v5817
        %v5826 = vmul.f32 %v5770, %v5818
        %v5827 = vmul.f32 %v5771, %v5819
        %v5828 = vmul.f32 %v5772, %v5820
        %v5829 = vmul.f32 %v5773, %v5821
        %v5830 = vmul.f32 %v5774, %v5822
        %v5831 = vmul.f32 %v5775, %v5823
        %v5832 = vmul.f32 %v5776, %v5824
        %v5833 = vlaneseq
        %v5834 = vshrl.u32 %v5833, 7
        %v5835 = vadd.s32 %v5834, 8
        %v5836 = vlaneseq
        %v5837 = vand.u32 %v5836, 127
        %vm5838 = vcmp.lt.s32.totalorder %v5834, 16
        %vm5839 = vcmp.lt.s32.totalorder %v5835, 16
        %vm5840 = vcmp.lt.s32.totalorder %v5837, 16
        %vm5841 = vmand %vm5838, %vm5840
        %vm5842 = vmand %vm5839, %vm5840
        %v5843 = vsel %vm5841, 1.0, 0.0
        %v5844 = vsel %vm5842, 1.0, 0.0
        %v5845 = vmul.f32 %v5825, %v5843
        %v5846 = vmul.f32 %v5826, %v5843
        %v5847 = vmul.f32 %v5827, %v5843
        %v5848 = vmul.f32 %v5828, %v5843
        %v5849 = vmul.f32 %v5829, %v5844
        %v5850 = vmul.f32 %v5830, %v5844
        %v5851 = vmul.f32 %v5831, %v5844
        %v5852 = vmul.f32 %v5832, %v5844
        %v5853 = vadd.f32 %v5845, %v5846
        %v5854 = vadd.f32 %v5853, %v5847
        %v5855 = vadd.f32 %v5854, %v5848
        %5856 = vadd.xlane.f32.xlu0 %v5855
        %v5857 = vpop.xlane.xlu0 %5856
        %v5858 = vadd.f32 %v5849, %v5850
        %v5859 = vadd.f32 %v5858, %v5851
        %v5860 = vadd.f32 %v5859, %v5852
        %5861 = vadd.xlane.f32.xlu0 %v5860
        %v5862 = vpop.xlane.xlu0 %5861
        %v5863 = vadd.f32 %v5857, %v5862
        %v5864 = vrot.slane %v5863, 4
        %v5865 = vadd.f32 %v5863, %v5864
        %v5866 = vrot.slane %v5865, 2
        %v5867 = vadd.f32 %v5865, %v5866
        %v5868 = vrot.slane %v5867, 1
        %v5869 = vadd.f32 %v5867, %v5868
        %v5870 = vld [vmem:[#allocation4] sm:$0x1]
        %v5871 = vadd.f32 %v5870, %v5869
        %vm5872 = vcmask 0
        %5873 = vst.msk [vmem:[#allocation4] sm:$0x1] %vm5872, %v5871
        %p5874 = scmp.eq.s32.totalorder %s16, 1
        // Predicated region
        $region41: #{ssim_loss.1} parent=35 // pred_check
          %p5875 = pneg %p5874
        $region42: #{ssim_loss.1} parent=35 // pred_check_branch
          %5877 = sbr.rel (%p5875) target = $region44
        $region43: #{ssim_loss.1} parent=35 // pred_region
          %v5878 = vld [vmem:[#allocation4] sm:$0x1]
          %v5879 = vmul.f32 %v5878, 0.00048828125
          %v5880 = vsub.f32 1.0, %v5879
          %5881 = vst.msk [vmem:[#allocation4] sm:$0x1] %vm5872, %v5880
        $region44: #{ssim_loss.1} parent=35 // pred_fallthru
          _
        // Predicated region
        $region45: #{ssim_loss.1} parent=35 // pred_check
          %p5882 = pneg %p123
        $region46: #{ssim_loss.1} parent=35 // pred_check_branch
          %5884 = sbr.rel (%p5882) target = $region48
        $region47: #{ssim_loss.1} parent=35 // pred_region
          %5886 = vsyncadd [#allocation5], 0
          %s5888 = sshll.u32 [#allocation4], 4
          %s5889 = int_to_ptr.vmem [resolvable:$true] %s5888
          %s5890 = sshll.u32 %s4, 4
          %s5891 = int_to_ptr.hbm [resolvable:$true] %s5890
          %5893 = dma.vmem_to_hbm [thread:$0]  %s5889, 16, %s5891, [#allocation5]
        $region48: #{ssim_loss.1} parent=35 // pred_fallthru
          _
        // Predicated region
        $region49: #{ssim_loss.1} parent=35 // pred_check
          %p5894 = pneg %p123
        $region50: #{ssim_loss.1} parent=35 // pred_check_branch
          %5896 = sbr.rel (%p5894) target = $region52
        $region51: #{ssim_loss.1} parent=35 // pred_region
          %5898 = dma.done [#allocation5], 16
        $region52: #{ssim_loss.1} parent=35 // pred_fallthru
          _
      $region36: #{ssim_loss.1} parent=5 // pred_fallthru
        _
      %p5899 = scmp.le.s32.totalorder 2, %s11
      // Predicated region
      $region53: #{ssim_loss.1} parent=5 // pred_check
        %p5900 = pneg %p5899
      $region54: #{ssim_loss.1} parent=5 // pred_check_branch
        %5902 = sbr.rel (%p5900) target = $region56
      $region55: #{ssim_loss.1} parent=5 // pred_region
        %s5903 = ssub.s32 %s11, 2
      $region56: #{ssim_loss.1} parent=5 // pred_fallthru
        _
    $region6: #{ssim_loss.1} parent=1 // loop_footer
      %s15 = sadd.s32 1, %s11
    $region7: #{ssim_loss.1} parent=1 // loop_footer_branch
      %10 = sbr.rel target = $region3
    $region8: #{ssim_loss.1} parent=1 // loop_exit
      _
    %5904 = vsyncpa [#allocation5], 1
    %s5905 = scalar_lea.sflag [#allocation5], 1
    %5906 = vsyncpa %s5905, 1

</llo_original>
